<compile_context>
chip_gen: v7x
topology: tpu7x:2x2x1
jax: 0.10.0
libtpu: 0.0.40
codegen_flags: <defaults>
</compile_context>

<pallas_src>
import numpy as np

import jax
import jax.numpy as jnp
from jax.experimental import pallas as pl
from jax.experimental.pallas import tpu as pltpu


# ----------------------------------------------------------------------------
# One-time weight preprocessing (plain numpy, called once outside jit)
# ----------------------------------------------------------------------------
def _k2s2_matrices(w, h_in, w_in):
    """ConvTranspose2d(k=2, s=2) as: rows_ky = IN @ M[ky]; OUT = sum U[ky] @ rows_ky."""
    ci, co = int(w.shape[0]), int(w.shape[1])
    m = np.zeros((2, w_in * ci, 2 * w_in * co), np.float32)
    for ky in range(2):
        for kx in range(2):
            for x in range(w_in):
                m[ky, x * ci:(x + 1) * ci,
                  (2 * x + kx) * co:(2 * x + kx + 1) * co] = w[:, :, ky, kx]
    u = np.zeros((2, 2 * h_in, h_in), np.float32)
    for ky in range(2):
        for y in range(h_in):
            u[ky, 2 * y + ky, y] = 1.0
    return m, u


def _k5s1_matrices(w, w_in, channel_major_out=False):
    """ConvTranspose2d(k=5, s=1) as 5 row-shifted matmuls against G[ky].

    G[ky][xi*Ci + ci, col(xo, co)] = w[ci, co, 4-ky, 4-kx] with kx = xi - xo + 4.
    Columns are (xo-major, co-minor) unless channel_major_out (then co*Wo + xo).
    """
    ci, co = int(w.shape[0]), int(w.shape[1])
    wo = w_in + 4
    wf = np.asarray(w, np.float32)[:, :, ::-1, ::-1]       # spatial flip
    g = np.zeros((5, w_in * ci, wo * co), np.float32)
    for ky in range(5):
        for kx in range(5):
            for xo in range(wo):
                xi = xo + kx - 4                            # input column of this tap
                if 0 <= xi < w_in:
                    r0 = xi * ci
                    if channel_major_out:
                        g[ky, r0:r0 + ci, xo::wo] = wf[:, :, ky, kx]
                    else:
                        g[ky, r0:r0 + ci, xo * co:(xo + 1) * co] = wf[:, :, ky, kx]
    return g


def prepare_params(params):
    """Fold raw module weights into the structured matmul operands used by the kernel."""
    f32 = np.float32
    fc1_w = np.asarray(params["fc1_w"], f32)                # (latent, 400)
    fc1_b = np.asarray(params["fc1_b"], f32)                # (400,)
    latent = fc1_w.shape[0]
    c_out = int(np.asarray(params["conv2_w"]).shape[1])

    # fc1 columns re-ordered from (c, y, x) to (y, x, c) so its output is NHWC-ish.
    w1p = fc1_w.reshape(latent, 16, 5, 5).transpose(0, 2, 3, 1).reshape(latent, 400)
    b1p = fc1_b.reshape(16, 5, 5).transpose(1, 2, 0).reshape(1, 400)

    m1, u1 = _k2s2_matrices(np.asarray(params["pool1_w"], f32), 5, 5)       # (2,80,160),(2,10,5)
    pb1 = np.tile(np.asarray(params["pool1_b"], f32), 10).reshape(1, 160)

    g1 = _k5s1_matrices(np.asarray(params["conv1_w"], f32), 10)             # (5,160,84)
    cb1 = np.tile(np.asarray(params["conv1_b"], f32), 14).reshape(1, 84)

    m2, u2 = _k2s2_matrices(np.asarray(params["pool2_w"], f32), 14, 14)     # (2,84,168),(2,28,14)
    pb2 = np.tile(np.asarray(params["pool2_b"], f32), 28).reshape(1, 168)

    g2 = _k5s1_matrices(np.asarray(params["conv2_w"], f32), 28,
                        channel_major_out=True)                              # (5,168,32*C)
    cb2 = np.repeat(np.asarray(params["conv2_b"], f32), 32).reshape(1, 32 * c_out)

    prep = dict(w1p=w1p, b1p=b1p, m1=m1, pb1=pb1, u1=u1, g1=g1, cb1=cb1,
                m2=m2, pb2=pb2, u2=u2, g2=g2, cb2=cb2)
    return {k: jnp.asarray(v) for k, v in prep.items()}


# ----------------------------------------------------------------------------
# Fused decoder kernel: one grid step == one batch element, all in VMEM
# ----------------------------------------------------------------------------
def _decoder_kernel(x_ref, w1_ref, b1_ref,
                    m1_ref, pb1_ref, u1_ref,
                    g1_ref, cb1_ref,
                    m2_ref, pb2_ref, u2_ref,
                    g2_ref, cb2_ref,
                    out_ref,
                    a1_ref, xp1_ref, xp2_ref):
    f32 = jnp.float32
    c_out = out_ref.shape[1]

    # ---- fc1: (1, latent) @ (latent, 400) + b, columns already in (y, x, c) order
    h = jnp.dot(x_ref[0], w1_ref[...], preferred_element_type=f32) + b1_ref[...]   # (1, 400)
    for y in range(5):                                         # split into (5, 80) = [y, x*16+c]
        a1_ref[y:y + 1, :] = h[:, y * 80:(y + 1) * 80]

    # ---- pool1: ConvTranspose2d(16, 16, k=2, s=2) + tanh  -> (10, 160) = [Y, X*16+c]
    a1 = a1_ref[...]
    p0 = jnp.dot(a1, m1_ref[0], preferred_element_type=f32)
    p1 = jnp.dot(a1, m1_ref[1], preferred_element_type=f32)
    pool1 = (jnp.dot(u1_ref[0], p0, preferred_element_type=f32)
             + jnp.dot(u1_ref[1], p1, preferred_element_type=f32)
             + pb1_ref[...])
    xp1_ref[...] = jnp.zeros_like(xp1_ref)                     # row-padded buffer (22, 160)
    xp1_ref[8:18, :] = jnp.tanh(pool1)                         # aligned interior store

    # ---- conv1: ConvTranspose2d(16, 6, k=5, s=1)  -> (14, 84) = [y, x*6+c]
    acc1 = cb1_ref[...]
    for ky in range(5):
        acc1 = acc1 + jnp.dot(xp1_ref[ky + 4:ky + 4 + 14, :], g1_ref[ky],
                              preferred_element_type=f32)

    # ---- pool2: ConvTranspose2d(6, 6, k=2, s=2) + tanh  -> (28, 168) = [Y, X*6+c]
    q0 = jnp.dot(acc1, m2_ref[0], preferred_element_type=f32)
    q1 = jnp.dot(acc1, m2_ref[1], preferred_element_type=f32)
    pool2 = (jnp.dot(u2_ref[0], q0, preferred_element_type=f32)
             + jnp.dot(u2_ref[1], q1, preferred_element_type=f32)
             + pb2_ref[...])
    xp2_ref[...] = jnp.zeros_like(xp2_ref)                     # row-padded buffer (40, 168)
    xp2_ref[8:36, :] = jnp.tanh(pool2)

    # ---- conv2: ConvTranspose2d(6, C, k=5, s=1) + sigmoid  -> (32, 32*C) = [y, c*32+x]
    acc2 = cb2_ref[...]
    for ky in range(5):
        acc2 = acc2 + jnp.dot(xp2_ref[ky + 4:ky + 4 + 32, :], g2_ref[ky],
                              preferred_element_type=f32)
    res = jax.nn.sigmoid(acc2)

    for c in range(c_out):                                     # NCHW output block
        out_ref[0, c, :, :] = res[:, c * 32:(c + 1) * 32]


def _const_spec(arr):
    idx = (0,) * arr.ndim
    return pl.BlockSpec(arr.shape, lambda b, _idx=idx: _idx)


@jax.jit
def lenet5_decoder_forward(prep, x):
    b, latent = x.shape
    c_out = prep["cb2"].shape[1] // 32
    x3 = x.reshape(b, 1, latent).astype(jnp.float32)

    weights = [prep[k] for k in ("w1p", "b1p", "m1", "pb1", "u1", "g1", "cb1",
                                 "m2", "pb2", "u2", "g2", "cb2")]

    return pl.pallas_call(
        _decoder_kernel,
        out_shape=jax.ShapeDtypeStruct((b, c_out, 32, 32), jnp.float32),
        grid=(b,),
        in_specs=[pl.BlockSpec((1, 1, latent), lambda i: (i, 0, 0))]
                 + [_const_spec(w) for w in weights],
        out_specs=pl.BlockSpec((1, c_out, 32, 32), lambda i: (i, 0, 0, 0)),
        scratch_shapes=[
            pltpu.VMEM((5, 80), jnp.float32),     # fc1 output as (y, x*16+c)
            pltpu.VMEM((22, 160), jnp.float32),   # row-padded pool1 activation
            pltpu.VMEM((40, 168), jnp.float32),   # row-padded pool2 activation
        ],
        compiler_params=pltpu.CompilerParams(
            dimension_semantics=("parallel",)),   # batch axis -> both TCs on v7x
    )(x3, *weights)


# ----------------------------------------------------------------------------
# Raw parameters + pure-JAX reference (PyTorch ConvTranspose2d semantics)
# ----------------------------------------------------------------------------
def init_params(key, latent_dim, output_channels):
    ks = jax.random.split(key, 10)
    s = 0.1
    return {
        "fc1_w": s * jax.random.normal(ks[0], (latent_dim, 400), jnp.float32),
        "fc1_b": s * jax.random.normal(ks[1], (400,), jnp.float32),
        "pool1_w": s * jax.random.normal(ks[2], (16, 16, 2, 2), jnp.float32),
        "pool1_b": s * jax.random.normal(ks[3], (16,), jnp.float32),
        "conv1_w": s * jax.random.normal(ks[4], (16, 6, 5, 5), jnp.float32),
        "conv1_b": s * jax.random.normal(ks[5], (6,), jnp.float32),
        "pool2_w": s * jax.random.normal(ks[6], (6, 6, 2, 2), jnp.float32),
        "pool2_b": s * jax.random.normal(ks[7], (6,), jnp.float32),
        "conv2_w": s * jax.random.normal(ks[8], (6, output_channels, 5, 5), jnp.float32),
        "conv2_b": s * jax.random.normal(ks[9], (output_channels,), jnp.float32),
    }


def _deconv_ref(x, w, b, stride):
    # x: (B, Ci, H, W); w: (Ci, Co, k, k); PyTorch ConvTranspose2d, padding=0.
    B, Ci, H, W = x.shape
    Co, k = w.shape[1], w.shape[2]
    Ho, Wo = (H - 1) * stride + k, (W - 1) * stride + k
    t = jnp.einsum("bihw,iopq->bohwpq", x, w, precision=jax.lax.Precision.HIGHEST)
    out = jnp.zeros((B, Co, Ho, Wo), jnp.float32)
    for p in range(k):
        for q in range(k):
            out = out.at[:, :, p:p + stride * H:stride,
                         q:q + stride * W:stride].add(t[..., p, q])
    return out + b.reshape(1, Co, 1, 1)


def decoder_reference(params, x):
    h = jnp.dot(x, params["fc1_w"], precision=jax.lax.Precision.HIGHEST) + params["fc1_b"]
    h = h.reshape(x.shape[0], 16, 5, 5)
    h = jnp.tanh(_deconv_ref(h, params["pool1_w"], params["pool1_b"], 2))
    h = _deconv_ref(h, params["conv1_w"], params["conv1_b"], 1)
    h = jnp.tanh(_deconv_ref(h, params["pool2_w"], params["pool2_b"], 2))
    return jax.nn.sigmoid(_deconv_ref(h, params["conv2_w"], params["conv2_b"], 1))


if __name__ == "__main__":
    latent_dim, output_channels, batch = 32, 1, 2

    key = jax.random.PRNGKey(0)
    k_params, k_x = jax.random.split(key)
    params = init_params(k_params, latent_dim, output_channels)
    x = jax.random.normal(k_x, (batch, latent_dim), jnp.float32)

    prep = prepare_params(params)                 # one-time weight folding (numpy)
    out = lenet5_decoder_forward(prep, x)
    out = jax.block_until_ready(out)

    assert out.shape == (batch, output_channels, 32, 32), out.shape
    assert bool(jnp.all(jnp.isfinite(out)))
    assert bool(jnp.all((out >= 0.0) & (out <= 1.0)))

    ref = decoder_reference(params, x)
    max_err = float(jnp.max(jnp.abs(out - ref)))
    assert max_err < 2e-2, f"mismatch vs reference: max abs err = {max_err}"

    print("KERNEL_OK")
</pallas_src>

<mosaic_0001>
module attributes {stable_mosaic.version = 11 : i64} {
  func.func @_decoder_kernel(%arg0: i32, %arg1: memref<1x1x32xf32, #tpu.memory_space<vmem>>, %arg2: memref<32x400xf32, #tpu.memory_space<vmem>>, %arg3: memref<1x400xf32, #tpu.memory_space<vmem>>, %arg4: memref<2x80x160xf32, #tpu.memory_space<vmem>>, %arg5: memref<1x160xf32, #tpu.memory_space<vmem>>, %arg6: memref<2x10x5xf32, #tpu.memory_space<vmem>>, %arg7: memref<5x160x84xf32, #tpu.memory_space<vmem>>, %arg8: memref<1x84xf32, #tpu.memory_space<vmem>>, %arg9: memref<2x84x168xf32, #tpu.memory_space<vmem>>, %arg10: memref<1x168xf32, #tpu.memory_space<vmem>>, %arg11: memref<2x28x14xf32, #tpu.memory_space<vmem>>, %arg12: memref<5x168x32xf32, #tpu.memory_space<vmem>>, %arg13: memref<1x32xf32, #tpu.memory_space<vmem>>, %arg14: memref<1x1x32x32xf32, #tpu.memory_space<vmem>>, %arg15: memref<5x80xf32, #tpu.memory_space<vmem>>, %arg16: memref<22x160xf32, #tpu.memory_space<vmem>>, %arg17: memref<40x168xf32, #tpu.memory_space<vmem>>) attributes {dimension_semantics = [#tpu.dimension_semantics<parallel>], iteration_bounds = array<i64: 2>, scalar_prefetch = 0 : i64, scratch_operands = 3 : i64, tpu.core_type = #tpu.core_type<tc>, window_params = [{transform_indices = @transform_0, window_bounds = array<i64: 1, 1, 32>}, {pipeline_mode = #tpu.pipeline_mode<synchronous>, transform_indices = @transform_1, window_bounds = array<i64: 32, 400>}, {pipeline_mode = #tpu.pipeline_mode<synchronous>, transform_indices = @transform_2, window_bounds = array<i64: 1, 400>}, {pipeline_mode = #tpu.pipeline_mode<synchronous>, transform_indices = @transform_3, window_bounds = array<i64: 2, 80, 160>}, {pipeline_mode = #tpu.pipeline_mode<synchronous>, transform_indices = @transform_4, window_bounds = array<i64: 1, 160>}, {pipeline_mode = #tpu.pipeline_mode<synchronous>, transform_indices = @transform_5, window_bounds = array<i64: 2, 10, 5>}, {pipeline_mode = #tpu.pipeline_mode<synchronous>, transform_indices = @transform_6, window_bounds = array<i64: 5, 160, 84>}, {pipeline_mode = #tpu.pipeline_mode<synchronous>, transform_indices = @transform_7, window_bounds = array<i64: 1, 84>}, {pipeline_mode = #tpu.pipeline_mode<synchronous>, transform_indices = @transform_8, window_bounds = array<i64: 2, 84, 168>}, {pipeline_mode = #tpu.pipeline_mode<synchronous>, transform_indices = @transform_9, window_bounds = array<i64: 1, 168>}, {pipeline_mode = #tpu.pipeline_mode<synchronous>, transform_indices = @transform_10, window_bounds = array<i64: 2, 28, 14>}, {pipeline_mode = #tpu.pipeline_mode<synchronous>, transform_indices = @transform_11, window_bounds = array<i64: 5, 168, 32>}, {pipeline_mode = #tpu.pipeline_mode<synchronous>, transform_indices = @transform_12, window_bounds = array<i64: 1, 32>}, {transform_indices = @transform_13, window_bounds = array<i64: 1, 1, 32, 32>}]} {
    %c0 = arith.constant 0 : index
    %c0_0 = arith.constant 0 : index
    %c0_1 = arith.constant 0 : index
    %0 = vector.load %arg1[%c0, %c0_0, %c0_1] : memref<1x1x32xf32, #tpu.memory_space<vmem>>, vector<1x1x32xf32>
    %1 = vector.shape_cast %0 : vector<1x1x32xf32> to vector<1x32xf32>
    %c0_2 = arith.constant 0 : index
    %c0_3 = arith.constant 0 : index
    %2 = vector.load %arg2[%c0_2, %c0_3] : memref<32x400xf32, #tpu.memory_space<vmem>>, vector<32x400xf32>
    %cst = arith.constant dense<0.000000e+00> : vector<1x400xf32>
    %3 = tpu.matmul %1, %2, %cst {dimension_numbers = #tpu.dot_dimension_numbers<[1], [0], [0], [1], [0, 0, 1, 1], [], []>} : vector<1x32xf32>, vector<32x400xf32>, vector<1x400xf32> -> vector<1x400xf32>
    %c0_4 = arith.constant 0 : index
    %c0_5 = arith.constant 0 : index
    %4 = vector.load %arg3[%c0_4, %c0_5] : memref<1x400xf32, #tpu.memory_space<vmem>>, vector<1x400xf32>
    %5 = arith.addf %3, %4 : vector<1x400xf32>
    %6 = vector.extract_strided_slice %5 {offsets = [0, 0], sizes = [1, 80], strides = [1, 1]} : vector<1x400xf32> to vector<1x80xf32>
    %c0_6 = arith.constant 0 : index
    %c0_7 = arith.constant 0 : index
    %7 = vector.load %arg15[%c0_6, %c0_7] : memref<5x80xf32, #tpu.memory_space<vmem>>, vector<1x80xf32>
    tpu.vector_store %arg15[%c0_6, %c0_7], %6 {strides = array<i32>} : memref<5x80xf32, #tpu.memory_space<vmem>>, vector<1x80xf32>,
    %8 = vector.extract_strided_slice %5 {offsets = [0, 80], sizes = [1, 80], strides = [1, 1]} : vector<1x400xf32> to vector<1x80xf32>
    %c1 = arith.constant 1 : index
    %c0_8 = arith.constant 0 : index
    %9 = vector.load %arg15[%c1, %c0_8] : memref<5x80xf32, #tpu.memory_space<vmem>>, vector<1x80xf32>
    tpu.vector_store %arg15[%c1, %c0_8], %8 {strides = array<i32>} : memref<5x80xf32, #tpu.memory_space<vmem>>, vector<1x80xf32>,
    %10 = vector.extract_strided_slice %5 {offsets = [0, 160], sizes = [1, 80], strides = [1, 1]} : vector<1x400xf32> to vector<1x80xf32>
    %c2 = arith.constant 2 : index
    %c0_9 = arith.constant 0 : index
    %11 = vector.load %arg15[%c2, %c0_9] : memref<5x80xf32, #tpu.memory_space<vmem>>, vector<1x80xf32>
    tpu.vector_store %arg15[%c2, %c0_9], %10 {strides = array<i32>} : memref<5x80xf32, #tpu.memory_space<vmem>>, vector<1x80xf32>,
    %12 = vector.extract_strided_slice %5 {offsets = [0, 240], sizes = [1, 80], strides = [1, 1]} : vector<1x400xf32> to vector<1x80xf32>
    %c3 = arith.constant 3 : index
    %c0_10 = arith.constant 0 : index
    %13 = vector.load %arg15[%c3, %c0_10] : memref<5x80xf32, #tpu.memory_space<vmem>>, vector<1x80xf32>
    tpu.vector_store %arg15[%c3, %c0_10], %12 {strides = array<i32>} : memref<5x80xf32, #tpu.memory_space<vmem>>, vector<1x80xf32>,
    %14 = vector.extract_strided_slice %5 {offsets = [0, 320], sizes = [1, 80], strides = [1, 1]} : vector<1x400xf32> to vector<1x80xf32>
    %c4 = arith.constant 4 : index
    %c0_11 = arith.constant 0 : index
    %15 = vector.load %arg15[%c4, %c0_11] : memref<5x80xf32, #tpu.memory_space<vmem>>, vector<1x80xf32>
    tpu.vector_store %arg15[%c4, %c0_11], %14 {strides = array<i32>} : memref<5x80xf32, #tpu.memory_space<vmem>>, vector<1x80xf32>,
    %c0_12 = arith.constant 0 : index
    %c0_13 = arith.constant 0 : index
    %16 = vector.load %arg15[%c0_12, %c0_13] : memref<5x80xf32, #tpu.memory_space<vmem>>, vector<5x80xf32>
    %c0_14 = arith.constant 0 : index
    %c0_15 = arith.constant 0 : index
    %c0_16 = arith.constant 0 : index
    %17 = vector.load %arg4[%c0_14, %c0_15, %c0_16] : memref<2x80x160xf32, #tpu.memory_space<vmem>>, vector<1x80x160xf32>
    %18 = vector.shape_cast %17 : vector<1x80x160xf32> to vector<80x160xf32>
    %cst_17 = arith.constant dense<0.000000e+00> : vector<5x160xf32>
    %19 = tpu.matmul %16, %18, %cst_17 {dimension_numbers = #tpu.dot_dimension_numbers<[1], [0], [0], [1], [0, 0, 1, 1], [], []>} : vector<5x80xf32>, vector<80x160xf32>, vector<5x160xf32> -> vector<5x160xf32>
    %c1_18 = arith.constant 1 : index
    %c0_19 = arith.constant 0 : index
    %c0_20 = arith.constant 0 : index
    %20 = vector.load %arg4[%c1_18, %c0_19, %c0_20] : memref<2x80x160xf32, #tpu.memory_space<vmem>>, vector<1x80x160xf32>
    %21 = vector.shape_cast %20 : vector<1x80x160xf32> to vector<80x160xf32>
    %cst_21 = arith.constant dense<0.000000e+00> : vector<5x160xf32>
    %22 = tpu.matmul %16, %21, %cst_21 {dimension_numbers = #tpu.dot_dimension_numbers<[1], [0], [0], [1], [0, 0, 1, 1], [], []>} : vector<5x80xf32>, vector<80x160xf32>, vector<5x160xf32> -> vector<5x160xf32>
    %c0_22 = arith.constant 0 : index
    %c0_23 = arith.constant 0 : index
    %c0_24 = arith.constant 0 : index
    %23 = vector.load %arg6[%c0_22, %c0_23, %c0_24] : memref<2x10x5xf32, #tpu.memory_space<vmem>>, vector<1x10x5xf32>
    %24 = vector.shape_cast %23 : vector<1x10x5xf32> to vector<10x5xf32>
    %cst_25 = arith.constant dense<0.000000e+00> : vector<10x160xf32>
    %25 = tpu.matmul %24, %19, %cst_25 {dimension_numbers = #tpu.dot_dimension_numbers<[1], [0], [0], [1], [0, 0, 1, 1], [], []>} : vector<10x5xf32>, vector<5x160xf32>, vector<10x160xf32> -> vector<10x160xf32>
    %c1_26 = arith.constant 1 : index
    %c0_27 = arith.constant 0 : index
    %c0_28 = arith.constant 0 : index
    %26 = vector.load %arg6[%c1_26, %c0_27, %c0_28] : memref<2x10x5xf32, #tpu.memory_space<vmem>>, vector<1x10x5xf32>
    %27 = vector.shape_cast %26 : vector<1x10x5xf32> to vector<10x5xf32>
    %cst_29 = arith.constant dense<0.000000e+00> : vector<10x160xf32>
    %28 = tpu.matmul %27, %22, %cst_29 {dimension_numbers = #tpu.dot_dimension_numbers<[1], [0], [0], [1], [0, 0, 1, 1], [], []>} : vector<10x5xf32>, vector<5x160xf32>, vector<10x160xf32> -> vector<10x160xf32>
    %29 = arith.addf %25, %28 : vector<10x160xf32>
    %c0_30 = arith.constant 0 : index
    %c0_31 = arith.constant 0 : index
    %30 = vector.load %arg5[%c0_30, %c0_31] : memref<1x160xf32, #tpu.memory_space<vmem>>, vector<1x160xf32>
    %31 = vector.broadcast %30 : vector<1x160xf32> to vector<10x160xf32>
    %32 = arith.addf %29, %31 : vector<10x160xf32>
    %cst_32 = arith.constant 0.000000e+00 : f32
    %33 = vector.broadcast %cst_32 : f32 to vector<22x160xf32>
    %c0_33 = arith.constant 0 : index
    %c0_34 = arith.constant 0 : index
    %34 = vector.load %arg16[%c0_33, %c0_34] : memref<22x160xf32, #tpu.memory_space<vmem>>, vector<22x160xf32>
    tpu.vector_store %arg16[%c0_33, %c0_34], %33 {strides = array<i32>} : memref<22x160xf32, #tpu.memory_space<vmem>>, vector<22x160xf32>,
    %35 = math.tanh %32 : vector<10x160xf32>
    %c8 = arith.constant 8 : index
    %c0_35 = arith.constant 0 : index
    %36 = vector.load %arg16[%c8, %c0_35] : memref<22x160xf32, #tpu.memory_space<vmem>>, vector<10x160xf32>
    tpu.vector_store %arg16[%c8, %c0_35], %35 {strides = array<i32>} : memref<22x160xf32, #tpu.memory_space<vmem>>, vector<10x160xf32>,
    %c0_36 = arith.constant 0 : index
    %c0_37 = arith.constant 0 : index
    %37 = vector.load %arg8[%c0_36, %c0_37] : memref<1x84xf32, #tpu.memory_space<vmem>>, vector<1x84xf32>
    %c4_38 = arith.constant 4 : index
    %c0_39 = arith.constant 0 : index
    %38 = vector.load %arg16[%c4_38, %c0_39] : memref<22x160xf32, #tpu.memory_space<vmem>>, vector<14x160xf32>
    %c0_40 = arith.constant 0 : index
    %c0_41 = arith.constant 0 : index
    %c0_42 = arith.constant 0 : index
    %39 = vector.load %arg7[%c0_40, %c0_41, %c0_42] : memref<5x160x84xf32, #tpu.memory_space<vmem>>, vector<1x160x84xf32>
    %40 = vector.shape_cast %39 : vector<1x160x84xf32> to vector<160x84xf32>
    %cst_43 = arith.constant dense<0.000000e+00> : vector<14x84xf32>
    %41 = tpu.matmul %38, %40, %cst_43 {dimension_numbers = #tpu.dot_dimension_numbers<[1], [0], [0], [1], [0, 0, 1, 1], [], []>} : vector<14x160xf32>, vector<160x84xf32>, vector<14x84xf32> -> vector<14x84xf32>
    %42 = vector.broadcast %37 : vector<1x84xf32> to vector<14x84xf32>
    %43 = arith.addf %42, %41 : vector<14x84xf32>
    %c5 = arith.constant 5 : index
    %c0_44 = arith.constant 0 : index
    %44 = vector.load %arg16[%c5, %c0_44] : memref<22x160xf32, #tpu.memory_space<vmem>>, vector<14x160xf32>
    %c1_45 = arith.constant 1 : index
    %c0_46 = arith.constant 0 : index
    %c0_47 = arith.constant 0 : index
    %45 = vector.load %arg7[%c1_45, %c0_46, %c0_47] : memref<5x160x84xf32, #tpu.memory_space<vmem>>, vector<1x160x84xf32>
    %46 = vector.shape_cast %45 : vector<1x160x84xf32> to vector<160x84xf32>
    %cst_48 = arith.constant dense<0.000000e+00> : vector<14x84xf32>
    %47 = tpu.matmul %44, %46, %cst_48 {dimension_numbers = #tpu.dot_dimension_numbers<[1], [0], [0], [1], [0, 0, 1, 1], [], []>} : vector<14x160xf32>, vector<160x84xf32>, vector<14x84xf32> -> vector<14x84xf32>
    %48 = arith.addf %43, %47 : vector<14x84xf32>
    %c6 = arith.constant 6 : index
    %c0_49 = arith.constant 0 : index
    %49 = vector.load %arg16[%c6, %c0_49] : memref<22x160xf32, #tpu.memory_space<vmem>>, vector<14x160xf32>
    %c2_50 = arith.constant 2 : index
    %c0_51 = arith.constant 0 : index
    %c0_52 = arith.constant 0 : index
    %50 = vector.load %arg7[%c2_50, %c0_51, %c0_52] : memref<5x160x84xf32, #tpu.memory_space<vmem>>, vector<1x160x84xf32>
    %51 = vector.shape_cast %50 : vector<1x160x84xf32> to vector<160x84xf32>
    %cst_53 = arith.constant dense<0.000000e+00> : vector<14x84xf32>
    %52 = tpu.matmul %49, %51, %cst_53 {dimension_numbers = #tpu.dot_dimension_numbers<[1], [0], [0], [1], [0, 0, 1, 1], [], []>} : vector<14x160xf32>, vector<160x84xf32>, vector<14x84xf32> -> vector<14x84xf32>
    %53 = arith.addf %48, %52 : vector<14x84xf32>
    %c7 = arith.constant 7 : index
    %c0_54 = arith.constant 0 : index
    %54 = vector.load %arg16[%c7, %c0_54] : memref<22x160xf32, #tpu.memory_space<vmem>>, vector<14x160xf32>
    %c3_55 = arith.constant 3 : index
    %c0_56 = arith.constant 0 : index
    %c0_57 = arith.constant 0 : index
    %55 = vector.load %arg7[%c3_55, %c0_56, %c0_57] : memref<5x160x84xf32, #tpu.memory_space<vmem>>, vector<1x160x84xf32>
    %56 = vector.shape_cast %55 : vector<1x160x84xf32> to vector<160x84xf32>
    %cst_58 = arith.constant dense<0.000000e+00> : vector<14x84xf32>
    %57 = tpu.matmul %54, %56, %cst_58 {dimension_numbers = #tpu.dot_dimension_numbers<[1], [0], [0], [1], [0, 0, 1, 1], [], []>} : vector<14x160xf32>, vector<160x84xf32>, vector<14x84xf32> -> vector<14x84xf32>
    %58 = arith.addf %53, %57 : vector<14x84xf32>
    %c8_59 = arith.constant 8 : index
    %c0_60 = arith.constant 0 : index
    %59 = vector.load %arg16[%c8_59, %c0_60] : memref<22x160xf32, #tpu.memory_space<vmem>>, vector<14x160xf32>
    %c4_61 = arith.constant 4 : index
    %c0_62 = arith.constant 0 : index
    %c0_63 = arith.constant 0 : index
    %60 = vector.load %arg7[%c4_61, %c0_62, %c0_63] : memref<5x160x84xf32, #tpu.memory_space<vmem>>, vector<1x160x84xf32>
    %61 = vector.shape_cast %60 : vector<1x160x84xf32> to vector<160x84xf32>
    %cst_64 = arith.constant dense<0.000000e+00> : vector<14x84xf32>
    %62 = tpu.matmul %59, %61, %cst_64 {dimension_numbers = #tpu.dot_dimension_numbers<[1], [0], [0], [1], [0, 0, 1, 1], [], []>} : vector<14x160xf32>, vector<160x84xf32>, vector<14x84xf32> -> vector<14x84xf32>
    %63 = arith.addf %58, %62 : vector<14x84xf32>
    %c0_65 = arith.constant 0 : index
    %c0_66 = arith.constant 0 : index
    %c0_67 = arith.constant 0 : index
    %64 = vector.load %arg9[%c0_65, %c0_66, %c0_67] : memref<2x84x168xf32, #tpu.memory_space<vmem>>, vector<1x84x168xf32>
    %65 = vector.shape_cast %64 : vector<1x84x168xf32> to vector<84x168xf32>
    %cst_68 = arith.constant dense<0.000000e+00> : vector<14x168xf32>
    %66 = tpu.matmul %63, %65, %cst_68 {dimension_numbers = #tpu.dot_dimension_numbers<[1], [0], [0], [1], [0, 0, 1, 1], [], []>} : vector<14x84xf32>, vector<84x168xf32>, vector<14x168xf32> -> vector<14x168xf32>
    %c1_69 = arith.constant 1 : index
    %c0_70 = arith.constant 0 : index
    %c0_71 = arith.constant 0 : index
    %67 = vector.load %arg9[%c1_69, %c0_70, %c0_71] : memref<2x84x168xf32, #tpu.memory_space<vmem>>, vector<1x84x168xf32>
    %68 = vector.shape_cast %67 : vector<1x84x168xf32> to vector<84x168xf32>
    %cst_72 = arith.constant dense<0.000000e+00> : vector<14x168xf32>
    %69 = tpu.matmul %63, %68, %cst_72 {dimension_numbers = #tpu.dot_dimension_numbers<[1], [0], [0], [1], [0, 0, 1, 1], [], []>} : vector<14x84xf32>, vector<84x168xf32>, vector<14x168xf32> -> vector<14x168xf32>
    %c0_73 = arith.constant 0 : index
    %c0_74 = arith.constant 0 : index
    %c0_75 = arith.constant 0 : index
    %70 = vector.load %arg11[%c0_73, %c0_74, %c0_75] : memref<2x28x14xf32, #tpu.memory_space<vmem>>, vector<1x28x14xf32>
    %71 = vector.shape_cast %70 : vector<1x28x14xf32> to vector<28x14xf32>
    %cst_76 = arith.constant dense<0.000000e+00> : vector<28x168xf32>
    %72 = tpu.matmul %71, %66, %cst_76 {dimension_numbers = #tpu.dot_dimension_numbers<[1], [0], [0], [1], [0, 0, 1, 1], [], []>} : vector<28x14xf32>, vector<14x168xf32>, vector<28x168xf32> -> vector<28x168xf32>
    %c1_77 = arith.constant 1 : index
    %c0_78 = arith.constant 0 : index
    %c0_79 = arith.constant 0 : index
    %73 = vector.load %arg11[%c1_77, %c0_78, %c0_79] : memref<2x28x14xf32, #tpu.memory_space<vmem>>, vector<1x28x14xf32>
    %74 = vector.shape_cast %73 : vector<1x28x14xf32> to vector<28x14xf32>
    %cst_80 = arith.constant dense<0.000000e+00> : vector<28x168xf32>
    %75 = tpu.matmul %74, %69, %cst_80 {dimension_numbers = #tpu.dot_dimension_numbers<[1], [0], [0], [1], [0, 0, 1, 1], [], []>} : vector<28x14xf32>, vector<14x168xf32>, vector<28x168xf32> -> vector<28x168xf32>
    %76 = arith.addf %72, %75 : vector<28x168xf32>
    %c0_81 = arith.constant 0 : index
    %c0_82 = arith.constant 0 : index
    %77 = vector.load %arg10[%c0_81, %c0_82] : memref<1x168xf32, #tpu.memory_space<vmem>>, vector<1x168xf32>
    %78 = vector.broadcast %77 : vector<1x168xf32> to vector<28x168xf32>
    %79 = arith.addf %76, %78 : vector<28x168xf32>
    %cst_83 = arith.constant 0.000000e+00 : f32
    %80 = vector.broadcast %cst_83 : f32 to vector<40x168xf32>
    %c0_84 = arith.constant 0 : index
    %c0_85 = arith.constant 0 : index
    %81 = vector.load %arg17[%c0_84, %c0_85] : memref<40x168xf32, #tpu.memory_space<vmem>>, vector<40x168xf32>
    tpu.vector_store %arg17[%c0_84, %c0_85], %80 {strides = array<i32>} : memref<40x168xf32, #tpu.memory_space<vmem>>, vector<40x168xf32>,
    %82 = math.tanh %79 : vector<28x168xf32>
    %c8_86 = arith.constant 8 : index
    %c0_87 = arith.constant 0 : index
    %83 = vector.load %arg17[%c8_86, %c0_87] : memref<40x168xf32, #tpu.memory_space<vmem>>, vector<28x168xf32>
    tpu.vector_store %arg17[%c8_86, %c0_87], %82 {strides = array<i32>} : memref<40x168xf32, #tpu.memory_space<vmem>>, vector<28x168xf32>,
    %c0_88 = arith.constant 0 : index
    %c0_89 = arith.constant 0 : index
    %84 = vector.load %arg13[%c0_88, %c0_89] : memref<1x32xf32, #tpu.memory_space<vmem>>, vector<1x32xf32>
    %c4_90 = arith.constant 4 : index
    %c0_91 = arith.constant 0 : index
    %85 = vector.load %arg17[%c4_90, %c0_91] : memref<40x168xf32, #tpu.memory_space<vmem>>, vector<32x168xf32>
    %c0_92 = arith.constant 0 : index
    %c0_93 = arith.constant 0 : index
    %c0_94 = arith.constant 0 : index
    %86 = vector.load %arg12[%c0_92, %c0_93, %c0_94] : memref<5x168x32xf32, #tpu.memory_space<vmem>>, vector<1x168x32xf32>
    %87 = vector.shape_cast %86 : vector<1x168x32xf32> to vector<168x32xf32>
    %cst_95 = arith.constant dense<0.000000e+00> : vector<32x32xf32>
    %88 = tpu.matmul %85, %87, %cst_95 {dimension_numbers = #tpu.dot_dimension_numbers<[1], [0], [0], [1], [0, 0, 1, 1], [], []>} : vector<32x168xf32>, vector<168x32xf32>, vector<32x32xf32> -> vector<32x32xf32>
    %89 = vector.broadcast %84 : vector<1x32xf32> to vector<32x32xf32>
    %90 = arith.addf %89, %88 : vector<32x32xf32>
    %c5_96 = arith.constant 5 : index
    %c0_97 = arith.constant 0 : index
    %91 = vector.load %arg17[%c5_96, %c0_97] : memref<40x168xf32, #tpu.memory_space<vmem>>, vector<32x168xf32>
    %c1_98 = arith.constant 1 : index
    %c0_99 = arith.constant 0 : index
    %c0_100 = arith.constant 0 : index
    %92 = vector.load %arg12[%c1_98, %c0_99, %c0_100] : memref<5x168x32xf32, #tpu.memory_space<vmem>>, vector<1x168x32xf32>
    %93 = vector.shape_cast %92 : vector<1x168x32xf32> to vector<168x32xf32>
    %cst_101 = arith.constant dense<0.000000e+00> : vector<32x32xf32>
    %94 = tpu.matmul %91, %93, %cst_101 {dimension_numbers = #tpu.dot_dimension_numbers<[1], [0], [0], [1], [0, 0, 1, 1], [], []>} : vector<32x168xf32>, vector<168x32xf32>, vector<32x32xf32> -> vector<32x32xf32>
    %95 = arith.addf %90, %94 : vector<32x32xf32>
    %c6_102 = arith.constant 6 : index
    %c0_103 = arith.constant 0 : index
    %96 = vector.load %arg17[%c6_102, %c0_103] : memref<40x168xf32, #tpu.memory_space<vmem>>, vector<32x168xf32>
    %c2_104 = arith.constant 2 : index
    %c0_105 = arith.constant 0 : index
    %c0_106 = arith.constant 0 : index
    %97 = vector.load %arg12[%c2_104, %c0_105, %c0_106] : memref<5x168x32xf32, #tpu.memory_space<vmem>>, vector<1x168x32xf32>
    %98 = vector.shape_cast %97 : vector<1x168x32xf32> to vector<168x32xf32>
    %cst_107 = arith.constant dense<0.000000e+00> : vector<32x32xf32>
    %99 = tpu.matmul %96, %98, %cst_107 {dimension_numbers = #tpu.dot_dimension_numbers<[1], [0], [0], [1], [0, 0, 1, 1], [], []>} : vector<32x168xf32>, vector<168x32xf32>, vector<32x32xf32> -> vector<32x32xf32>
    %100 = arith.addf %95, %99 : vector<32x32xf32>
    %c7_108 = arith.constant 7 : index
    %c0_109 = arith.constant 0 : index
    %101 = vector.load %arg17[%c7_108, %c0_109] : memref<40x168xf32, #tpu.memory_space<vmem>>, vector<32x168xf32>
    %c3_110 = arith.constant 3 : index
    %c0_111 = arith.constant 0 : index
    %c0_112 = arith.constant 0 : index
    %102 = vector.load %arg12[%c3_110, %c0_111, %c0_112] : memref<5x168x32xf32, #tpu.memory_space<vmem>>, vector<1x168x32xf32>
    %103 = vector.shape_cast %102 : vector<1x168x32xf32> to vector<168x32xf32>
    %cst_113 = arith.constant dense<0.000000e+00> : vector<32x32xf32>
    %104 = tpu.matmul %101, %103, %cst_113 {dimension_numbers = #tpu.dot_dimension_numbers<[1], [0], [0], [1], [0, 0, 1, 1], [], []>} : vector<32x168xf32>, vector<168x32xf32>, vector<32x32xf32> -> vector<32x32xf32>
    %105 = arith.addf %100, %104 : vector<32x32xf32>
    %c8_114 = arith.constant 8 : index
    %c0_115 = arith.constant 0 : index
    %106 = vector.load %arg17[%c8_114, %c0_115] : memref<40x168xf32, #tpu.memory_space<vmem>>, vector<32x168xf32>
    %c4_116 = arith.constant 4 : index
    %c0_117 = arith.constant 0 : index
    %c0_118 = arith.constant 0 : index
    %107 = vector.load %arg12[%c4_116, %c0_117, %c0_118] : memref<5x168x32xf32, #tpu.memory_space<vmem>>, vector<1x168x32xf32>
    %108 = vector.shape_cast %107 : vector<1x168x32xf32> to vector<168x32xf32>
    %cst_119 = arith.constant dense<0.000000e+00> : vector<32x32xf32>
    %109 = tpu.matmul %106, %108, %cst_119 {dimension_numbers = #tpu.dot_dimension_numbers<[1], [0], [0], [1], [0, 0, 1, 1], [], []>} : vector<32x168xf32>, vector<168x32xf32>, vector<32x32xf32> -> vector<32x32xf32>
    %110 = arith.addf %105, %109 : vector<32x32xf32>
    %111 = arith.negf %110 : vector<32x32xf32>
    %112 = math.exp %111 : vector<32x32xf32>
    %cst_120 = arith.constant 1.000000e+00 : f32
    %113 = vector.broadcast %cst_120 : f32 to vector<32x32xf32>
    %114 = arith.addf %113, %112 : vector<32x32xf32>
    %115 = arith.divf %113, %114 : vector<32x32xf32>
    %c0_121 = arith.constant 0 : index
    %c0_122 = arith.constant 0 : index
    %c0_123 = arith.constant 0 : index
    %c0_124 = arith.constant 0 : index
    %116 = vector.load %arg14[%c0_121, %c0_122, %c0_123, %c0_124] : memref<1x1x32x32xf32, #tpu.memory_space<vmem>>, vector<1x1x32x32xf32>
    %117 = vector.shape_cast %116 : vector<1x1x32x32xf32> to vector<32x32xf32>
    %118 = vector.shape_cast %115 : vector<32x32xf32> to vector<1x1x32x32xf32>
    tpu.vector_store %arg14[%c0_121, %c0_122, %c0_123, %c0_124], %118 {strides = array<i32>} : memref<1x1x32x32xf32, #tpu.memory_space<vmem>>, vector<1x1x32x32xf32>,
    return
  }
  func.func @transform_0(%arg0: i32) -> (i32, i32, i32) {
    %c0_i32 = arith.constant 0 : i32
    %c0_i32_0 = arith.constant 0 : i32
    %c0_i32_1 = arith.constant 0 : i32
    return %arg0, %c0_i32, %c0_i32_0 : i32, i32, i32
  }
  func.func @transform_1(%arg0: i32) -> (i32, i32) {
    %c0_i32 = arith.constant 0 : i32
    %c0_i32_0 = arith.constant 0 : i32
    %c0_i32_1 = arith.constant 0 : i32
    return %c0_i32, %c0_i32_0 : i32, i32
  }
  func.func @transform_2(%arg0: i32) -> (i32, i32) {
    %c0_i32 = arith.constant 0 : i32
    %c0_i32_0 = arith.constant 0 : i32
    %c0_i32_1 = arith.constant 0 : i32
    return %c0_i32, %c0_i32_0 : i32, i32
  }
  func.func @transform_3(%arg0: i32) -> (i32, i32, i32) {
    %c0_i32 = arith.constant 0 : i32
    %c0_i32_0 = arith.constant 0 : i32
    %c0_i32_1 = arith.constant 0 : i32
    %c0_i32_2 = arith.constant 0 : i32
    return %c0_i32, %c0_i32_0, %c0_i32_1 : i32, i32, i32
  }
  func.func @transform_4(%arg0: i32) -> (i32, i32) {
    %c0_i32 = arith.constant 0 : i32
    %c0_i32_0 = arith.constant 0 : i32
    %c0_i32_1 = arith.constant 0 : i32
    return %c0_i32, %c0_i32_0 : i32, i32
  }
  func.func @transform_5(%arg0: i32) -> (i32, i32, i32) {
    %c0_i32 = arith.constant 0 : i32
    %c0_i32_0 = arith.constant 0 : i32
    %c0_i32_1 = arith.constant 0 : i32
    %c0_i32_2 = arith.constant 0 : i32
    return %c0_i32, %c0_i32_0, %c0_i32_1 : i32, i32, i32
  }
  func.func @transform_6(%arg0: i32) -> (i32, i32, i32) {
    %c0_i32 = arith.constant 0 : i32
    %c0_i32_0 = arith.constant 0 : i32
    %c0_i32_1 = arith.constant 0 : i32
    %c0_i32_2 = arith.constant 0 : i32
    return %c0_i32, %c0_i32_0, %c0_i32_1 : i32, i32, i32
  }
  func.func @transform_7(%arg0: i32) -> (i32, i32) {
    %c0_i32 = arith.constant 0 : i32
    %c0_i32_0 = arith.constant 0 : i32
    %c0_i32_1 = arith.constant 0 : i32
    return %c0_i32, %c0_i32_0 : i32, i32
  }
  func.func @transform_8(%arg0: i32) -> (i32, i32, i32) {
    %c0_i32 = arith.constant 0 : i32
    %c0_i32_0 = arith.constant 0 : i32
    %c0_i32_1 = arith.constant 0 : i32
    %c0_i32_2 = arith.constant 0 : i32
    return %c0_i32, %c0_i32_0, %c0_i32_1 : i32, i32, i32
  }
  func.func @transform_9(%arg0: i32) -> (i32, i32) {
    %c0_i32 = arith.constant 0 : i32
    %c0_i32_0 = arith.constant 0 : i32
    %c0_i32_1 = arith.constant 0 : i32
    return %c0_i32, %c0_i32_0 : i32, i32
  }
  func.func @transform_10(%arg0: i32) -> (i32, i32, i32) {
    %c0_i32 = arith.constant 0 : i32
    %c0_i32_0 = arith.constant 0 : i32
    %c0_i32_1 = arith.constant 0 : i32
    %c0_i32_2 = arith.constant 0 : i32
    return %c0_i32, %c0_i32_0, %c0_i32_1 : i32, i32, i32
  }
  func.func @transform_11(%arg0: i32) -> (i32, i32, i32) {
    %c0_i32 = arith.constant 0 : i32
    %c0_i32_0 = arith.constant 0 : i32
    %c0_i32_1 = arith.constant 0 : i32
    %c0_i32_2 = arith.constant 0 : i32
    return %c0_i32, %c0_i32_0, %c0_i32_1 : i32, i32, i32
  }
  func.func @transform_12(%arg0: i32) -> (i32, i32) {
    %c0_i32 = arith.constant 0 : i32
    %c0_i32_0 = arith.constant 0 : i32
    %c0_i32_1 = arith.constant 0 : i32
    return %c0_i32, %c0_i32_0 : i32, i32
  }
  func.func @transform_13(%arg0: i32) -> (i32, i32, i32, i32) {
    %c0_i32 = arith.constant 0 : i32
    %c0_i32_0 = arith.constant 0 : i32
    %c0_i32_1 = arith.constant 0 : i32
    %c0_i32_2 = arith.constant 0 : i32
    return %arg0, %c0_i32, %c0_i32_0, %c0_i32_1 : i32, i32, i32, i32
  }
}

</mosaic_0001>

<llo_original>
// kernel: lenet5_decoder_forward.1
$region0: #{lenet5_decoder_forward.1}
  #allocation0 [shape = 'u32[]', space=smem, size = 0x4, offset = 0x4, fixed_abs, tag = 'smem constant byte address 0x4 - core index']
  #allocation1 [shape = 'u32[144,128]{1,0:T(1,128)}', space=vmem, size = 0x12000, scoped, tag = 'internal scratch']
  #allocation2 [shape = 'f32[5,80]{1,0:T(8,128)}', space=vmem, size = 0x1000, scoped, tag = 'scratch operand']
  #allocation3 [shape = 'f32[22,160]{1,0:T(8,128)}', space=vmem, size = 0x6000, scoped, tag = 'scratch operand']
  #allocation4 [shape = 'f32[40,168]{1,0:T(8,128)}', space=vmem, size = 0xa000, scoped, tag = 'scratch operand']
  %s0 = inlined_call_operand.vmem [shape: f32[2,1,32], index: 0, kind: input, shape index: {}]
  %s1 = inlined_call_operand.vmem [shape: f32[32,400], index: 1, kind: input, shape index: {}]
  %s2 = inlined_call_operand.vmem [shape: f32[1,400], index: 2, kind: input, shape index: {}]
  %s3 = inlined_call_operand.vmem [shape: f32[2,80,160], index: 3, kind: input, shape index: {}]
  %s4 = inlined_call_operand.vmem [shape: f32[1,160], index: 4, kind: input, shape index: {}]
  %s5 = inlined_call_operand.vmem [shape: f32[2,10,5], index: 5, kind: input, shape index: {}]
  %s6 = inlined_call_operand.vmem [shape: f32[5,160,84], index: 6, kind: input, shape index: {}]
  %s7 = inlined_call_operand.vmem [shape: f32[1,84], index: 7, kind: input, shape index: {}]
  %s8 = inlined_call_operand.vmem [shape: f32[2,84,168], index: 8, kind: input, shape index: {}]
  %s9 = inlined_call_operand.vmem [shape: f32[1,168], index: 9, kind: input, shape index: {}]
  %s10 = inlined_call_operand.vmem [shape: f32[2,28,14], index: 10, kind: input, shape index: {}]
  %s11 = inlined_call_operand.vmem [shape: f32[5,168,32], index: 11, kind: input, shape index: {}]
  %s12 = inlined_call_operand.vmem [shape: f32[1,32], index: 12, kind: input, shape index: {}]
  %s13 = inlined_call_operand.hbm [shape: f32[2,1,32,32], index: 13, kind: output, shape index: {}]
  %s14 = sld [smem:[#allocation0]]
  $region85: #{lenet5_decoder_forward.1} parent=0
    _
  %s16 = ssub.s32 1, %s14
  %s17 = scalar_select 0, %s16, %s14
  $region1: #{lenet5_decoder_forward.1} parent=0
    #allocation5 [shape = 'u8[32768]{0}', space=vmem, size = 0x8000, scoped, tag = 'output window, operand 0']
    #allocation6 [shape = 's32[2]{0}', space=sflag, size = 0x8, scoped, tag = 'scoped memory for lenet5_decoder_forward.1']
    %18 = vsyncpa [#allocation6], 0
    %s19 = scalar_lea.sflag [#allocation6], 1
    %20 = vsyncpa %s19, 0
    loop: start=0, step=1, limit=4
    $region2: #{lenet5_decoder_forward.1} parent=1 // loop_pre_header
      _
    $region3: #{lenet5_decoder_forward.1} parent=1 // loop_header
      %s22 = sphi 0, %s26
      %p23 = scmp.ge.s32.totalorder %s22, 4
      %s32 = sphi 0, %s34
      %s35 = sphi 0, %s32
      %s36 = sphi 0, %s35
      %s52 = sphi 0, %s36
      %s56 = sphi 0, %s56
      %s58 = sphi 0, %s56
      %s59 = sphi 0, %s58
      %s73 = sphi 0, %s59
      %s77 = sphi 0, %s77
      %s79 = sphi 0, %s77
      %s80 = sphi 0, %s79
      %s94 = sphi 0, %s80
      %s98 = sphi 0, %s98
      %s100 = sphi 0, %s98
      %s101 = sphi 0, %s100
      %s115 = sphi 0, %s101
      %s119 = sphi 0, %s119
      %s121 = sphi 0, %s119
      %s122 = sphi 0, %s121
      %s136 = sphi 0, %s122
      %s140 = sphi 0, %s140
      %s142 = sphi 0, %s140
      %s143 = sphi 0, %s142
      %s157 = sphi 0, %s143
      %s161 = sphi 0, %s161
      %s163 = sphi 0, %s161
      %s164 = sphi 0, %s163
      %s178 = sphi 0, %s164
      %s182 = sphi 0, %s182
      %s184 = sphi 0, %s182
      %s185 = sphi 0, %s184
      %s199 = sphi 0, %s185
      %s203 = sphi 0, %s203
      %s205 = sphi 0, %s203
      %s206 = sphi 0, %s205
      %s220 = sphi 0, %s206
      %s224 = sphi 0, %s224
      %s226 = sphi 0, %s224
      %s227 = sphi 0, %s226
      %s241 = sphi 0, %s227
      %s245 = sphi 0, %s245
      %s247 = sphi 0, %s245
      %s248 = sphi 0, %s247
      %s262 = sphi 0, %s248
      %s266 = sphi 0, %s266
      %s268 = sphi 0, %s266
      %s269 = sphi 0, %s268
      %s283 = sphi 0, %s269
      %s287 = sphi 0, %s287
      %s289 = sphi 0, %s287
      %s290 = sphi 0, %s289
      %s304 = sphi 0, %s290
      %s310 = sphi 0, %s312
      %s313 = sphi 0, %s310
      %s314 = sphi 0, %s313
      %s330 = sphi 0, %s314
    $region4: #{lenet5_decoder_forward.1} parent=1 // loop_header_branch
      %25 = sbr.rel (%p23) target = $region8
    $region5: #{lenet5_decoder_forward.1} parent=1 // loop_body
      %s27 = ssub.s32 %s22, 1
      %s28 = ssub.s32 %s22, 2
      %s29 = sadd.s32 %s22, 1
      %s30 = ssub.s32 %s22, %s29
      %p31 = scmp.eq.s32.totalorder %s30, 0
      %s33 = sadd.s32 %s32, 1
      %s34 = scalar_select %p31, %s32, %s33
      %p37 = pneg %p31
      %p38 = scmp.eq.s32.totalorder %s22, 1
      %p39 = por %p37, %p38
      %p40 = scmp.ne.s32.totalorder %s32, %s35
      %p41 = scmp.eq.s32.totalorder %s22, 0
      %p42 = por %p40, %p41
      %p43 = scmp.ne.s32.totalorder %s32, %s35
      %p44 = scmp.eq.s32.totalorder %s27, 1
      %p45 = por %p43, %p44
      %p46 = scmp.ne.s32.totalorder %s35, %s36
      %p47 = scmp.eq.s32.totalorder %s27, 0
      %p48 = por %p46, %p47
      %p49 = scmp.ne.s32.totalorder %s35, %s36
      %p50 = scmp.eq.s32.totalorder %s28, 1
      %p51 = por %p49, %p50
      %p53 = scmp.ne.s32.totalorder %s36, %s52
      %p54 = scmp.eq.s32.totalorder %s28, 0
      %p55 = por %p53, %p54
      %s57 = sadd.s32 %s56, 1
      %p60 = scmp.eq.s32.totalorder %s22, 1
      %p61 = scmp.ne.s32.totalorder %s56, %s58
      %p62 = scmp.eq.s32.totalorder %s22, 0
      %p63 = por %p61, %p62
      %p64 = scmp.ne.s32.totalorder %s56, %s58
      %p65 = scmp.eq.s32.totalorder %s27, 1
      %p66 = por %p64, %p65
      %p67 = scmp.ne.s32.totalorder %s58, %s59
      %p68 = scmp.eq.s32.totalorder %s27, 0
      %p69 = por %p67, %p68
      %p70 = scmp.ne.s32.totalorder %s58, %s59
      %p71 = scmp.eq.s32.totalorder %s28, 1
      %p72 = por %p70, %p71
      %p74 = scmp.ne.s32.totalorder %s59, %s73
      %p75 = scmp.eq.s32.totalorder %s28, 0
      %p76 = por %p74, %p75
      %s78 = sadd.s32 %s77, 1
      %p81 = scmp.eq.s32.totalorder %s22, 1
      %p82 = scmp.ne.s32.totalorder %s77, %s79
      %p83 = scmp.eq.s32.totalorder %s22, 0
      %p84 = por %p82, %p83
      %p85 = scmp.ne.s32.totalorder %s77, %s79
      %p86 = scmp.eq.s32.totalorder %s27, 1
      %p87 = por %p85, %p86
      %p88 = scmp.ne.s32.totalorder %s79, %s80
      %p89 = scmp.eq.s32.totalorder %s27, 0
      %p90 = por %p88, %p89
      %p91 = scmp.ne.s32.totalorder %s79, %s80
      %p92 = scmp.eq.s32.totalorder %s28, 1
      %p93 = por %p91, %p92
      %p95 = scmp.ne.s32.totalorder %s80, %s94
      %p96 = scmp.eq.s32.totalorder %s28, 0
      %p97 = por %p95, %p96
      %s99 = sadd.s32 %s98, 1
      %p102 = scmp.eq.s32.totalorder %s22, 1
      %p103 = scmp.ne.s32.totalorder %s98, %s100
      %p104 = scmp.eq.s32.totalorder %s22, 0
      %p105 = por %p103, %p104
      %p106 = scmp.ne.s32.totalorder %s98, %s100
      %p107 = scmp.eq.s32.totalorder %s27, 1
      %p108 = por %p106, %p107
      %p109 = scmp.ne.s32.totalorder %s100, %s101
      %p110 = scmp.eq.s32.totalorder %s27, 0
      %p111 = por %p109, %p110
      %p112 = scmp.ne.s32.totalorder %s100, %s101
      %p113 = scmp.eq.s32.totalorder %s28, 1
      %p114 = por %p112, %p113
      %p116 = scmp.ne.s32.totalorder %s101, %s115
      %p117 = scmp.eq.s32.totalorder %s28, 0
      %p118 = por %p116, %p117
      %s120 = sadd.s32 %s119, 1
      %p123 = scmp.eq.s32.totalorder %s22, 1
      %p124 = scmp.ne.s32.totalorder %s119, %s121
      %p125 = scmp.eq.s32.totalorder %s22, 0
      %p126 = por %p124, %p125
      %p127 = scmp.ne.s32.totalorder %s119, %s121
      %p128 = scmp.eq.s32.totalorder %s27, 1
      %p129 = por %p127, %p128
      %p130 = scmp.ne.s32.totalorder %s121, %s122
      %p131 = scmp.eq.s32.totalorder %s27, 0
      %p132 = por %p130, %p131
      %p133 = scmp.ne.s32.totalorder %s121, %s122
      %p134 = scmp.eq.s32.totalorder %s28, 1
      %p135 = por %p133, %p134
      %p137 = scmp.ne.s32.totalorder %s122, %s136
      %p138 = scmp.eq.s32.totalorder %s28, 0
      %p139 = por %p137, %p138
      %s141 = sadd.s32 %s140, 1
      %p144 = scmp.eq.s32.totalorder %s22, 1
      %p145 = scmp.ne.s32.totalorder %s140, %s142
      %p146 = scmp.eq.s32.totalorder %s22, 0
      %p147 = por %p145, %p146
      %p148 = scmp.ne.s32.totalorder %s140, %s142
      %p149 = scmp.eq.s32.totalorder %s27, 1
      %p150 = por %p148, %p149
      %p151 = scmp.ne.s32.totalorder %s142, %s143
      %p152 = scmp.eq.s32.totalorder %s27, 0
      %p153 = por %p151, %p152
      %p154 = scmp.ne.s32.totalorder %s142, %s143
      %p155 = scmp.eq.s32.totalorder %s28, 1
      %p156 = por %p154, %p155
      %p158 = scmp.ne.s32.totalorder %s143, %s157
      %p159 = scmp.eq.s32.totalorder %s28, 0
      %p160 = por %p158, %p159
      %s162 = sadd.s32 %s161, 1
      %p165 = scmp.eq.s32.totalorder %s22, 1
      %p166 = scmp.ne.s32.totalorder %s161, %s163
      %p167 = scmp.eq.s32.totalorder %s22, 0
      %p168 = por %p166, %p167
      %p169 = scmp.ne.s32.totalorder %s161, %s163
      %p170 = scmp.eq.s32.totalorder %s27, 1
      %p171 = por %p169, %p170
      %p172 = scmp.ne.s32.totalorder %s163, %s164
      %p173 = scmp.eq.s32.totalorder %s27, 0
      %p174 = por %p172, %p173
      %p175 = scmp.ne.s32.totalorder %s163, %s164
      %p176 = scmp.eq.s32.totalorder %s28, 1
      %p177 = por %p175, %p176
      %p179 = scmp.ne.s32.totalorder %s164, %s178
      %p180 = scmp.eq.s32.totalorder %s28, 0
      %p181 = por %p179, %p180
      %s183 = sadd.s32 %s182, 1
      %p186 = scmp.eq.s32.totalorder %s22, 1
      %p187 = scmp.ne.s32.totalorder %s182, %s184
      %p188 = scmp.eq.s32.totalorder %s22, 0
      %p189 = por %p187, %p188
      %p190 = scmp.ne.s32.totalorder %s182, %s184
      %p191 = scmp.eq.s32.totalorder %s27, 1
      %p192 = por %p190, %p191
      %p193 = scmp.ne.s32.totalorder %s184, %s185
      %p194 = scmp.eq.s32.totalorder %s27, 0
      %p195 = por %p193, %p194
      %p196 = scmp.ne.s32.totalorder %s184, %s185
      %p197 = scmp.eq.s32.totalorder %s28, 1
      %p198 = por %p196, %p197
      %p200 = scmp.ne.s32.totalorder %s185, %s199
      %p201 = scmp.eq.s32.totalorder %s28, 0
      %p202 = por %p200, %p201
      %s204 = sadd.s32 %s203, 1
      %p207 = scmp.eq.s32.totalorder %s22, 1
      %p208 = scmp.ne.s32.totalorder %s203, %s205
      %p209 = scmp.eq.s32.totalorder %s22, 0
      %p210 = por %p208, %p209
      %p211 = scmp.ne.s32.totalorder %s203, %s205
      %p212 = scmp.eq.s32.totalorder %s27, 1
      %p213 = por %p211, %p212
      %p214 = scmp.ne.s32.totalorder %s205, %s206
      %p215 = scmp.eq.s32.totalorder %s27, 0
      %p216 = por %p214, %p215
      %p217 = scmp.ne.s32.totalorder %s205, %s206
      %p218 = scmp.eq.s32.totalorder %s28, 1
      %p219 = por %p217, %p218
      %p221 = scmp.ne.s32.totalorder %s206, %s220
      %p222 = scmp.eq.s32.totalorder %s28, 0
      %p223 = por %p221, %p222
      %s225 = sadd.s32 %s224, 1
      %p228 = scmp.eq.s32.totalorder %s22, 1
      %p229 = scmp.ne.s32.totalorder %s224, %s226
      %p230 = scmp.eq.s32.totalorder %s22, 0
      %p231 = por %p229, %p230
      %p232 = scmp.ne.s32.totalorder %s224, %s226
      %p233 = scmp.eq.s32.totalorder %s27, 1
      %p234 = por %p232, %p233
      %p235 = scmp.ne.s32.totalorder %s226, %s227
      %p236 = scmp.eq.s32.totalorder %s27, 0
      %p237 = por %p235, %p236
      %p238 = scmp.ne.s32.totalorder %s226, %s227
      %p239 = scmp.eq.s32.totalorder %s28, 1
      %p240 = por %p238, %p239
      %p242 = scmp.ne.s32.totalorder %s227, %s241
      %p243 = scmp.eq.s32.totalorder %s28, 0
      %p244 = por %p242, %p243
      %s246 = sadd.s32 %s245, 1
      %p249 = scmp.eq.s32.totalorder %s22, 1
      %p250 = scmp.ne.s32.totalorder %s245, %s247
      %p251 = scmp.eq.s32.totalorder %s22, 0
      %p252 = por %p250, %p251
      %p253 = scmp.ne.s32.totalorder %s245, %s247
      %p254 = scmp.eq.s32.totalorder %s27, 1
      %p255 = por %p253, %p254
      %p256 = scmp.ne.s32.totalorder %s247, %s248
      %p257 = scmp.eq.s32.totalorder %s27, 0
      %p258 = por %p256, %p257
      %p259 = scmp.ne.s32.totalorder %s247, %s248
      %p260 = scmp.eq.s32.totalorder %s28, 1
      %p261 = por %p259, %p260
      %p263 = scmp.ne.s32.totalorder %s248, %s262
      %p264 = scmp.eq.s32.totalorder %s28, 0
      %p265 = por %p263, %p264
      %s267 = sadd.s32 %s266, 1
      %p270 = scmp.eq.s32.totalorder %s22, 1
      %p271 = scmp.ne.s32.totalorder %s266, %s268
      %p272 = scmp.eq.s32.totalorder %s22, 0
      %p273 = por %p271, %p272
      %p274 = scmp.ne.s32.totalorder %s266, %s268
      %p275 = scmp.eq.s32.totalorder %s27, 1
      %p276 = por %p274, %p275
      %p277 = scmp.ne.s32.totalorder %s268, %s269
      %p278 = scmp.eq.s32.totalorder %s27, 0
      %p279 = por %p277, %p278
      %p280 = scmp.ne.s32.totalorder %s268, %s269
      %p281 = scmp.eq.s32.totalorder %s28, 1
      %p282 = por %p280, %p281
      %p284 = scmp.ne.s32.totalorder %s269, %s283
      %p285 = scmp.eq.s32.totalorder %s28, 0
      %p286 = por %p284, %p285
      %s288 = sadd.s32 %s287, 1
      %p291 = scmp.eq.s32.totalorder %s22, 1
      %p292 = scmp.ne.s32.totalorder %s287, %s289
      %p293 = scmp.eq.s32.totalorder %s22, 0
      %p294 = por %p292, %p293
      %p295 = scmp.ne.s32.totalorder %s287, %s289
      %p296 = scmp.eq.s32.totalorder %s27, 1
      %p297 = por %p295, %p296
      %p298 = scmp.ne.s32.totalorder %s289, %s290
      %p299 = scmp.eq.s32.totalorder %s27, 0
      %p300 = por %p298, %p299
      %p301 = scmp.ne.s32.totalorder %s289, %s290
      %p302 = scmp.eq.s32.totalorder %s28, 1
      %p303 = por %p301, %p302
      %p305 = scmp.ne.s32.totalorder %s290, %s304
      %p306 = scmp.eq.s32.totalorder %s28, 0
      %p307 = por %p305, %p306
      %s308 = ssub.s32 %s22, %s29
      %p309 = scmp.eq.s32.totalorder %s308, 0
      %s311 = sadd.s32 %s310, 1
      %s312 = scalar_select %p309, %s310, %s311
      %p315 = pneg %p309
      %p316 = scmp.eq.s32.totalorder %s22, 1
      %p317 = por %p315, %p316
      %p318 = scmp.ne.s32.totalorder %s310, %s313
      %p319 = scmp.eq.s32.totalorder %s22, 0
      %p320 = por %p318, %p319
      %p321 = scmp.ne.s32.totalorder %s310, %s313
      %p322 = scmp.eq.s32.totalorder %s27, 1
      %p323 = por %p321, %p322
      %p324 = scmp.ne.s32.totalorder %s313, %s314
      %p325 = scmp.eq.s32.totalorder %s27, 0
      %p326 = por %p324, %p325
      %p327 = scmp.ne.s32.totalorder %s313, %s314
      %p328 = scmp.eq.s32.totalorder %s28, 1
      %p329 = por %p327, %p328
      %p331 = scmp.ne.s32.totalorder %s314, %s330
      %p332 = scmp.eq.s32.totalorder %s28, 0
      %p333 = por %p331, %p332
      %p334 = scmp.le.s32.totalorder 1, %s22
      %p335 = scmp.lt.s32.totalorder %s22, 3
      %p336 = pnand %p334, %p335
      %p337 = pneg %p336
      // Predicated region
      $region9: #{lenet5_decoder_forward.1} parent=5 // pred_check
        _
      $region10: #{lenet5_decoder_forward.1} parent=5 // pred_check_branch
        %339 = sbr.rel (%p336) target = $region12
      $region11: #{lenet5_decoder_forward.1} parent=5 // pred_region
        %s340 = ssub.s32 %s22, 1
        // Predicated region
        $region13: #{lenet5_decoder_forward.1} parent=11 // pred_check
          %p341 = pneg %p69
        $region14: #{lenet5_decoder_forward.1} parent=11 // pred_check_branch
          %343 = sbr.rel (%p341) target = $region16
        $region15: #{lenet5_decoder_forward.1} parent=11 // pred_region
          _
        $region16: #{lenet5_decoder_forward.1} parent=11 // pred_fallthru
          _
        // Predicated region
        $region17: #{lenet5_decoder_forward.1} parent=11 // pred_check
          %p344 = pneg %p90
        $region18: #{lenet5_decoder_forward.1} parent=11 // pred_check_branch
          %346 = sbr.rel (%p344) target = $region20
        $region19: #{lenet5_decoder_forward.1} parent=11 // pred_region
          _
        $region20: #{lenet5_decoder_forward.1} parent=11 // pred_fallthru
          _
        // Predicated region
        $region21: #{lenet5_decoder_forward.1} parent=11 // pred_check
          %p347 = pneg %p111
        $region22: #{lenet5_decoder_forward.1} parent=11 // pred_check_branch
          %349 = sbr.rel (%p347) target = $region24
        $region23: #{lenet5_decoder_forward.1} parent=11 // pred_region
          _
        $region24: #{lenet5_decoder_forward.1} parent=11 // pred_fallthru
          _
        // Predicated region
        $region25: #{lenet5_decoder_forward.1} parent=11 // pred_check
          %p350 = pneg %p132
        $region26: #{lenet5_decoder_forward.1} parent=11 // pred_check_branch
          %352 = sbr.rel (%p350) target = $region28
        $region27: #{lenet5_decoder_forward.1} parent=11 // pred_region
          _
        $region28: #{lenet5_decoder_forward.1} parent=11 // pred_fallthru
          _
        // Predicated region
        $region29: #{lenet5_decoder_forward.1} parent=11 // pred_check
          %p353 = pneg %p153
        $region30: #{lenet5_decoder_forward.1} parent=11 // pred_check_branch
          %355 = sbr.rel (%p353) target = $region32
        $region31: #{lenet5_decoder_forward.1} parent=11 // pred_region
          _
        $region32: #{lenet5_decoder_forward.1} parent=11 // pred_fallthru
          _
        // Predicated region
        $region33: #{lenet5_decoder_forward.1} parent=11 // pred_check
          %p356 = pneg %p174
        $region34: #{lenet5_decoder_forward.1} parent=11 // pred_check_branch
          %358 = sbr.rel (%p356) target = $region36
        $region35: #{lenet5_decoder_forward.1} parent=11 // pred_region
          _
        $region36: #{lenet5_decoder_forward.1} parent=11 // pred_fallthru
          _
        // Predicated region
        $region37: #{lenet5_decoder_forward.1} parent=11 // pred_check
          %p359 = pneg %p195
        $region38: #{lenet5_decoder_forward.1} parent=11 // pred_check_branch
          %361 = sbr.rel (%p359) target = $region40
        $region39: #{lenet5_decoder_forward.1} parent=11 // pred_region
          _
        $region40: #{lenet5_decoder_forward.1} parent=11 // pred_fallthru
          _
        // Predicated region
        $region41: #{lenet5_decoder_forward.1} parent=11 // pred_check
          %p362 = pneg %p216
        $region42: #{lenet5_decoder_forward.1} parent=11 // pred_check_branch
          %364 = sbr.rel (%p362) target = $region44
        $region43: #{lenet5_decoder_forward.1} parent=11 // pred_region
          _
        $region44: #{lenet5_decoder_forward.1} parent=11 // pred_fallthru
          _
        // Predicated region
        $region45: #{lenet5_decoder_forward.1} parent=11 // pred_check
          %p365 = pneg %p237
        $region46: #{lenet5_decoder_forward.1} parent=11 // pred_check_branch
          %367 = sbr.rel (%p365) target = $region48
        $region47: #{lenet5_decoder_forward.1} parent=11 // pred_region
          _
        $region48: #{lenet5_decoder_forward.1} parent=11 // pred_fallthru
          _
        // Predicated region
        $region49: #{lenet5_decoder_forward.1} parent=11 // pred_check
          %p368 = pneg %p258
        $region50: #{lenet5_decoder_forward.1} parent=11 // pred_check_branch
          %370 = sbr.rel (%p368) target = $region52
        $region51: #{lenet5_decoder_forward.1} parent=11 // pred_region
          _
        $region52: #{lenet5_decoder_forward.1} parent=11 // pred_fallthru
          _
        // Predicated region
        $region53: #{lenet5_decoder_forward.1} parent=11 // pred_check
          %p371 = pneg %p279
        $region54: #{lenet5_decoder_forward.1} parent=11 // pred_check_branch
          %373 = sbr.rel (%p371) target = $region56
        $region55: #{lenet5_decoder_forward.1} parent=11 // pred_region
          _
        $region56: #{lenet5_decoder_forward.1} parent=11 // pred_fallthru
          _
        // Predicated region
        $region57: #{lenet5_decoder_forward.1} parent=11 // pred_check
          %p374 = pneg %p300
        $region58: #{lenet5_decoder_forward.1} parent=11 // pred_check_branch
          %376 = sbr.rel (%p374) target = $region60
        $region59: #{lenet5_decoder_forward.1} parent=11 // pred_region
          _
        $region60: #{lenet5_decoder_forward.1} parent=11 // pred_fallthru
          _
      $region12: #{lenet5_decoder_forward.1} parent=5 // pred_fallthru
        _
      %p377 = scmp.lt.s32.totalorder %s22, 2
      // Predicated region
      $region61: #{lenet5_decoder_forward.1} parent=5 // pred_check
        %p378 = pneg %p377
      $region62: #{lenet5_decoder_forward.1} parent=5 // pred_check_branch
        %380 = sbr.rel (%p378) target = $region64
      $region63: #{lenet5_decoder_forward.1} parent=5 // pred_region
        // Predicated region
        $region65: #{lenet5_decoder_forward.1} parent=63 // pred_check
          %p381 = pneg %p42
        $region66: #{lenet5_decoder_forward.1} parent=63 // pred_check_branch
          %383 = sbr.rel (%p381) target = $region68
        $region67: #{lenet5_decoder_forward.1} parent=63 // pred_region
          %p384 = scmp.lt.s32.totalorder %s22, 1
          %s385 = scalar_select %p384, %s22, 1
          %s386 = scalar_lea.vmem %s0, %s385
        $region68: #{lenet5_decoder_forward.1} parent=63 // pred_fallthru
          _
      $region64: #{lenet5_decoder_forward.1} parent=5 // pred_fallthru
        _
      %p387 = scmp.le.s32.totalorder 1, %s22
      %p388 = scmp.lt.s32.totalorder %s22, 3
      %p389 = pnand %p387, %p388
      %p390 = pneg %p389
      // Predicated region
      $region69: #{lenet5_decoder_forward.1} parent=5 // pred_check
        _
      $region70: #{lenet5_decoder_forward.1} parent=5 // pred_check_branch
        %392 = sbr.rel (%p389) target = $region72
      $region71: #{lenet5_decoder_forward.1} parent=5 // pred_region
        %s393 = ssub.s32 %s22, 1
        %p394 = scmp.lt.s32.totalorder %s27, 1
        %s395 = scalar_select %p394, %s27, 1
        %s396 = scalar_lea.vmem %s0, %s395
        %p397 = pneg %p48
        %p398 = pneg %p45
        %p399 = pneg %p69
        %p400 = pneg %p66
        %p401 = pneg %p90
        %p402 = pneg %p87
        %p403 = pneg %p111
        %p404 = pneg %p108
        %p405 = pneg %p132
        %p406 = pneg %p129
        %p407 = pneg %p153
        %p408 = pneg %p150
        %p409 = pneg %p174
        %p410 = pneg %p171
        %p411 = pneg %p195
        %p412 = pneg %p192
        %p413 = pneg %p216
        %p414 = pneg %p213
        %p415 = pneg %p237
        %p416 = pneg %p234
        %p417 = pneg %p258
        %p418 = pneg %p255
        %p419 = pneg %p279
        %p420 = pneg %p276
        %p421 = pneg %p300
        %p422 = pneg %p297
        %p423 = pneg %p326
        %p424 = pneg %p323
        %s425 = sand.u32 %s313, 1
        %s426 = scalar_lea.sflag [#allocation6], %s425
        %s427 = sand.u32 %s313, 1
        %s428 = smul.addr %s427, 32
        %s429 = scalar_lea.vmem [#allocation5], %s428
        %p430 = scmp.lt.s32.totalorder %s27, 1
        %s431 = scalar_select %p430, %s27, 1
        %s432 = scalar_lea.vmem %s0, %s431
        %v433 = vld [vmem:[%s432] sm:$0x1]
        %v434 = vld [vmem:[%s1] sm:$0xff]
        %v435 = vld [vmem:[%s1 + $0x8] sm:$0xff]
        %v436 = vld [vmem:[%s1 + $0x10] sm:$0xff]
        %v437 = vld [vmem:[%s1 + $0x18] sm:$0xff]
        %v438 = vld [vmem:[%s1 + $0x20] sm:$0xff]
        %v439 = vld [vmem:[%s1 + $0x28] sm:$0xff]
        %v440 = vld [vmem:[%s1 + $0x30] sm:$0xff]
        %v441 = vld [vmem:[%s1 + $0x38] sm:$0xff]
        %v442 = vld [vmem:[%s1 + $0x40] sm:$0xff]
        %v443 = vld [vmem:[%s1 + $0x48] sm:$0xff]
        %v444 = vld [vmem:[%s1 + $0x50] sm:$0xff]
        %v445 = vld [vmem:[%s1 + $0x58] sm:$0xff]
        %v446 = vld [vmem:[%s1 + $0x60] sm:$0xff]
        %v447 = vld [vmem:[%s1 + $0x68] sm:$0xff]
        %v448 = vld [vmem:[%s1 + $0x70] sm:$0xff]
        %v449 = vld [vmem:[%s1 + $0x78] sm:$0xff]
        %v450 = vld [vmem:[%s2] sm:$0xf]
        %v452 = vlaneseq
        %v453 = vshrl.u32 %v452, 7
        %v454 = vsub.s32 0, %v453
        %v455 = vrot.slane %v450, %v454
        %v456 = vlaneseq
        %v457 = vshrl.u32 %v456, 7
        %v458 = vsub.s32 1, %v457
        %v459 = vrot.slane %v450, %v458
        %v460 = vlaneseq
        %v461 = vshrl.u32 %v460, 7
        %v462 = vsub.s32 2, %v461
        %v463 = vrot.slane %v450, %v462
        %v464 = vlaneseq
        %v465 = vshrl.u32 %v464, 7
        %v466 = vsub.s32 3, %v465
        %v467 = vrot.slane %v450, %v466
        %vm472 = vcmask 261120
        %v474 = vsel %vm472, %v433, 0
        %476 = vmatprep.subr.mxu0 %v435
        %477 = vmatpush1.msra.mxu0 %v434
        %478 = vmatprep.subr.mxu0 %v439
        %479 = vmatpush1.msra.mxu0 %v438
        %480 = vmatprep.subr.mxu0 %v443
        %481 = vmatpush1.msra.mxu0 %v442
        %482 = vmatprep.subr.mxu0 %v447
        %483 = vmatpush1.msra.mxu0 %v446
        %484 = vmatprep.subr.mxu0 0.0
        %485 = vmatpush1.msra.mxu0 0.0
        %486 = vmatprep.subr.mxu0 0.0
        %487 = vmatpush1.msra.mxu0 0.0
        %488 = vmatprep.subr.mxu0 0.0
        %489 = vmatpush1.msra.mxu0 0.0
        %490 = vmatprep.subr.mxu0 0.0
        %491 = vmatpush1.msra.mxu0 0.0
        %492 = vmatprep.subr.mxu0 0.0
        %493 = vmatpush1.msra.mxu0 0.0
        %494 = vmatprep.subr.mxu0 0.0
        %495 = vmatpush1.msra.mxu0 0.0
        %496 = vmatprep.subr.mxu0 0.0
        %497 = vmatpush1.msra.mxu0 0.0
        %498 = vmatprep.subr.mxu0 0.0
        %499 = vmatpush1.msra.mxu0 0.0
        %500 = vmatprep.subr.mxu0 0.0
        %501 = vmatpush1.msra.mxu0 0.0
        %502 = vmatprep.subr.mxu0 0.0
        %503 = vmatpush1.msra.mxu0 0.0
        %504 = vmatprep.subr.mxu0 0.0
        %505 = vmatpush1.msra.mxu0 0.0
        %506 = vmatprep.subr.mxu0 0.0
        %507 = vmatpush1.msra.mxu0 0.0
        %508 = vmatprep.subr.mxu0 0.0
        %509 = vmatpush1.msra.mxu0 0.0
        %510 = vmatprep.subr.mxu0 0.0
        %511 = vmatpush1.msra.mxu0 0.0
        %512 = vmatprep.subr.mxu0 0.0
        %513 = vmatpush1.msra.mxu0 0.0
        %514 = vmatprep.subr.mxu0 0.0
        %515 = vmatpush1.msra.mxu0 0.0
        %516 = vmatprep.subr.mxu0 0.0
        %517 = vmatpush1.msra.mxu0 0.0
        %518 = vmatprep.subr.mxu0 0.0
        %519 = vmatpush1.msra.mxu0 0.0
        %520 = vmatprep.subr.mxu0 0.0
        %521 = vmatpush1.msra.mxu0 0.0
        %522 = vmatprep.subr.mxu0 0.0
        %523 = vmatpush1.msra.mxu0 0.0
        %524 = vmatprep.subr.mxu0 0.0
        %525 = vmatpush1.msra.mxu0 0.0
        %526 = vmatprep.subr.mxu0 0.0
        %527 = vmatpush1.msra.mxu0 0.0
        %528 = vmatprep.subr.mxu0 0.0
        %529 = vmatpush1.msra.mxu0 0.0
        %530 = vmatprep.subr.mxu0 0.0
        %531 = vmatpush1.msra.mxu0 0.0
        %532 = vmatprep.subr.mxu0 0.0
        %533 = vmatpush1.msra.mxu0 0.0
        %534 = vmatprep.subr.mxu0 0.0
        %535 = vmatpush1.msra.mxu0 0.0
        %536 = vmatprep.subr.mxu0 0.0
        %537 = vmatpush1.msra.mxu0 0.0
        %538 = vmatprep.subr.mxu0 0.0
        %539 = vmatpush1.msra.mxu0 0.0
        %540 = vmatprep.mubr.f32.mxu0 0.0
        %541 = vmatmul.mubr.f32.gmra.mrb[0].mxu0 %v474
        %v542 = vpop.f32.mrb[0].mxu0
        %v543 = vadd.f32 %v455, %v542
        %v544 = vpop.f32.mrb[0].mxu0
        %v545 = vadd.f32 %v459, %v544
        %546 = vdwg.mxu0
        %547 = vmatprep.subr.mxu0 %v437
        %548 = vmatpush1.msra.mxu0 %v436
        %549 = vmatprep.subr.mxu0 %v441
        %550 = vmatpush1.msra.mxu0 %v440
        %551 = vmatprep.subr.mxu0 %v445
        %552 = vmatpush1.msra.mxu0 %v444
        %553 = vmatprep.subr.mxu0 %v449
        %554 = vmatpush1.msra.mxu0 %v448
        %555 = vmatprep.subr.mxu0 0.0
        %556 = vmatpush1.msra.mxu0 0.0
        %557 = vmatprep.subr.mxu0 0.0
        %558 = vmatpush1.msra.mxu0 0.0
        %559 = vmatprep.subr.mxu0 0.0
        %560 = vmatpush1.msra.mxu0 0.0
        %561 = vmatprep.subr.mxu0 0.0
        %562 = vmatpush1.msra.mxu0 0.0
        %563 = vmatprep.subr.mxu0 0.0
        %564 = vmatpush1.msra.mxu0 0.0
        %565 = vmatprep.subr.mxu0 0.0
        %566 = vmatpush1.msra.mxu0 0.0
        %567 = vmatprep.subr.mxu0 0.0
        %568 = vmatpush1.msra.mxu0 0.0
        %569 = vmatprep.subr.mxu0 0.0
        %570 = vmatpush1.msra.mxu0 0.0
        %571 = vmatprep.subr.mxu0 0.0
        %572 = vmatpush1.msra.mxu0 0.0
        %573 = vmatprep.subr.mxu0 0.0
        %574 = vmatpush1.msra.mxu0 0.0
        %575 = vmatprep.subr.mxu0 0.0
        %576 = vmatpush1.msra.mxu0 0.0
        %577 = vmatprep.subr.mxu0 0.0
        %578 = vmatpush1.msra.mxu0 0.0
        %579 = vmatprep.subr.mxu0 0.0
        %580 = vmatpush1.msra.mxu0 0.0
        %581 = vmatprep.subr.mxu0 0.0
        %582 = vmatpush1.msra.mxu0 0.0
        %583 = vmatprep.subr.mxu0 0.0
        %584 = vmatpush1.msra.mxu0 0.0
        %585 = vmatprep.subr.mxu0 0.0
        %586 = vmatpush1.msra.mxu0 0.0
        %587 = vmatprep.subr.mxu0 0.0
        %588 = vmatpush1.msra.mxu0 0.0
        %589 = vmatprep.subr.mxu0 0.0
        %590 = vmatpush1.msra.mxu0 0.0
        %591 = vmatprep.subr.mxu0 0.0
        %592 = vmatpush1.msra.mxu0 0.0
        %593 = vmatprep.subr.mxu0 0.0
        %594 = vmatpush1.msra.mxu0 0.0
        %595 = vmatprep.subr.mxu0 0.0
        %596 = vmatpush1.msra.mxu0 0.0
        %597 = vmatprep.subr.mxu0 0.0
        %598 = vmatpush1.msra.mxu0 0.0
        %599 = vmatprep.subr.mxu0 0.0
        %600 = vmatpush1.msra.mxu0 0.0
        %601 = vmatprep.subr.mxu0 0.0
        %602 = vmatpush1.msra.mxu0 0.0
        %603 = vmatprep.subr.mxu0 0.0
        %604 = vmatpush1.msra.mxu0 0.0
        %605 = vmatprep.subr.mxu0 0.0
        %606 = vmatpush1.msra.mxu0 0.0
        %607 = vmatprep.subr.mxu0 0.0
        %608 = vmatpush1.msra.mxu0 0.0
        %609 = vmatprep.subr.mxu0 0.0
        %610 = vmatpush1.msra.mxu0 0.0
        %611 = vmatprep.mubr.f32.mxu0 0.0
        %612 = vmatmul.mubr.f32.gmra.mrb[0].mxu0 %v474
        %v613 = vpop.f32.mrb[0].mxu0
        %v614 = vadd.f32 %v463, %v613
        %v615 = vpop.f32.mrb[0].mxu0
        %v616 = vadd.f32 %v467, %v615
        %617 = vdwg.mxu0
        %vm618 = vcmask 647168
        %619 = vst.msk [vmem:[#allocation2] sm:$0x1] %vm618, %v543
        %622 = vrot.lane.b32.xlu0 %v543, 48
        %v623 = vpop.permute.xlu0 %622
        %624 = vrot.lane.b32.xlu0 %v545, 48
        %v625 = vpop.permute.xlu0 %624
        %vm626 = vcmask 392192
        %v627 = vsel %vm626, %v623, %v625
        %629 = vst.msk [vmem:[#allocation2 + $0x1] sm:$0x1] %vm618, %v627
        %630 = vrot.lane.b32.xlu0 %v545, 96
        %v631 = vpop.permute.xlu0 %630
        %633 = vst.msk [vmem:[#allocation2 + $0x2] sm:$0x1] %vm618, %v631
        %635 = vrot.lane.b32.xlu0 %v545, 16
        %v636 = vpop.permute.xlu0 %635
        %637 = vrot.lane.b32.xlu0 %v614, 16
        %v638 = vpop.permute.xlu0 %637
        %vm639 = vcmask 130048
        %v640 = vsel %vm639, %v636, %v638
        %642 = vst.msk [vmem:[#allocation2 + $0x3] sm:$0x1] %vm618, %v640
        %644 = vrot.lane.b32.xlu0 %v614, 64
        %v645 = vpop.permute.xlu0 %644
        %646 = vrot.lane.b32.xlu0 %v616, 64
        %v647 = vpop.permute.xlu0 %646
        %vm648 = vcmask 523264
        %v649 = vsel %vm648, %v645, %v647
        %651 = vst.msk [vmem:[#allocation2 + $0x4] sm:$0x1] %vm618, %v649
        %v652 = vld [vmem:[#allocation2] sm:$0x1f]
        %v653 = vld [vmem:[%s3] sm:$0xff]
        %v654 = vld [vmem:[%s3 + $0x8] sm:$0xff]
        %v655 = vld [vmem:[%s3 + $0x10] sm:$0xff]
        %v656 = vld [vmem:[%s3 + $0x18] sm:$0xff]
        %v657 = vld [vmem:[%s3 + $0x20] sm:$0xff]
        %v658 = vld [vmem:[%s3 + $0x28] sm:$0xff]
        %v659 = vld [vmem:[%s3 + $0x30] sm:$0xff]
        %v660 = vld [vmem:[%s3 + $0x38] sm:$0xff]
        %v661 = vld [vmem:[%s3 + $0x40] sm:$0xff]
        %v662 = vld [vmem:[%s3 + $0x48] sm:$0xff]
        %v663 = vld [vmem:[%s3 + $0x50] sm:$0xff]
        %v664 = vld [vmem:[%s3 + $0x58] sm:$0xff]
        %v665 = vld [vmem:[%s3 + $0x60] sm:$0xff]
        %v666 = vld [vmem:[%s3 + $0x68] sm:$0xff]
        %v667 = vld [vmem:[%s3 + $0x70] sm:$0xff]
        %v668 = vld [vmem:[%s3 + $0x78] sm:$0xff]
        %v669 = vld [vmem:[%s3 + $0x80] sm:$0xff]
        %v670 = vld [vmem:[%s3 + $0x88] sm:$0xff]
        %v671 = vld [vmem:[%s3 + $0x90] sm:$0xff]
        %v672 = vld [vmem:[%s3 + $0x98] sm:$0xff]
        %vm673 = vcmask 654336
        %v675 = vsel %vm673, %v652, 0
        %677 = vmatprep.subr.mxu0 %v654
        %678 = vmatpush1.msra.mxu0 %v653
        %679 = vmatprep.subr.mxu0 %v656
        %680 = vmatpush1.msra.mxu0 %v655
        %681 = vmatprep.subr.mxu0 %v658
        %682 = vmatpush1.msra.mxu0 %v657
        %683 = vmatprep.subr.mxu0 %v660
        %684 = vmatpush1.msra.mxu0 %v659
        %685 = vmatprep.subr.mxu0 %v662
        %686 = vmatpush1.msra.mxu0 %v661
        %687 = vmatprep.subr.mxu0 %v664
        %688 = vmatpush1.msra.mxu0 %v663
        %689 = vmatprep.subr.mxu0 %v666
        %690 = vmatpush1.msra.mxu0 %v665
        %691 = vmatprep.subr.mxu0 %v668
        %692 = vmatpush1.msra.mxu0 %v667
        %693 = vmatprep.subr.mxu0 %v670
        %694 = vmatpush1.msra.mxu0 %v669
        %695 = vmatprep.subr.mxu0 %v672
        %696 = vmatpush1.msra.mxu0 %v671
        %697 = vmatprep.subr.mxu0 0.0
        %698 = vmatpush1.msra.mxu0 0.0
        %699 = vmatprep.subr.mxu0 0.0
        %700 = vmatpush1.msra.mxu0 0.0
        %701 = vmatprep.subr.mxu0 0.0
        %702 = vmatpush1.msra.mxu0 0.0
        %703 = vmatprep.subr.mxu0 0.0
        %704 = vmatpush1.msra.mxu0 0.0
        %705 = vmatprep.subr.mxu0 0.0
        %706 = vmatpush1.msra.mxu0 0.0
        %707 = vmatprep.subr.mxu0 0.0
        %708 = vmatpush1.msra.mxu0 0.0
        %709 = vmatprep.subr.mxu0 0.0
        %710 = vmatpush1.msra.mxu0 0.0
        %711 = vmatprep.subr.mxu0 0.0
        %712 = vmatpush1.msra.mxu0 0.0
        %713 = vmatprep.subr.mxu0 0.0
        %714 = vmatpush1.msra.mxu0 0.0
        %715 = vmatprep.subr.mxu0 0.0
        %716 = vmatpush1.msra.mxu0 0.0
        %717 = vmatprep.subr.mxu0 0.0
        %718 = vmatpush1.msra.mxu0 0.0
        %719 = vmatprep.subr.mxu0 0.0
        %720 = vmatpush1.msra.mxu0 0.0
        %721 = vmatprep.subr.mxu0 0.0
        %722 = vmatpush1.msra.mxu0 0.0
        %723 = vmatprep.subr.mxu0 0.0
        %724 = vmatpush1.msra.mxu0 0.0
        %725 = vmatprep.subr.mxu0 0.0
        %726 = vmatpush1.msra.mxu0 0.0
        %727 = vmatprep.subr.mxu0 0.0
        %728 = vmatpush1.msra.mxu0 0.0
        %729 = vmatprep.subr.mxu0 0.0
        %730 = vmatpush1.msra.mxu0 0.0
        %731 = vmatprep.subr.mxu0 0.0
        %732 = vmatpush1.msra.mxu0 0.0
        %733 = vmatprep.subr.mxu0 0.0
        %734 = vmatpush1.msra.mxu0 0.0
        %735 = vmatprep.subr.mxu0 0.0
        %736 = vmatpush1.msra.mxu0 0.0
        %737 = vmatprep.subr.mxu0 0.0
        %738 = vmatpush1.msra.mxu0 0.0
        %739 = vmatprep.subr.mxu0 0.0
        %740 = vmatpush1.msra.mxu0 0.0
        %741 = vmatprep.mubr.f32.mxu0 0.0
        %742 = vmatmul.mubr.f32.gmra.mrb[0].mxu0 %v675
        %v743 = vpop.f32.mrb[0].mxu0
        %v744 = vadd.f32 0.0, %v743
        %v745 = vpop.f32.mrb[0].mxu0
        %v746 = vadd.f32 0.0, %v745
        %747 = vdwg.mxu0
        %s748 = scalar_lea.vmem %s3, 160
        %v749 = vld [vmem:[%s748] sm:$0xff]
        %v750 = vld [vmem:[%s748 + $0x8] sm:$0xff]
        %v751 = vld [vmem:[%s748 + $0x10] sm:$0xff]
        %v752 = vld [vmem:[%s748 + $0x18] sm:$0xff]
        %v753 = vld [vmem:[%s748 + $0x20] sm:$0xff]
        %v754 = vld [vmem:[%s748 + $0x28] sm:$0xff]
        %v755 = vld [vmem:[%s748 + $0x30] sm:$0xff]
        %v756 = vld [vmem:[%s748 + $0x38] sm:$0xff]
        %v757 = vld [vmem:[%s748 + $0x40] sm:$0xff]
        %v758 = vld [vmem:[%s748 + $0x48] sm:$0xff]
        %v759 = vld [vmem:[%s748 + $0x50] sm:$0xff]
        %v760 = vld [vmem:[%s748 + $0x58] sm:$0xff]
        %v761 = vld [vmem:[%s748 + $0x60] sm:$0xff]
        %v762 = vld [vmem:[%s748 + $0x68] sm:$0xff]
        %v763 = vld [vmem:[%s748 + $0x70] sm:$0xff]
        %v764 = vld [vmem:[%s748 + $0x78] sm:$0xff]
        %v765 = vld [vmem:[%s748 + $0x80] sm:$0xff]
        %v766 = vld [vmem:[%s748 + $0x88] sm:$0xff]
        %v767 = vld [vmem:[%s748 + $0x90] sm:$0xff]
        %v768 = vld [vmem:[%s748 + $0x98] sm:$0xff]
        %769 = vmatprep.subr.mxu0 %v750
        %770 = vmatpush1.msra.mxu0 %v749
        %771 = vmatprep.subr.mxu0 %v752
        %772 = vmatpush1.msra.mxu0 %v751
        %773 = vmatprep.subr.mxu0 %v754
        %774 = vmatpush1.msra.mxu0 %v753
        %775 = vmatprep.subr.mxu0 %v756
        %776 = vmatpush1.msra.mxu0 %v755
        %777 = vmatprep.subr.mxu0 %v758
        %778 = vmatpush1.msra.mxu0 %v757
        %779 = vmatprep.subr.mxu0 %v760
        %780 = vmatpush1.msra.mxu0 %v759
        %781 = vmatprep.subr.mxu0 %v762
        %782 = vmatpush1.msra.mxu0 %v761
        %783 = vmatprep.subr.mxu0 %v764
        %784 = vmatpush1.msra.mxu0 %v763
        %785 = vmatprep.subr.mxu0 %v766
        %786 = vmatpush1.msra.mxu0 %v765
        %787 = vmatprep.subr.mxu0 %v768
        %788 = vmatpush1.msra.mxu0 %v767
        %789 = vmatprep.subr.mxu0 0.0
        %790 = vmatpush1.msra.mxu0 0.0
        %791 = vmatprep.subr.mxu0 0.0
        %792 = vmatpush1.msra.mxu0 0.0
        %793 = vmatprep.subr.mxu0 0.0
        %794 = vmatpush1.msra.mxu0 0.0
        %795 = vmatprep.subr.mxu0 0.0
        %796 = vmatpush1.msra.mxu0 0.0
        %797 = vmatprep.subr.mxu0 0.0
        %798 = vmatpush1.msra.mxu0 0.0
        %799 = vmatprep.subr.mxu0 0.0
        %800 = vmatpush1.msra.mxu0 0.0
        %801 = vmatprep.subr.mxu0 0.0
        %802 = vmatpush1.msra.mxu0 0.0
        %803 = vmatprep.subr.mxu0 0.0
        %804 = vmatpush1.msra.mxu0 0.0
        %805 = vmatprep.subr.mxu0 0.0
        %806 = vmatpush1.msra.mxu0 0.0
        %807 = vmatprep.subr.mxu0 0.0
        %808 = vmatpush1.msra.mxu0 0.0
        %809 = vmatprep.subr.mxu0 0.0
        %810 = vmatpush1.msra.mxu0 0.0
        %811 = vmatprep.subr.mxu0 0.0
        %812 = vmatpush1.msra.mxu0 0.0
        %813 = vmatprep.subr.mxu0 0.0
        %814 = vmatpush1.msra.mxu0 0.0
        %815 = vmatprep.subr.mxu0 0.0
        %816 = vmatpush1.msra.mxu0 0.0
        %817 = vmatprep.subr.mxu0 0.0
        %818 = vmatpush1.msra.mxu0 0.0
        %819 = vmatprep.subr.mxu0 0.0
        %820 = vmatpush1.msra.mxu0 0.0
        %821 = vmatprep.subr.mxu0 0.0
        %822 = vmatpush1.msra.mxu0 0.0
        %823 = vmatprep.subr.mxu0 0.0
        %824 = vmatpush1.msra.mxu0 0.0
        %825 = vmatprep.subr.mxu0 0.0
        %826 = vmatpush1.msra.mxu0 0.0
        %827 = vmatprep.subr.mxu0 0.0
        %828 = vmatpush1.msra.mxu0 0.0
        %829 = vmatprep.subr.mxu0 0.0
        %830 = vmatpush1.msra.mxu0 0.0
        %831 = vmatprep.subr.mxu0 0.0
        %832 = vmatpush1.msra.mxu0 0.0
        %833 = vmatprep.mubr.f32.mxu0 0.0
        %834 = vmatmul.mubr.f32.gmra.mrb[0].mxu0 %v675
        %v835 = vpop.f32.mrb[0].mxu0
        %v836 = vadd.f32 0.0, %v835
        %v837 = vpop.f32.mrb[0].mxu0
        %v838 = vadd.f32 0.0, %v837
        %839 = vdwg.mxu0
        %v840 = vld [vmem:[%s5] sm:$0xff]
        %v841 = vld [vmem:[%s5 + $0x8] sm:$0x3]
        %s842 = scalar_lea.vmem %s5, 16
        %v843 = vld [vmem:[%s842] sm:$0xff]
        %v844 = vld [vmem:[%s842 + $0x8] sm:$0x3]
        %vm845 = vcmask 39936
        %v847 = vsel %vm845, %v843, 0
        %v850 = vsel %vm845, %v844, 0
        %vm852 = vcmask 1044480
        %v854 = vsel %vm852, %v836, 0
        %v857 = vsel %vm852, %v838, 0
        %859 = vmatprep.subr.mxu0 %v857
        %860 = vmatpush1.msra.mxu0 %v854
        %861 = vmatprep.subr.mxu0 0.0
        %862 = vmatpush1.msra.mxu0 0.0
        %863 = vmatprep.subr.mxu0 0.0
        %864 = vmatpush1.msra.mxu0 0.0
        %865 = vmatprep.subr.mxu0 0.0
        %866 = vmatpush1.msra.mxu0 0.0
        %867 = vmatprep.subr.mxu0 0.0
        %868 = vmatpush1.msra.mxu0 0.0
        %869 = vmatprep.subr.mxu0 0.0
        %870 = vmatpush1.msra.mxu0 0.0
        %871 = vmatprep.subr.mxu0 0.0
        %872 = vmatpush1.msra.mxu0 0.0
        %873 = vmatprep.subr.mxu0 0.0
        %874 = vmatpush1.msra.mxu0 0.0
        %875 = vmatprep.subr.mxu0 0.0
        %876 = vmatpush1.msra.mxu0 0.0
        %877 = vmatprep.subr.mxu0 0.0
        %878 = vmatpush1.msra.mxu0 0.0
        %879 = vmatprep.subr.mxu0 0.0
        %880 = vmatpush1.msra.mxu0 0.0
        %881 = vmatprep.subr.mxu0 0.0
        %882 = vmatpush1.msra.mxu0 0.0
        %883 = vmatprep.subr.mxu0 0.0
        %884 = vmatpush1.msra.mxu0 0.0
        %885 = vmatprep.subr.mxu0 0.0
        %886 = vmatpush1.msra.mxu0 0.0
        %887 = vmatprep.subr.mxu0 0.0
        %888 = vmatpush1.msra.mxu0 0.0
        %889 = vmatprep.subr.mxu0 0.0
        %890 = vmatpush1.msra.mxu0 0.0
        %891 = vmatprep.subr.mxu0 0.0
        %892 = vmatpush1.msra.mxu0 0.0
        %893 = vmatprep.subr.mxu0 0.0
        %894 = vmatpush1.msra.mxu0 0.0
        %895 = vmatprep.subr.mxu0 0.0
        %896 = vmatpush1.msra.mxu0 0.0
        %897 = vmatprep.subr.mxu0 0.0
        %898 = vmatpush1.msra.mxu0 0.0
        %899 = vmatprep.subr.mxu0 0.0
        %900 = vmatpush1.msra.mxu0 0.0
        %901 = vmatprep.subr.mxu0 0.0
        %902 = vmatpush1.msra.mxu0 0.0
        %903 = vmatprep.subr.mxu0 0.0
        %904 = vmatpush1.msra.mxu0 0.0
        %905 = vmatprep.subr.mxu0 0.0
        %906 = vmatpush1.msra.mxu0 0.0
        %907 = vmatprep.subr.mxu0 0.0
        %908 = vmatpush1.msra.mxu0 0.0
        %909 = vmatprep.subr.mxu0 0.0
        %910 = vmatpush1.msra.mxu0 0.0
        %911 = vmatprep.subr.mxu0 0.0
        %912 = vmatpush1.msra.mxu0 0.0
        %913 = vmatprep.subr.mxu0 0.0
        %914 = vmatpush1.msra.mxu0 0.0
        %915 = vmatprep.subr.mxu0 0.0
        %916 = vmatpush1.msra.mxu0 0.0
        %917 = vmatprep.subr.mxu0 0.0
        %918 = vmatpush1.msra.mxu0 0.0
        %919 = vmatprep.subr.mxu0 0.0
        %920 = vmatpush1.msra.mxu0 0.0
        %921 = vmatprep.subr.mxu0 0.0
        %922 = vmatpush1.msra.mxu0 0.0
        %923 = vmatprep.mubr.f32.mxu0 0.0
        %924 = vmatmul.mubr.f32.gmra.mrb[0].mxu0 %v847
        %v925 = vpop.f32.mrb[0].mxu0
        %v926 = vadd.f32 0.0, %v925
        %v927 = vpop.f32.mrb[0].mxu0
        %v928 = vadd.f32 0.0, %v927
        %929 = vmatprep.mubr.f32.mxu0 0.0
        %930 = vmatmul.mubr.f32.gmra.mrb[0].mxu0 %v850
        %v931 = vpop.f32.mrb[0].mxu0
        %v932 = vadd.f32 0.0, %v931
        %v933 = vpop.f32.mrb[0].mxu0
        %v934 = vadd.f32 0.0, %v933
        %935 = vdwg.mxu0
        %v937 = vsel %vm845, %v840, 0
        %v940 = vsel %vm845, %v841, 0
        %v943 = vsel %vm852, %v744, 0
        %v946 = vsel %vm852, %v746, 0
        %948 = vmatprep.subr.mxu0 %v946
        %949 = vmatpush1.msra.mxu0 %v943
        %950 = vmatprep.subr.mxu0 0.0
        %951 = vmatpush1.msra.mxu0 0.0
        %952 = vmatprep.subr.mxu0 0.0
        %953 = vmatpush1.msra.mxu0 0.0
        %954 = vmatprep.subr.mxu0 0.0
        %955 = vmatpush1.msra.mxu0 0.0
        %956 = vmatprep.subr.mxu0 0.0
        %957 = vmatpush1.msra.mxu0 0.0
        %958 = vmatprep.subr.mxu0 0.0
        %959 = vmatpush1.msra.mxu0 0.0
        %960 = vmatprep.subr.mxu0 0.0
        %961 = vmatpush1.msra.mxu0 0.0
        %962 = vmatprep.subr.mxu0 0.0
        %963 = vmatpush1.msra.mxu0 0.0
        %964 = vmatprep.subr.mxu0 0.0
        %965 = vmatpush1.msra.mxu0 0.0
        %966 = vmatprep.subr.mxu0 0.0
        %967 = vmatpush1.msra.mxu0 0.0
        %968 = vmatprep.subr.mxu0 0.0
        %969 = vmatpush1.msra.mxu0 0.0
        %970 = vmatprep.subr.mxu0 0.0
        %971 = vmatpush1.msra.mxu0 0.0
        %972 = vmatprep.subr.mxu0 0.0
        %973 = vmatpush1.msra.mxu0 0.0
        %974 = vmatprep.subr.mxu0 0.0
        %975 = vmatpush1.msra.mxu0 0.0
        %976 = vmatprep.subr.mxu0 0.0
        %977 = vmatpush1.msra.mxu0 0.0
        %978 = vmatprep.subr.mxu0 0.0
        %979 = vmatpush1.msra.mxu0 0.0
        %980 = vmatprep.subr.mxu0 0.0
        %981 = vmatpush1.msra.mxu0 0.0
        %982 = vmatprep.subr.mxu0 0.0
        %983 = vmatpush1.msra.mxu0 0.0
        %984 = vmatprep.subr.mxu0 0.0
        %985 = vmatpush1.msra.mxu0 0.0
        %986 = vmatprep.subr.mxu0 0.0
        %987 = vmatpush1.msra.mxu0 0.0
        %988 = vmatprep.subr.mxu0 0.0
        %989 = vmatpush1.msra.mxu0 0.0
        %990 = vmatprep.subr.mxu0 0.0
        %991 = vmatpush1.msra.mxu0 0.0
        %992 = vmatprep.subr.mxu0 0.0
        %993 = vmatpush1.msra.mxu0 0.0
        %994 = vmatprep.subr.mxu0 0.0
        %995 = vmatpush1.msra.mxu0 0.0
        %996 = vmatprep.subr.mxu0 0.0
        %997 = vmatpush1.msra.mxu0 0.0
        %998 = vmatprep.subr.mxu0 0.0
        %999 = vmatpush1.msra.mxu0 0.0
        %1000 = vmatprep.subr.mxu0 0.0
        %1001 = vmatpush1.msra.mxu0 0.0
        %1002 = vmatprep.subr.mxu0 0.0
        %1003 = vmatpush1.msra.mxu0 0.0
        %1004 = vmatprep.subr.mxu0 0.0
        %1005 = vmatpush1.msra.mxu0 0.0
        %1006 = vmatprep.subr.mxu0 0.0
        %1007 = vmatpush1.msra.mxu0 0.0
        %1008 = vmatprep.subr.mxu0 0.0
        %1009 = vmatpush1.msra.mxu0 0.0
        %1010 = vmatprep.subr.mxu0 0.0
        %1011 = vmatpush1.msra.mxu0 0.0
        %1012 = vmatprep.mubr.f32.mxu0 0.0
        %1013 = vmatmul.mubr.f32.gmra.mrb[0].mxu0 %v937
        %v1014 = vpop.f32.mrb[0].mxu0
        %v1015 = vadd.f32 %v926, %v1014
        %v1016 = vpop.f32.mrb[0].mxu0
        %v1017 = vadd.f32 %v928, %v1016
        %1018 = vmatprep.mubr.f32.mxu0 0.0
        %1019 = vmatmul.mubr.f32.gmra.mrb[0].mxu0 %v940
        %v1020 = vpop.f32.mrb[0].mxu0
        %v1021 = vadd.f32 %v932, %v1020
        %v1022 = vpop.f32.mrb[0].mxu0
        %v1023 = vadd.f32 %v934, %v1022
        %1024 = vdwg.mxu0
        %v1025 = vld [vmem:[%s4] sm:$0x3]
        %v1027 = vlaneseq
        %v1028 = vshrl.u32 %v1027, 7
        %v1029 = vsub.s32 0, %v1028
        %v1030 = vrot.slane %v1025, %v1029
        %v1031 = vlaneseq
        %v1032 = vshrl.u32 %v1031, 7
        %v1033 = vsub.s32 1, %v1032
        %v1034 = vrot.slane %v1025, %v1033
        %v1037 = vadd.f32 %v1015, %v1030
        %v1038 = vadd.f32 %v1017, %v1034
        %v1039 = vadd.f32 %v1021, %v1030
        %v1040 = vadd.f32 %v1023, %v1034
        %1041 = vst [vmem:[#allocation3] sm:$0xff] 0.0
        %1042 = vst.msk [vmem:[#allocation3 + $0x8] sm:$0xff] %vm472, 0.0
        %1043 = vst [vmem:[#allocation3 + $0x10] sm:$0xff] 0.0
        %1044 = vst.msk [vmem:[#allocation3 + $0x18] sm:$0xff] %vm472, 0.0
        %1045 = vst [vmem:[#allocation3 + $0x20] sm:$0x3f] 0.0
        %vm1046 = vcmask 259072
        %1047 = vst.msk [vmem:[#allocation3 + $0x28] sm:$0x3f] %vm1046, 0.0
        %v1048 = vtanh.pop %v1037
        %v1049 = vtanh.pop %v1038
        %v1050 = vtanh.pop %v1039
        %v1051 = vtanh.pop %v1040
        %1052 = vst [vmem:[#allocation3 + $0x10] sm:$0xff] %v1048
        %1053 = vst.msk [vmem:[#allocation3 + $0x18] sm:$0xff] %vm472, %v1049
        %1054 = vst [vmem:[#allocation3 + $0x20] sm:$0x3] %v1050
        %vm1055 = vcmask 254976
        %1056 = vst.msk [vmem:[#allocation3 + $0x28] sm:$0x3] %vm1055, %v1051
        %v1057 = vld [vmem:[%s7] sm:$0x1]
        %v1058 = vld [vmem:[#allocation3] sm:$0xf0]
        %v1059 = vld [vmem:[#allocation3 + $0x8] sm:$0xf0]
        %v1060 = vld [vmem:[#allocation3 + $0x10] sm:$0xff]
        %v1061 = vld [vmem:[#allocation3 + $0x18] sm:$0xff]
        %v1062 = vld [vmem:[#allocation3 + $0x20] sm:$0x3]
        %v1063 = vld [vmem:[#allocation3 + $0x28] sm:$0x3]
        %v1064 = vld [vmem:[%s6] sm:$0xff]
        %v1065 = vld [vmem:[%s6 + $0x8] sm:$0xff]
        %v1066 = vld [vmem:[%s6 + $0x10] sm:$0xff]
        %v1067 = vld [vmem:[%s6 + $0x18] sm:$0xff]
        %v1068 = vld [vmem:[%s6 + $0x20] sm:$0xff]
        %v1069 = vld [vmem:[%s6 + $0x28] sm:$0xff]
        %v1070 = vld [vmem:[%s6 + $0x30] sm:$0xff]
        %v1071 = vld [vmem:[%s6 + $0x38] sm:$0xff]
        %v1072 = vld [vmem:[%s6 + $0x40] sm:$0xff]
        %v1073 = vld [vmem:[%s6 + $0x48] sm:$0xff]
        %v1074 = vld [vmem:[%s6 + $0x50] sm:$0xff]
        %v1075 = vld [vmem:[%s6 + $0x58] sm:$0xff]
        %v1076 = vld [vmem:[%s6 + $0x60] sm:$0xff]
        %v1077 = vld [vmem:[%s6 + $0x68] sm:$0xff]
        %v1078 = vld [vmem:[%s6 + $0x70] sm:$0xff]
        %v1079 = vld [vmem:[%s6 + $0x78] sm:$0xff]
        %v1080 = vld [vmem:[%s6 + $0x80] sm:$0xff]
        %v1081 = vld [vmem:[%s6 + $0x88] sm:$0xff]
        %v1082 = vld [vmem:[%s6 + $0x90] sm:$0xff]
        %v1083 = vld [vmem:[%s6 + $0x98] sm:$0xff]
        %vm1090 = vcmask 1043456
        %v1091 = vrot.slane %v1058, 4
        %v1092 = vrot.slane %v1060, 4
        %v1093 = vsel %vm1090, %v1091, %v1092
        %v1094 = vrot.slane %v1059, 4
        %v1095 = vrot.slane %v1061, 4
        %v1096 = vsel %vm1090, %v1094, %v1095
        %v1097 = vrot.slane %v1062, 4
        %v1098 = vsel %vm1090, %v1092, %v1097
        %v1099 = vrot.slane %v1063, 4
        %v1100 = vsel %vm1090, %v1095, %v1099
        %v1103 = vsel %vm472, %v1096, 0
        %v1105 = vsel %vm472, %v1100, 0
        %1107 = vmatprep.subr.mxu0 0.0
        %1108 = vmatpush1.msra.mxu0 %v1064
        %1109 = vmatprep.subr.mxu0 0.0
        %1110 = vmatpush1.msra.mxu0 %v1065
        %1111 = vmatprep.subr.mxu0 0.0
        %1112 = vmatpush1.msra.mxu0 %v1066
        %1113 = vmatprep.subr.mxu0 0.0
        %1114 = vmatpush1.msra.mxu0 %v1067
        %1115 = vmatprep.subr.mxu0 0.0
        %1116 = vmatpush1.msra.mxu0 %v1068
        %1117 = vmatprep.subr.mxu0 0.0
        %1118 = vmatpush1.msra.mxu0 %v1069
        %1119 = vmatprep.subr.mxu0 0.0
        %1120 = vmatpush1.msra.mxu0 %v1070
        %1121 = vmatprep.subr.mxu0 0.0
        %1122 = vmatpush1.msra.mxu0 %v1071
        %1123 = vmatprep.subr.mxu0 0.0
        %1124 = vmatpush1.msra.mxu0 %v1072
        %1125 = vmatprep.subr.mxu0 0.0
        %1126 = vmatpush1.msra.mxu0 %v1073
        %1127 = vmatprep.subr.mxu0 0.0
        %1128 = vmatpush1.msra.mxu0 %v1074
        %1129 = vmatprep.subr.mxu0 0.0
        %1130 = vmatpush1.msra.mxu0 %v1075
        %1131 = vmatprep.subr.mxu0 0.0
        %1132 = vmatpush1.msra.mxu0 %v1076
        %1133 = vmatprep.subr.mxu0 0.0
        %1134 = vmatpush1.msra.mxu0 %v1077
        %1135 = vmatprep.subr.mxu0 0.0
        %1136 = vmatpush1.msra.mxu0 %v1078
        %1137 = vmatprep.subr.mxu0 0.0
        %1138 = vmatpush1.msra.mxu0 %v1079
        %1139 = vmatprep.subr.mxu0 0.0
        %1140 = vmatpush1.msra.mxu0 %v1080
        %1141 = vmatprep.subr.mxu0 0.0
        %1142 = vmatpush1.msra.mxu0 %v1081
        %1143 = vmatprep.subr.mxu0 0.0
        %1144 = vmatpush1.msra.mxu0 %v1082
        %1145 = vmatprep.subr.mxu0 0.0
        %1146 = vmatpush1.msra.mxu0 %v1083
        %1147 = vmatprep.subr.mxu0 0.0
        %1148 = vmatpush1.msra.mxu0 0.0
        %1149 = vmatprep.subr.mxu0 0.0
        %1150 = vmatpush1.msra.mxu0 0.0
        %1151 = vmatprep.subr.mxu0 0.0
        %1152 = vmatpush1.msra.mxu0 0.0
        %1153 = vmatprep.subr.mxu0 0.0
        %1154 = vmatpush1.msra.mxu0 0.0
        %1155 = vmatprep.subr.mxu0 0.0
        %1156 = vmatpush1.msra.mxu0 0.0
        %1157 = vmatprep.subr.mxu0 0.0
        %1158 = vmatpush1.msra.mxu0 0.0
        %1159 = vmatprep.subr.mxu0 0.0
        %1160 = vmatpush1.msra.mxu0 0.0
        %1161 = vmatprep.subr.mxu0 0.0
        %1162 = vmatpush1.msra.mxu0 0.0
        %1163 = vmatprep.subr.mxu0 0.0
        %1164 = vmatpush1.msra.mxu0 0.0
        %1165 = vmatprep.subr.mxu0 0.0
        %1166 = vmatpush1.msra.mxu0 0.0
        %1167 = vmatprep.subr.mxu0 0.0
        %1168 = vmatpush1.msra.mxu0 0.0
        %1169 = vmatprep.subr.mxu0 0.0
        %1170 = vmatpush1.msra.mxu0 0.0
        %1171 = vmatprep.mubr.f32.mxu0 %v1103
        %1172 = vmatmul.mubr.f32.gmra.mrb[0].mxu0 %v1093
        %v1173 = vpop.f32.mrb[0].mxu0
        %v1174 = vadd.f32 0.0, %v1173
        %v1175 = vpop.f32.mrb[0].mxu0
        %1176 = vmatprep.mubr.f32.mxu0 %v1105
        %1177 = vmatmul.mubr.f32.gmra.mrb[0].mxu0 %v1098
        %v1178 = vpop.f32.mrb[0].mxu0
        %v1179 = vadd.f32 0.0, %v1178
        %v1180 = vpop.f32.mrb[0].mxu0
        %1181 = vdwg.mxu0
        %v1183 = vlaneseq
        %v1184 = vshrl.u32 %v1183, 7
        %v1185 = vsub.s32 0, %v1184
        %v1186 = vrot.slane %v1057, %v1185
        %v1188 = vadd.f32 %v1186, %v1174
        %v1189 = vadd.f32 %v1186, %v1179
        %v1190 = vld [vmem:[#allocation3] sm:$0xe0]
        %v1191 = vld [vmem:[#allocation3 + $0x8] sm:$0xe0]
        %v1192 = vld [vmem:[#allocation3 + $0x20] sm:$0x7]
        %v1193 = vld [vmem:[#allocation3 + $0x28] sm:$0x7]
        %s1194 = scalar_lea.vmem %s6, 160
        %v1195 = vld [vmem:[%s1194] sm:$0xff]
        %v1196 = vld [vmem:[%s1194 + $0x8] sm:$0xff]
        %v1197 = vld [vmem:[%s1194 + $0x10] sm:$0xff]
        %v1198 = vld [vmem:[%s1194 + $0x18] sm:$0xff]
        %v1199 = vld [vmem:[%s1194 + $0x20] sm:$0xff]
        %v1200 = vld [vmem:[%s1194 + $0x28] sm:$0xff]
        %v1201 = vld [vmem:[%s1194 + $0x30] sm:$0xff]
        %v1202 = vld [vmem:[%s1194 + $0x38] sm:$0xff]
        %v1203 = vld [vmem:[%s1194 + $0x40] sm:$0xff]
        %v1204 = vld [vmem:[%s1194 + $0x48] sm:$0xff]
        %v1205 = vld [vmem:[%s1194 + $0x50] sm:$0xff]
        %v1206 = vld [vmem:[%s1194 + $0x58] sm:$0xff]
        %v1207 = vld [vmem:[%s1194 + $0x60] sm:$0xff]
        %v1208 = vld [vmem:[%s1194 + $0x68] sm:$0xff]
        %v1209 = vld [vmem:[%s1194 + $0x70] sm:$0xff]
        %v1210 = vld [vmem:[%s1194 + $0x78] sm:$0xff]
        %v1211 = vld [vmem:[%s1194 + $0x80] sm:$0xff]
        %v1212 = vld [vmem:[%s1194 + $0x88] sm:$0xff]
        %v1213 = vld [vmem:[%s1194 + $0x90] sm:$0xff]
        %v1214 = vld [vmem:[%s1194 + $0x98] sm:$0xff]
        %vm1219 = vcmask 1042432
        %v1220 = vrot.slane %v1190, 5
        %v1221 = vrot.slane %v1060, 5
        %v1222 = vsel %vm1219, %v1220, %v1221
        %v1223 = vrot.slane %v1191, 5
        %v1224 = vrot.slane %v1061, 5
        %v1225 = vsel %vm1219, %v1223, %v1224
        %v1226 = vrot.slane %v1192, 5
        %v1227 = vsel %vm1219, %v1221, %v1226
        %v1228 = vrot.slane %v1193, 5
        %v1229 = vsel %vm1219, %v1224, %v1228
        %v1232 = vsel %vm472, %v1225, 0
        %v1234 = vsel %vm472, %v1229, 0
        %1236 = vmatprep.subr.mxu0 0.0
        %1237 = vmatpush1.msra.mxu0 %v1195
        %1238 = vmatprep.subr.mxu0 0.0
        %1239 = vmatpush1.msra.mxu0 %v1196
        %1240 = vmatprep.subr.mxu0 0.0
        %1241 = vmatpush1.msra.mxu0 %v1197
        %1242 = vmatprep.subr.mxu0 0.0
        %1243 = vmatpush1.msra.mxu0 %v1198
        %1244 = vmatprep.subr.mxu0 0.0
        %1245 = vmatpush1.msra.mxu0 %v1199
        %1246 = vmatprep.subr.mxu0 0.0
        %1247 = vmatpush1.msra.mxu0 %v1200
        %1248 = vmatprep.subr.mxu0 0.0
        %1249 = vmatpush1.msra.mxu0 %v1201
        %1250 = vmatprep.subr.mxu0 0.0
        %1251 = vmatpush1.msra.mxu0 %v1202
        %1252 = vmatprep.subr.mxu0 0.0
        %1253 = vmatpush1.msra.mxu0 %v1203
        %1254 = vmatprep.subr.mxu0 0.0
        %1255 = vmatpush1.msra.mxu0 %v1204
        %1256 = vmatprep.subr.mxu0 0.0
        %1257 = vmatpush1.msra.mxu0 %v1205
        %1258 = vmatprep.subr.mxu0 0.0
        %1259 = vmatpush1.msra.mxu0 %v1206
        %1260 = vmatprep.subr.mxu0 0.0
        %1261 = vmatpush1.msra.mxu0 %v1207
        %1262 = vmatprep.subr.mxu0 0.0
        %1263 = vmatpush1.msra.mxu0 %v1208
        %1264 = vmatprep.subr.mxu0 0.0
        %1265 = vmatpush1.msra.mxu0 %v1209
        %1266 = vmatprep.subr.mxu0 0.0
        %1267 = vmatpush1.msra.mxu0 %v1210
        %1268 = vmatprep.subr.mxu0 0.0
        %1269 = vmatpush1.msra.mxu0 %v1211
        %1270 = vmatprep.subr.mxu0 0.0
        %1271 = vmatpush1.msra.mxu0 %v1212
        %1272 = vmatprep.subr.mxu0 0.0
        %1273 = vmatpush1.msra.mxu0 %v1213
        %1274 = vmatprep.subr.mxu0 0.0
        %1275 = vmatpush1.msra.mxu0 %v1214
        %1276 = vmatprep.subr.mxu0 0.0
        %1277 = vmatpush1.msra.mxu0 0.0
        %1278 = vmatprep.subr.mxu0 0.0
        %1279 = vmatpush1.msra.mxu0 0.0
        %1280 = vmatprep.subr.mxu0 0.0
        %1281 = vmatpush1.msra.mxu0 0.0
        %1282 = vmatprep.subr.mxu0 0.0
        %1283 = vmatpush1.msra.mxu0 0.0
        %1284 = vmatprep.subr.mxu0 0.0
        %1285 = vmatpush1.msra.mxu0 0.0
        %1286 = vmatprep.subr.mxu0 0.0
        %1287 = vmatpush1.msra.mxu0 0.0
        %1288 = vmatprep.subr.mxu0 0.0
        %1289 = vmatpush1.msra.mxu0 0.0
        %1290 = vmatprep.subr.mxu0 0.0
        %1291 = vmatpush1.msra.mxu0 0.0
        %1292 = vmatprep.subr.mxu0 0.0
        %1293 = vmatpush1.msra.mxu0 0.0
        %1294 = vmatprep.subr.mxu0 0.0
        %1295 = vmatpush1.msra.mxu0 0.0
        %1296 = vmatprep.subr.mxu0 0.0
        %1297 = vmatpush1.msra.mxu0 0.0
        %1298 = vmatprep.subr.mxu0 0.0
        %1299 = vmatpush1.msra.mxu0 0.0
        %1300 = vmatprep.mubr.f32.mxu0 %v1232
        %1301 = vmatmul.mubr.f32.gmra.mrb[0].mxu0 %v1222
        %v1302 = vpop.f32.mrb[0].mxu0
        %v1303 = vadd.f32 0.0, %v1302
        %v1304 = vpop.f32.mrb[0].mxu0
        %1305 = vmatprep.mubr.f32.mxu0 %v1234
        %1306 = vmatmul.mubr.f32.gmra.mrb[0].mxu0 %v1227
        %v1307 = vpop.f32.mrb[0].mxu0
        %v1308 = vadd.f32 0.0, %v1307
        %v1309 = vpop.f32.mrb[0].mxu0
        %1310 = vdwg.mxu0
        %v1311 = vadd.f32 %v1188, %v1303
        %v1312 = vadd.f32 %v1189, %v1308
        %v1313 = vld [vmem:[#allocation3] sm:$0xc0]
        %v1314 = vld [vmem:[#allocation3 + $0x8] sm:$0xc0]
        %v1315 = vld [vmem:[#allocation3 + $0x20] sm:$0xf]
        %v1316 = vld [vmem:[#allocation3 + $0x28] sm:$0xf]
        %s1317 = scalar_lea.vmem %s6, 320
        %v1318 = vld [vmem:[%s1317] sm:$0xff]
        %v1319 = vld [vmem:[%s1317 + $0x8] sm:$0xff]
        %v1320 = vld [vmem:[%s1317 + $0x10] sm:$0xff]
        %v1321 = vld [vmem:[%s1317 + $0x18] sm:$0xff]
        %v1322 = vld [vmem:[%s1317 + $0x20] sm:$0xff]
        %v1323 = vld [vmem:[%s1317 + $0x28] sm:$0xff]
        %v1324 = vld [vmem:[%s1317 + $0x30] sm:$0xff]
        %v1325 = vld [vmem:[%s1317 + $0x38] sm:$0xff]
        %v1326 = vld [vmem:[%s1317 + $0x40] sm:$0xff]
        %v1327 = vld [vmem:[%s1317 + $0x48] sm:$0xff]
        %v1328 = vld [vmem:[%s1317 + $0x50] sm:$0xff]
        %v1329 = vld [vmem:[%s1317 + $0x58] sm:$0xff]
        %v1330 = vld [vmem:[%s1317 + $0x60] sm:$0xff]
        %v1331 = vld [vmem:[%s1317 + $0x68] sm:$0xff]
        %v1332 = vld [vmem:[%s1317 + $0x70] sm:$0xff]
        %v1333 = vld [vmem:[%s1317 + $0x78] sm:$0xff]
        %v1334 = vld [vmem:[%s1317 + $0x80] sm:$0xff]
        %v1335 = vld [vmem:[%s1317 + $0x88] sm:$0xff]
        %v1336 = vld [vmem:[%s1317 + $0x90] sm:$0xff]
        %v1337 = vld [vmem:[%s1317 + $0x98] sm:$0xff]
        %vm1342 = vcmask 1041408
        %v1343 = vrot.slane %v1313, 6
        %v1344 = vrot.slane %v1060, 6
        %v1345 = vsel %vm1342, %v1343, %v1344
        %v1346 = vrot.slane %v1314, 6
        %v1347 = vrot.slane %v1061, 6
        %v1348 = vsel %vm1342, %v1346, %v1347
        %v1349 = vrot.slane %v1315, 6
        %v1350 = vsel %vm1342, %v1344, %v1349
        %v1351 = vrot.slane %v1316, 6
        %v1352 = vsel %vm1342, %v1347, %v1351
        %v1355 = vsel %vm472, %v1348, 0
        %v1357 = vsel %vm472, %v1352, 0
        %1359 = vmatprep.subr.mxu0 0.0
        %1360 = vmatpush1.msra.mxu0 %v1318
        %1361 = vmatprep.subr.mxu0 0.0
        %1362 = vmatpush1.msra.mxu0 %v1319
        %1363 = vmatprep.subr.mxu0 0.0
        %1364 = vmatpush1.msra.mxu0 %v1320
        %1365 = vmatprep.subr.mxu0 0.0
        %1366 = vmatpush1.msra.mxu0 %v1321
        %1367 = vmatprep.subr.mxu0 0.0
        %1368 = vmatpush1.msra.mxu0 %v1322
        %1369 = vmatprep.subr.mxu0 0.0
        %1370 = vmatpush1.msra.mxu0 %v1323
        %1371 = vmatprep.subr.mxu0 0.0
        %1372 = vmatpush1.msra.mxu0 %v1324
        %1373 = vmatprep.subr.mxu0 0.0
        %1374 = vmatpush1.msra.mxu0 %v1325
        %1375 = vmatprep.subr.mxu0 0.0
        %1376 = vmatpush1.msra.mxu0 %v1326
        %1377 = vmatprep.subr.mxu0 0.0
        %1378 = vmatpush1.msra.mxu0 %v1327
        %1379 = vmatprep.subr.mxu0 0.0
        %1380 = vmatpush1.msra.mxu0 %v1328
        %1381 = vmatprep.subr.mxu0 0.0
        %1382 = vmatpush1.msra.mxu0 %v1329
        %1383 = vmatprep.subr.mxu0 0.0
        %1384 = vmatpush1.msra.mxu0 %v1330
        %1385 = vmatprep.subr.mxu0 0.0
        %1386 = vmatpush1.msra.mxu0 %v1331
        %1387 = vmatprep.subr.mxu0 0.0
        %1388 = vmatpush1.msra.mxu0 %v1332
        %1389 = vmatprep.subr.mxu0 0.0
        %1390 = vmatpush1.msra.mxu0 %v1333
        %1391 = vmatprep.subr.mxu0 0.0
        %1392 = vmatpush1.msra.mxu0 %v1334
        %1393 = vmatprep.subr.mxu0 0.0
        %1394 = vmatpush1.msra.mxu0 %v1335
        %1395 = vmatprep.subr.mxu0 0.0
        %1396 = vmatpush1.msra.mxu0 %v1336
        %1397 = vmatprep.subr.mxu0 0.0
        %1398 = vmatpush1.msra.mxu0 %v1337
        %1399 = vmatprep.subr.mxu0 0.0
        %1400 = vmatpush1.msra.mxu0 0.0
        %1401 = vmatprep.subr.mxu0 0.0
        %1402 = vmatpush1.msra.mxu0 0.0
        %1403 = vmatprep.subr.mxu0 0.0
        %1404 = vmatpush1.msra.mxu0 0.0
        %1405 = vmatprep.subr.mxu0 0.0
        %1406 = vmatpush1.msra.mxu0 0.0
        %1407 = vmatprep.subr.mxu0 0.0
        %1408 = vmatpush1.msra.mxu0 0.0
        %1409 = vmatprep.subr.mxu0 0.0
        %1410 = vmatpush1.msra.mxu0 0.0
        %1411 = vmatprep.subr.mxu0 0.0
        %1412 = vmatpush1.msra.mxu0 0.0
        %1413 = vmatprep.subr.mxu0 0.0
        %1414 = vmatpush1.msra.mxu0 0.0
        %1415 = vmatprep.subr.mxu0 0.0
        %1416 = vmatpush1.msra.mxu0 0.0
        %1417 = vmatprep.subr.mxu0 0.0
        %1418 = vmatpush1.msra.mxu0 0.0
        %1419 = vmatprep.subr.mxu0 0.0
        %1420 = vmatpush1.msra.mxu0 0.0
        %1421 = vmatprep.subr.mxu0 0.0
        %1422 = vmatpush1.msra.mxu0 0.0
        %1423 = vmatprep.mubr.f32.mxu0 %v1355
        %1424 = vmatmul.mubr.f32.gmra.mrb[0].mxu0 %v1345
        %v1425 = vpop.f32.mrb[0].mxu0
        %v1426 = vadd.f32 0.0, %v1425
        %v1427 = vpop.f32.mrb[0].mxu0
        %1428 = vmatprep.mubr.f32.mxu0 %v1357
        %1429 = vmatmul.mubr.f32.gmra.mrb[0].mxu0 %v1350
        %v1430 = vpop.f32.mrb[0].mxu0
        %v1431 = vadd.f32 0.0, %v1430
        %v1432 = vpop.f32.mrb[0].mxu0
        %1433 = vdwg.mxu0
        %v1434 = vadd.f32 %v1311, %v1426
        %v1435 = vadd.f32 %v1312, %v1431
        %v1436 = vld [vmem:[#allocation3] sm:$0x80]
        %v1437 = vld [vmem:[#allocation3 + $0x8] sm:$0x80]
        %v1438 = vld [vmem:[#allocation3 + $0x20] sm:$0x1f]
        %v1439 = vld [vmem:[#allocation3 + $0x28] sm:$0x1f]
        %s1440 = scalar_lea.vmem %s6, 480
        %v1441 = vld [vmem:[%s1440] sm:$0xff]
        %v1442 = vld [vmem:[%s1440 + $0x8] sm:$0xff]
        %v1443 = vld [vmem:[%s1440 + $0x10] sm:$0xff]
        %v1444 = vld [vmem:[%s1440 + $0x18] sm:$0xff]
        %v1445 = vld [vmem:[%s1440 + $0x20] sm:$0xff]
        %v1446 = vld [vmem:[%s1440 + $0x28] sm:$0xff]
        %v1447 = vld [vmem:[%s1440 + $0x30] sm:$0xff]
        %v1448 = vld [vmem:[%s1440 + $0x38] sm:$0xff]
        %v1449 = vld [vmem:[%s1440 + $0x40] sm:$0xff]
        %v1450 = vld [vmem:[%s1440 + $0x48] sm:$0xff]
        %v1451 = vld [vmem:[%s1440 + $0x50] sm:$0xff]
        %v1452 = vld [vmem:[%s1440 + $0x58] sm:$0xff]
        %v1453 = vld [vmem:[%s1440 + $0x60] sm:$0xff]
        %v1454 = vld [vmem:[%s1440 + $0x68] sm:$0xff]
        %v1455 = vld [vmem:[%s1440 + $0x70] sm:$0xff]
        %v1456 = vld [vmem:[%s1440 + $0x78] sm:$0xff]
        %v1457 = vld [vmem:[%s1440 + $0x80] sm:$0xff]
        %v1458 = vld [vmem:[%s1440 + $0x88] sm:$0xff]
        %v1459 = vld [vmem:[%s1440 + $0x90] sm:$0xff]
        %v1460 = vld [vmem:[%s1440 + $0x98] sm:$0xff]
        %vm1465 = vcmask 1040384
        %v1466 = vrot.slane %v1436, 7
        %v1467 = vrot.slane %v1060, 7
        %v1468 = vsel %vm1465, %v1466, %v1467
        %v1469 = vrot.slane %v1437, 7
        %v1470 = vrot.slane %v1061, 7
        %v1471 = vsel %vm1465, %v1469, %v1470
        %v1472 = vrot.slane %v1438, 7
        %v1473 = vsel %vm1465, %v1467, %v1472
        %v1474 = vrot.slane %v1439, 7
        %v1475 = vsel %vm1465, %v1470, %v1474
        %v1478 = vsel %vm472, %v1471, 0
        %v1480 = vsel %vm472, %v1475, 0
        %1482 = vmatprep.subr.mxu0 0.0
        %1483 = vmatpush1.msra.mxu0 %v1441
        %1484 = vmatprep.subr.mxu0 0.0
        %1485 = vmatpush1.msra.mxu0 %v1442
        %1486 = vmatprep.subr.mxu0 0.0
        %1487 = vmatpush1.msra.mxu0 %v1443
        %1488 = vmatprep.subr.mxu0 0.0
        %1489 = vmatpush1.msra.mxu0 %v1444
        %1490 = vmatprep.subr.mxu0 0.0
        %1491 = vmatpush1.msra.mxu0 %v1445
        %1492 = vmatprep.subr.mxu0 0.0
        %1493 = vmatpush1.msra.mxu0 %v1446
        %1494 = vmatprep.subr.mxu0 0.0
        %1495 = vmatpush1.msra.mxu0 %v1447
        %1496 = vmatprep.subr.mxu0 0.0
        %1497 = vmatpush1.msra.mxu0 %v1448
        %1498 = vmatprep.subr.mxu0 0.0
        %1499 = vmatpush1.msra.mxu0 %v1449
        %1500 = vmatprep.subr.mxu0 0.0
        %1501 = vmatpush1.msra.mxu0 %v1450
        %1502 = vmatprep.subr.mxu0 0.0
        %1503 = vmatpush1.msra.mxu0 %v1451
        %1504 = vmatprep.subr.mxu0 0.0
        %1505 = vmatpush1.msra.mxu0 %v1452
        %1506 = vmatprep.subr.mxu0 0.0
        %1507 = vmatpush1.msra.mxu0 %v1453
        %1508 = vmatprep.subr.mxu0 0.0
        %1509 = vmatpush1.msra.mxu0 %v1454
        %1510 = vmatprep.subr.mxu0 0.0
        %1511 = vmatpush1.msra.mxu0 %v1455
        %1512 = vmatprep.subr.mxu0 0.0
        %1513 = vmatpush1.msra.mxu0 %v1456
        %1514 = vmatprep.subr.mxu0 0.0
        %1515 = vmatpush1.msra.mxu0 %v1457
        %1516 = vmatprep.subr.mxu0 0.0
        %1517 = vmatpush1.msra.mxu0 %v1458
        %1518 = vmatprep.subr.mxu0 0.0
        %1519 = vmatpush1.msra.mxu0 %v1459
        %1520 = vmatprep.subr.mxu0 0.0
        %1521 = vmatpush1.msra.mxu0 %v1460
        %1522 = vmatprep.subr.mxu0 0.0
        %1523 = vmatpush1.msra.mxu0 0.0
        %1524 = vmatprep.subr.mxu0 0.0
        %1525 = vmatpush1.msra.mxu0 0.0
        %1526 = vmatprep.subr.mxu0 0.0
        %1527 = vmatpush1.msra.mxu0 0.0
        %1528 = vmatprep.subr.mxu0 0.0
        %1529 = vmatpush1.msra.mxu0 0.0
        %1530 = vmatprep.subr.mxu0 0.0
        %1531 = vmatpush1.msra.mxu0 0.0
        %1532 = vmatprep.subr.mxu0 0.0
        %1533 = vmatpush1.msra.mxu0 0.0
        %1534 = vmatprep.subr.mxu0 0.0
        %1535 = vmatpush1.msra.mxu0 0.0
        %1536 = vmatprep.subr.mxu0 0.0
        %1537 = vmatpush1.msra.mxu0 0.0
        %1538 = vmatprep.subr.mxu0 0.0
        %1539 = vmatpush1.msra.mxu0 0.0
        %1540 = vmatprep.subr.mxu0 0.0
        %1541 = vmatpush1.msra.mxu0 0.0
        %1542 = vmatprep.subr.mxu0 0.0
        %1543 = vmatpush1.msra.mxu0 0.0
        %1544 = vmatprep.subr.mxu0 0.0
        %1545 = vmatpush1.msra.mxu0 0.0
        %1546 = vmatprep.mubr.f32.mxu0 %v1478
        %1547 = vmatmul.mubr.f32.gmra.mrb[0].mxu0 %v1468
        %v1548 = vpop.f32.mrb[0].mxu0
        %v1549 = vadd.f32 0.0, %v1548
        %v1550 = vpop.f32.mrb[0].mxu0
        %1551 = vmatprep.mubr.f32.mxu0 %v1480
        %1552 = vmatmul.mubr.f32.gmra.mrb[0].mxu0 %v1473
        %v1553 = vpop.f32.mrb[0].mxu0
        %v1554 = vadd.f32 0.0, %v1553
        %v1555 = vpop.f32.mrb[0].mxu0
        %1556 = vdwg.mxu0
        %v1557 = vadd.f32 %v1434, %v1549
        %v1558 = vadd.f32 %v1435, %v1554
        %v1559 = vld [vmem:[#allocation3 + $0x20] sm:$0x3f]
        %v1560 = vld [vmem:[#allocation3 + $0x28] sm:$0x3f]
        %s1561 = scalar_lea.vmem %s6, 640
        %v1562 = vld [vmem:[%s1561] sm:$0xff]
        %v1563 = vld [vmem:[%s1561 + $0x8] sm:$0xff]
        %v1564 = vld [vmem:[%s1561 + $0x10] sm:$0xff]
        %v1565 = vld [vmem:[%s1561 + $0x18] sm:$0xff]
        %v1566 = vld [vmem:[%s1561 + $0x20] sm:$0xff]
        %v1567 = vld [vmem:[%s1561 + $0x28] sm:$0xff]
        %v1568 = vld [vmem:[%s1561 + $0x30] sm:$0xff]
        %v1569 = vld [vmem:[%s1561 + $0x38] sm:$0xff]
        %v1570 = vld [vmem:[%s1561 + $0x40] sm:$0xff]
        %v1571 = vld [vmem:[%s1561 + $0x48] sm:$0xff]
        %v1572 = vld [vmem:[%s1561 + $0x50] sm:$0xff]
        %v1573 = vld [vmem:[%s1561 + $0x58] sm:$0xff]
        %v1574 = vld [vmem:[%s1561 + $0x60] sm:$0xff]
        %v1575 = vld [vmem:[%s1561 + $0x68] sm:$0xff]
        %v1576 = vld [vmem:[%s1561 + $0x70] sm:$0xff]
        %v1577 = vld [vmem:[%s1561 + $0x78] sm:$0xff]
        %v1578 = vld [vmem:[%s1561 + $0x80] sm:$0xff]
        %v1579 = vld [vmem:[%s1561 + $0x88] sm:$0xff]
        %v1580 = vld [vmem:[%s1561 + $0x90] sm:$0xff]
        %v1581 = vld [vmem:[%s1561 + $0x98] sm:$0xff]
        %v1582 = vsel %vm472, %v1061, 0
        %v1585 = vsel %vm472, %v1560, 0
        %1587 = vmatprep.subr.mxu0 0.0
        %1588 = vmatpush1.msra.mxu0 %v1562
        %1589 = vmatprep.subr.mxu0 0.0
        %1590 = vmatpush1.msra.mxu0 %v1563
        %1591 = vmatprep.subr.mxu0 0.0
        %1592 = vmatpush1.msra.mxu0 %v1564
        %1593 = vmatprep.subr.mxu0 0.0
        %1594 = vmatpush1.msra.mxu0 %v1565
        %1595 = vmatprep.subr.mxu0 0.0
        %1596 = vmatpush1.msra.mxu0 %v1566
        %1597 = vmatprep.subr.mxu0 0.0
        %1598 = vmatpush1.msra.mxu0 %v1567
        %1599 = vmatprep.subr.mxu0 0.0
        %1600 = vmatpush1.msra.mxu0 %v1568
        %1601 = vmatprep.subr.mxu0 0.0
        %1602 = vmatpush1.msra.mxu0 %v1569
        %1603 = vmatprep.subr.mxu0 0.0
        %1604 = vmatpush1.msra.mxu0 %v1570
        %1605 = vmatprep.subr.mxu0 0.0
        %1606 = vmatpush1.msra.mxu0 %v1571
        %1607 = vmatprep.subr.mxu0 0.0
        %1608 = vmatpush1.msra.mxu0 %v1572
        %1609 = vmatprep.subr.mxu0 0.0
        %1610 = vmatpush1.msra.mxu0 %v1573
        %1611 = vmatprep.subr.mxu0 0.0
        %1612 = vmatpush1.msra.mxu0 %v1574
        %1613 = vmatprep.subr.mxu0 0.0
        %1614 = vmatpush1.msra.mxu0 %v1575
        %1615 = vmatprep.subr.mxu0 0.0
        %1616 = vmatpush1.msra.mxu0 %v1576
        %1617 = vmatprep.subr.mxu0 0.0
        %1618 = vmatpush1.msra.mxu0 %v1577
        %1619 = vmatprep.subr.mxu0 0.0
        %1620 = vmatpush1.msra.mxu0 %v1578
        %1621 = vmatprep.subr.mxu0 0.0
        %1622 = vmatpush1.msra.mxu0 %v1579
        %1623 = vmatprep.subr.mxu0 0.0
        %1624 = vmatpush1.msra.mxu0 %v1580
        %1625 = vmatprep.subr.mxu0 0.0
        %1626 = vmatpush1.msra.mxu0 %v1581
        %1627 = vmatprep.subr.mxu0 0.0
        %1628 = vmatpush1.msra.mxu0 0.0
        %1629 = vmatprep.subr.mxu0 0.0
        %1630 = vmatpush1.msra.mxu0 0.0
        %1631 = vmatprep.subr.mxu0 0.0
        %1632 = vmatpush1.msra.mxu0 0.0
        %1633 = vmatprep.subr.mxu0 0.0
        %1634 = vmatpush1.msra.mxu0 0.0
        %1635 = vmatprep.subr.mxu0 0.0
        %1636 = vmatpush1.msra.mxu0 0.0
        %1637 = vmatprep.subr.mxu0 0.0
        %1638 = vmatpush1.msra.mxu0 0.0
        %1639 = vmatprep.subr.mxu0 0.0
        %1640 = vmatpush1.msra.mxu0 0.0
        %1641 = vmatprep.subr.mxu0 0.0
        %1642 = vmatpush1.msra.mxu0 0.0
        %1643 = vmatprep.subr.mxu0 0.0
        %1644 = vmatpush1.msra.mxu0 0.0
        %1645 = vmatprep.subr.mxu0 0.0
        %1646 = vmatpush1.msra.mxu0 0.0
        %1647 = vmatprep.subr.mxu0 0.0
        %1648 = vmatpush1.msra.mxu0 0.0
        %1649 = vmatprep.subr.mxu0 0.0
        %1650 = vmatpush1.msra.mxu0 0.0
        %1651 = vmatprep.mubr.f32.mxu0 %v1582
        %1652 = vmatmul.mubr.f32.gmra.mrb[0].mxu0 %v1060
        %v1653 = vpop.f32.mrb[0].mxu0
        %v1654 = vadd.f32 0.0, %v1653
        %v1655 = vpop.f32.mrb[0].mxu0
        %1656 = vmatprep.mubr.f32.mxu0 %v1585
        %1657 = vmatmul.mubr.f32.gmra.mrb[0].mxu0 %v1559
        %v1658 = vpop.f32.mrb[0].mxu0
        %v1659 = vadd.f32 0.0, %v1658
        %v1660 = vpop.f32.mrb[0].mxu0
        %1661 = vdwg.mxu0
        %v1662 = vadd.f32 %v1557, %v1654
        %v1663 = vadd.f32 %v1558, %v1659
        %v1664 = vld [vmem:[%s8] sm:$0xff]
        %v1665 = vld [vmem:[%s8 + $0x8] sm:$0xff]
        %v1666 = vld [vmem:[%s8 + $0x10] sm:$0xff]
        %v1667 = vld [vmem:[%s8 + $0x18] sm:$0xff]
        %v1668 = vld [vmem:[%s8 + $0x20] sm:$0xff]
        %v1669 = vld [vmem:[%s8 + $0x28] sm:$0xff]
        %v1670 = vld [vmem:[%s8 + $0x30] sm:$0xff]
        %v1671 = vld [vmem:[%s8 + $0x38] sm:$0xff]
        %v1672 = vld [vmem:[%s8 + $0x40] sm:$0xff]
        %v1673 = vld [vmem:[%s8 + $0x48] sm:$0xff]
        %v1674 = vld [vmem:[%s8 + $0x50] sm:$0xff]
        %v1675 = vld [vmem:[%s8 + $0x58] sm:$0xff]
        %v1676 = vld [vmem:[%s8 + $0x60] sm:$0xff]
        %v1677 = vld [vmem:[%s8 + $0x68] sm:$0xff]
        %v1678 = vld [vmem:[%s8 + $0x70] sm:$0xff]
        %v1679 = vld [vmem:[%s8 + $0x78] sm:$0xff]
        %v1680 = vld [vmem:[%s8 + $0x80] sm:$0xff]
        %v1681 = vld [vmem:[%s8 + $0x88] sm:$0xff]
        %v1682 = vld [vmem:[%s8 + $0x90] sm:$0xff]
        %v1683 = vld [vmem:[%s8 + $0x98] sm:$0xff]
        %v1684 = vld [vmem:[%s8 + $0xa0] sm:$0xf]
        %v1685 = vld [vmem:[%s8 + $0xa8] sm:$0xf]
        %vm1686 = vcmask 687104
        %v1688 = vsel %vm1686, %v1662, 0
        %v1691 = vsel %vm1686, %v1663, 0
        %v1694 = vsel %vm1090, %v1684, 0
        %v1697 = vsel %vm1090, %v1685, 0
        %1699 = vmatprep.subr.mxu0 %v1665
        %1700 = vmatpush1.msra.mxu0 %v1664
        %1701 = vmatprep.subr.mxu0 %v1667
        %1702 = vmatpush1.msra.mxu0 %v1666
        %1703 = vmatprep.subr.mxu0 %v1669
        %1704 = vmatpush1.msra.mxu0 %v1668
        %1705 = vmatprep.subr.mxu0 %v1671
        %1706 = vmatpush1.msra.mxu0 %v1670
        %1707 = vmatprep.subr.mxu0 %v1673
        %1708 = vmatpush1.msra.mxu0 %v1672
        %1709 = vmatprep.subr.mxu0 %v1675
        %1710 = vmatpush1.msra.mxu0 %v1674
        %1711 = vmatprep.subr.mxu0 %v1677
        %1712 = vmatpush1.msra.mxu0 %v1676
        %1713 = vmatprep.subr.mxu0 %v1679
        %1714 = vmatpush1.msra.mxu0 %v1678
        %1715 = vmatprep.subr.mxu0 %v1681
        %1716 = vmatpush1.msra.mxu0 %v1680
        %1717 = vmatprep.subr.mxu0 %v1683
        %1718 = vmatpush1.msra.mxu0 %v1682
        %1719 = vmatprep.subr.mxu0 %v1697
        %1720 = vmatpush1.msra.mxu0 %v1694
        %1721 = vmatprep.subr.mxu0 0.0
        %1722 = vmatpush1.msra.mxu0 0.0
        %1723 = vmatprep.subr.mxu0 0.0
        %1724 = vmatpush1.msra.mxu0 0.0
        %1725 = vmatprep.subr.mxu0 0.0
        %1726 = vmatpush1.msra.mxu0 0.0
        %1727 = vmatprep.subr.mxu0 0.0
        %1728 = vmatpush1.msra.mxu0 0.0
        %1729 = vmatprep.subr.mxu0 0.0
        %1730 = vmatpush1.msra.mxu0 0.0
        %1731 = vmatprep.subr.mxu0 0.0
        %1732 = vmatpush1.msra.mxu0 0.0
        %1733 = vmatprep.subr.mxu0 0.0
        %1734 = vmatpush1.msra.mxu0 0.0
        %1735 = vmatprep.subr.mxu0 0.0
        %1736 = vmatpush1.msra.mxu0 0.0
        %1737 = vmatprep.subr.mxu0 0.0
        %1738 = vmatpush1.msra.mxu0 0.0
        %1739 = vmatprep.subr.mxu0 0.0
        %1740 = vmatpush1.msra.mxu0 0.0
        %1741 = vmatprep.subr.mxu0 0.0
        %1742 = vmatpush1.msra.mxu0 0.0
        %1743 = vmatprep.subr.mxu0 0.0
        %1744 = vmatpush1.msra.mxu0 0.0
        %1745 = vmatprep.subr.mxu0 0.0
        %1746 = vmatpush1.msra.mxu0 0.0
        %1747 = vmatprep.subr.mxu0 0.0
        %1748 = vmatpush1.msra.mxu0 0.0
        %1749 = vmatprep.subr.mxu0 0.0
        %1750 = vmatpush1.msra.mxu0 0.0
        %1751 = vmatprep.subr.mxu0 0.0
        %1752 = vmatpush1.msra.mxu0 0.0
        %1753 = vmatprep.subr.mxu0 0.0
        %1754 = vmatpush1.msra.mxu0 0.0
        %1755 = vmatprep.subr.mxu0 0.0
        %1756 = vmatpush1.msra.mxu0 0.0
        %1757 = vmatprep.subr.mxu0 0.0
        %1758 = vmatpush1.msra.mxu0 0.0
        %1759 = vmatprep.subr.mxu0 0.0
        %1760 = vmatpush1.msra.mxu0 0.0
        %1761 = vmatprep.subr.mxu0 0.0
        %1762 = vmatpush1.msra.mxu0 0.0
        %1763 = vmatprep.mubr.f32.mxu0 0.0
        %1764 = vmatmul.mubr.f32.gmra.mrb[0].mxu0 %v1688
        %v1765 = vpop.f32.mrb[0].mxu0
        %v1766 = vadd.f32 0.0, %v1765
        %v1767 = vpop.f32.mrb[0].mxu0
        %v1768 = vadd.f32 0.0, %v1767
        %1769 = vmatprep.mubr.f32.mxu0 0.0
        %1770 = vmatmul.mubr.f32.gmra.mrb[0].mxu0 %v1691
        %v1771 = vpop.f32.mrb[0].mxu0
        %v1772 = vadd.f32 0.0, %v1771
        %v1773 = vpop.f32.mrb[0].mxu0
        %v1774 = vadd.f32 0.0, %v1773
        %1775 = vdwg.mxu0
        %s1776 = scalar_lea.vmem %s8, 176
        %v1777 = vld [vmem:[%s1776] sm:$0xff]
        %v1778 = vld [vmem:[%s1776 + $0x8] sm:$0xff]
        %v1779 = vld [vmem:[%s1776 + $0x10] sm:$0xff]
        %v1780 = vld [vmem:[%s1776 + $0x18] sm:$0xff]
        %v1781 = vld [vmem:[%s1776 + $0x20] sm:$0xff]
        %v1782 = vld [vmem:[%s1776 + $0x28] sm:$0xff]
        %v1783 = vld [vmem:[%s1776 + $0x30] sm:$0xff]
        %v1784 = vld [vmem:[%s1776 + $0x38] sm:$0xff]
        %v1785 = vld [vmem:[%s1776 + $0x40] sm:$0xff]
        %v1786 = vld [vmem:[%s1776 + $0x48] sm:$0xff]
        %v1787 = vld [vmem:[%s1776 + $0x50] sm:$0xff]
        %v1788 = vld [vmem:[%s1776 + $0x58] sm:$0xff]
        %v1789 = vld [vmem:[%s1776 + $0x60] sm:$0xff]
        %v1790 = vld [vmem:[%s1776 + $0x68] sm:$0xff]
        %v1791 = vld [vmem:[%s1776 + $0x70] sm:$0xff]
        %v1792 = vld [vmem:[%s1776 + $0x78] sm:$0xff]
        %v1793 = vld [vmem:[%s1776 + $0x80] sm:$0xff]
        %v1794 = vld [vmem:[%s1776 + $0x88] sm:$0xff]
        %v1795 = vld [vmem:[%s1776 + $0x90] sm:$0xff]
        %v1796 = vld [vmem:[%s1776 + $0x98] sm:$0xff]
        %v1797 = vld [vmem:[%s1776 + $0xa0] sm:$0xf]
        %v1798 = vld [vmem:[%s1776 + $0xa8] sm:$0xf]
        %v1800 = vsel %vm1090, %v1797, 0
        %v1803 = vsel %vm1090, %v1798, 0
        %1805 = vmatprep.subr.mxu0 %v1778
        %1806 = vmatpush1.msra.mxu0 %v1777
        %1807 = vmatprep.subr.mxu0 %v1780
        %1808 = vmatpush1.msra.mxu0 %v1779
        %1809 = vmatprep.subr.mxu0 %v1782
        %1810 = vmatpush1.msra.mxu0 %v1781
        %1811 = vmatprep.subr.mxu0 %v1784
        %1812 = vmatpush1.msra.mxu0 %v1783
        %1813 = vmatprep.subr.mxu0 %v1786
        %1814 = vmatpush1.msra.mxu0 %v1785
        %1815 = vmatprep.subr.mxu0 %v1788
        %1816 = vmatpush1.msra.mxu0 %v1787
        %1817 = vmatprep.subr.mxu0 %v1790
        %1818 = vmatpush1.msra.mxu0 %v1789
        %1819 = vmatprep.subr.mxu0 %v1792
        %1820 = vmatpush1.msra.mxu0 %v1791
        %1821 = vmatprep.subr.mxu0 %v1794
        %1822 = vmatpush1.msra.mxu0 %v1793
        %1823 = vmatprep.subr.mxu0 %v1796
        %1824 = vmatpush1.msra.mxu0 %v1795
        %1825 = vmatprep.subr.mxu0 %v1803
        %1826 = vmatpush1.msra.mxu0 %v1800
        %1827 = vmatprep.subr.mxu0 0.0
        %1828 = vmatpush1.msra.mxu0 0.0
        %1829 = vmatprep.subr.mxu0 0.0
        %1830 = vmatpush1.msra.mxu0 0.0
        %1831 = vmatprep.subr.mxu0 0.0
        %1832 = vmatpush1.msra.mxu0 0.0
        %1833 = vmatprep.subr.mxu0 0.0
        %1834 = vmatpush1.msra.mxu0 0.0
        %1835 = vmatprep.subr.mxu0 0.0
        %1836 = vmatpush1.msra.mxu0 0.0
        %1837 = vmatprep.subr.mxu0 0.0
        %1838 = vmatpush1.msra.mxu0 0.0
        %1839 = vmatprep.subr.mxu0 0.0
        %1840 = vmatpush1.msra.mxu0 0.0
        %1841 = vmatprep.subr.mxu0 0.0
        %1842 = vmatpush1.msra.mxu0 0.0
        %1843 = vmatprep.subr.mxu0 0.0
        %1844 = vmatpush1.msra.mxu0 0.0
        %1845 = vmatprep.subr.mxu0 0.0
        %1846 = vmatpush1.msra.mxu0 0.0
        %1847 = vmatprep.subr.mxu0 0.0
        %1848 = vmatpush1.msra.mxu0 0.0
        %1849 = vmatprep.subr.mxu0 0.0
        %1850 = vmatpush1.msra.mxu0 0.0
        %1851 = vmatprep.subr.mxu0 0.0
        %1852 = vmatpush1.msra.mxu0 0.0
        %1853 = vmatprep.subr.mxu0 0.0
        %1854 = vmatpush1.msra.mxu0 0.0
        %1855 = vmatprep.subr.mxu0 0.0
        %1856 = vmatpush1.msra.mxu0 0.0
        %1857 = vmatprep.subr.mxu0 0.0
        %1858 = vmatpush1.msra.mxu0 0.0
        %1859 = vmatprep.subr.mxu0 0.0
        %1860 = vmatpush1.msra.mxu0 0.0
        %1861 = vmatprep.subr.mxu0 0.0
        %1862 = vmatpush1.msra.mxu0 0.0
        %1863 = vmatprep.subr.mxu0 0.0
        %1864 = vmatpush1.msra.mxu0 0.0
        %1865 = vmatprep.subr.mxu0 0.0
        %1866 = vmatpush1.msra.mxu0 0.0
        %1867 = vmatprep.subr.mxu0 0.0
        %1868 = vmatpush1.msra.mxu0 0.0
        %1869 = vmatprep.mubr.f32.mxu0 0.0
        %1870 = vmatmul.mubr.f32.gmra.mrb[0].mxu0 %v1688
        %v1871 = vpop.f32.mrb[0].mxu0
        %v1872 = vadd.f32 0.0, %v1871
        %v1873 = vpop.f32.mrb[0].mxu0
        %v1874 = vadd.f32 0.0, %v1873
        %1875 = vmatprep.mubr.f32.mxu0 0.0
        %1876 = vmatmul.mubr.f32.gmra.mrb[0].mxu0 %v1691
        %v1877 = vpop.f32.mrb[0].mxu0
        %v1878 = vadd.f32 0.0, %v1877
        %v1879 = vpop.f32.mrb[0].mxu0
        %v1880 = vadd.f32 0.0, %v1879
        %1881 = vdwg.mxu0
        %v1882 = vld [vmem:[%s10] sm:$0xff]
        %v1883 = vld [vmem:[%s10 + $0x8] sm:$0xff]
        %v1884 = vld [vmem:[%s10 + $0x10] sm:$0xff]
        %v1885 = vld [vmem:[%s10 + $0x18] sm:$0xf]
        %s1886 = scalar_lea.vmem %s10, 32
        %v1887 = vld [vmem:[%s1886] sm:$0xff]
        %v1888 = vld [vmem:[%s1886 + $0x8] sm:$0xff]
        %v1889 = vld [vmem:[%s1886 + $0x10] sm:$0xff]
        %v1890 = vld [vmem:[%s1886 + $0x18] sm:$0xf]
        %vm1891 = vcmask 113664
        %v1893 = vsel %vm1891, %v1887, 0
        %v1896 = vsel %vm1891, %v1888, 0
        %v1899 = vsel %vm1891, %v1889, 0
        %v1902 = vsel %vm1891, %v1890, 0
        %vm1904 = vcmask 1045504
        %v1906 = vsel %vm1904, %v1878, 0
        %v1909 = vsel %vm1904, %v1880, 0
        %1911 = vmatprep.subr.mxu0 %v1874
        %1912 = vmatpush1.msra.mxu0 %v1872
        %1913 = vmatprep.subr.mxu0 %v1909
        %1914 = vmatpush1.msra.mxu0 %v1906
        %1915 = vmatprep.subr.mxu0 0.0
        %1916 = vmatpush1.msra.mxu0 0.0
        %1917 = vmatprep.subr.mxu0 0.0
        %1918 = vmatpush1.msra.mxu0 0.0
        %1919 = vmatprep.subr.mxu0 0.0
        %1920 = vmatpush1.msra.mxu0 0.0
        %1921 = vmatprep.subr.mxu0 0.0
        %1922 = vmatpush1.msra.mxu0 0.0
        %1923 = vmatprep.subr.mxu0 0.0
        %1924 = vmatpush1.msra.mxu0 0.0
        %1925 = vmatprep.subr.mxu0 0.0
        %1926 = vmatpush1.msra.mxu0 0.0
        %1927 = vmatprep.subr.mxu0 0.0
        %1928 = vmatpush1.msra.mxu0 0.0
        %1929 = vmatprep.subr.mxu0 0.0
        %1930 = vmatpush1.msra.mxu0 0.0
        %1931 = vmatprep.subr.mxu0 0.0
        %1932 = vmatpush1.msra.mxu0 0.0
        %1933 = vmatprep.subr.mxu0 0.0
        %1934 = vmatpush1.msra.mxu0 0.0
        %1935 = vmatprep.subr.mxu0 0.0
        %1936 = vmatpush1.msra.mxu0 0.0
        %1937 = vmatprep.subr.mxu0 0.0
        %1938 = vmatpush1.msra.mxu0 0.0
        %1939 = vmatprep.subr.mxu0 0.0
        %1940 = vmatpush1.msra.mxu0 0.0
        %1941 = vmatprep.subr.mxu0 0.0
        %1942 = vmatpush1.msra.mxu0 0.0
        %1943 = vmatprep.subr.mxu0 0.0
        %1944 = vmatpush1.msra.mxu0 0.0
        %1945 = vmatprep.subr.mxu0 0.0
        %1946 = vmatpush1.msra.mxu0 0.0
        %1947 = vmatprep.subr.mxu0 0.0
        %1948 = vmatpush1.msra.mxu0 0.0
        %1949 = vmatprep.subr.mxu0 0.0
        %1950 = vmatpush1.msra.mxu0 0.0
        %1951 = vmatprep.subr.mxu0 0.0
        %1952 = vmatpush1.msra.mxu0 0.0
        %1953 = vmatprep.subr.mxu0 0.0
        %1954 = vmatpush1.msra.mxu0 0.0
        %1955 = vmatprep.subr.mxu0 0.0
        %1956 = vmatpush1.msra.mxu0 0.0
        %1957 = vmatprep.subr.mxu0 0.0
        %1958 = vmatpush1.msra.mxu0 0.0
        %1959 = vmatprep.subr.mxu0 0.0
        %1960 = vmatpush1.msra.mxu0 0.0
        %1961 = vmatprep.subr.mxu0 0.0
        %1962 = vmatpush1.msra.mxu0 0.0
        %1963 = vmatprep.subr.mxu0 0.0
        %1964 = vmatpush1.msra.mxu0 0.0
        %1965 = vmatprep.subr.mxu0 0.0
        %1966 = vmatpush1.msra.mxu0 0.0
        %1967 = vmatprep.subr.mxu0 0.0
        %1968 = vmatpush1.msra.mxu0 0.0
        %1969 = vmatprep.subr.mxu0 0.0
        %1970 = vmatpush1.msra.mxu0 0.0
        %1971 = vmatprep.subr.mxu0 0.0
        %1972 = vmatpush1.msra.mxu0 0.0
        %1973 = vmatprep.subr.mxu0 0.0
        %1974 = vmatpush1.msra.mxu0 0.0
        %1975 = vmatprep.mubr.f32.mxu0 0.0
        %1976 = vmatmul.mubr.f32.gmra.mrb[0].mxu0 %v1893
        %v1977 = vpop.f32.mrb[0].mxu0
        %v1978 = vadd.f32 0.0, %v1977
        %v1979 = vpop.f32.mrb[0].mxu0
        %v1980 = vadd.f32 0.0, %v1979
        %1981 = vmatprep.mubr.f32.mxu0 0.0
        %1982 = vmatmul.mubr.f32.gmra.mrb[0].mxu0 %v1896
        %v1983 = vpop.f32.mrb[0].mxu0
        %v1984 = vadd.f32 0.0, %v1983
        %v1985 = vpop.f32.mrb[0].mxu0
        %v1986 = vadd.f32 0.0, %v1985
        %1987 = vmatprep.mubr.f32.mxu0 0.0
        %1988 = vmatmul.mubr.f32.gmra.mrb[0].mxu0 %v1899
        %v1989 = vpop.f32.mrb[0].mxu0
        %v1990 = vadd.f32 0.0, %v1989
        %v1991 = vpop.f32.mrb[0].mxu0
        %v1992 = vadd.f32 0.0, %v1991
        %1993 = vmatprep.mubr.f32.mxu0 0.0
        %1994 = vmatmul.mubr.f32.gmra.mrb[0].mxu0 %v1902
        %v1995 = vpop.f32.mrb[0].mxu0
        %v1996 = vadd.f32 0.0, %v1995
        %v1997 = vpop.f32.mrb[0].mxu0
        %v1998 = vadd.f32 0.0, %v1997
        %1999 = vdwg.mxu0
        %v2001 = vsel %vm1891, %v1882, 0
        %v2004 = vsel %vm1891, %v1883, 0
        %v2007 = vsel %vm1891, %v1884, 0
        %v2010 = vsel %vm1891, %v1885, 0
        %v2013 = vsel %vm1904, %v1772, 0
        %v2016 = vsel %vm1904, %v1774, 0
        %2018 = vmatprep.subr.mxu0 %v1768
        %2019 = vmatpush1.msra.mxu0 %v1766
        %2020 = vmatprep.subr.mxu0 %v2016
        %2021 = vmatpush1.msra.mxu0 %v2013
        %2022 = vmatprep.subr.mxu0 0.0
        %2023 = vmatpush1.msra.mxu0 0.0
        %2024 = vmatprep.subr.mxu0 0.0
        %2025 = vmatpush1.msra.mxu0 0.0
        %2026 = vmatprep.subr.mxu0 0.0
        %2027 = vmatpush1.msra.mxu0 0.0
        %2028 = vmatprep.subr.mxu0 0.0
        %2029 = vmatpush1.msra.mxu0 0.0
        %2030 = vmatprep.subr.mxu0 0.0
        %2031 = vmatpush1.msra.mxu0 0.0
        %2032 = vmatprep.subr.mxu0 0.0
        %2033 = vmatpush1.msra.mxu0 0.0
        %2034 = vmatprep.subr.mxu0 0.0
        %2035 = vmatpush1.msra.mxu0 0.0
        %2036 = vmatprep.subr.mxu0 0.0
        %2037 = vmatpush1.msra.mxu0 0.0
        %2038 = vmatprep.subr.mxu0 0.0
        %2039 = vmatpush1.msra.mxu0 0.0
        %2040 = vmatprep.subr.mxu0 0.0
        %2041 = vmatpush1.msra.mxu0 0.0
        %2042 = vmatprep.subr.mxu0 0.0
        %2043 = vmatpush1.msra.mxu0 0.0
        %2044 = vmatprep.subr.mxu0 0.0
        %2045 = vmatpush1.msra.mxu0 0.0
        %2046 = vmatprep.subr.mxu0 0.0
        %2047 = vmatpush1.msra.mxu0 0.0
        %2048 = vmatprep.subr.mxu0 0.0
        %2049 = vmatpush1.msra.mxu0 0.0
        %2050 = vmatprep.subr.mxu0 0.0
        %2051 = vmatpush1.msra.mxu0 0.0
        %2052 = vmatprep.subr.mxu0 0.0
        %2053 = vmatpush1.msra.mxu0 0.0
        %2054 = vmatprep.subr.mxu0 0.0
        %2055 = vmatpush1.msra.mxu0 0.0
        %2056 = vmatprep.subr.mxu0 0.0
        %2057 = vmatpush1.msra.mxu0 0.0
        %2058 = vmatprep.subr.mxu0 0.0
        %2059 = vmatpush1.msra.mxu0 0.0
        %2060 = vmatprep.subr.mxu0 0.0
        %2061 = vmatpush1.msra.mxu0 0.0
        %2062 = vmatprep.subr.mxu0 0.0
        %2063 = vmatpush1.msra.mxu0 0.0
        %2064 = vmatprep.subr.mxu0 0.0
        %2065 = vmatpush1.msra.mxu0 0.0
        %2066 = vmatprep.subr.mxu0 0.0
        %2067 = vmatpush1.msra.mxu0 0.0
        %2068 = vmatprep.subr.mxu0 0.0
        %2069 = vmatpush1.msra.mxu0 0.0
        %2070 = vmatprep.subr.mxu0 0.0
        %2071 = vmatpush1.msra.mxu0 0.0
        %2072 = vmatprep.subr.mxu0 0.0
        %2073 = vmatpush1.msra.mxu0 0.0
        %2074 = vmatprep.subr.mxu0 0.0
        %2075 = vmatpush1.msra.mxu0 0.0
        %2076 = vmatprep.subr.mxu0 0.0
        %2077 = vmatpush1.msra.mxu0 0.0
        %2078 = vmatprep.subr.mxu0 0.0
        %2079 = vmatpush1.msra.mxu0 0.0
        %2080 = vmatprep.subr.mxu0 0.0
        %2081 = vmatpush1.msra.mxu0 0.0
        %2082 = vmatprep.mubr.f32.mxu0 0.0
        %2083 = vmatmul.mubr.f32.gmra.mrb[0].mxu0 %v2001
        %v2084 = vpop.f32.mrb[0].mxu0
        %v2085 = vadd.f32 %v1978, %v2084
        %v2086 = vpop.f32.mrb[0].mxu0
        %v2087 = vadd.f32 %v1980, %v2086
        %2088 = vmatprep.mubr.f32.mxu0 0.0
        %2089 = vmatmul.mubr.f32.gmra.mrb[0].mxu0 %v2004
        %v2090 = vpop.f32.mrb[0].mxu0
        %v2091 = vadd.f32 %v1984, %v2090
        %v2092 = vpop.f32.mrb[0].mxu0
        %v2093 = vadd.f32 %v1986, %v2092
        %2094 = vmatprep.mubr.f32.mxu0 0.0
        %2095 = vmatmul.mubr.f32.gmra.mrb[0].mxu0 %v2007
        %v2096 = vpop.f32.mrb[0].mxu0
        %v2097 = vadd.f32 %v1990, %v2096
        %v2098 = vpop.f32.mrb[0].mxu0
        %v2099 = vadd.f32 %v1992, %v2098
        %2100 = vmatprep.mubr.f32.mxu0 0.0
        %2101 = vmatmul.mubr.f32.gmra.mrb[0].mxu0 %v2010
        %v2102 = vpop.f32.mrb[0].mxu0
        %v2103 = vadd.f32 %v1996, %v2102
        %v2104 = vpop.f32.mrb[0].mxu0
        %v2105 = vadd.f32 %v1998, %v2104
        %2106 = vdwg.mxu0
        %v2107 = vld [vmem:[%s9] sm:$0x3]
        %v2109 = vlaneseq
        %v2110 = vshrl.u32 %v2109, 7
        %v2111 = vsub.s32 0, %v2110
        %v2112 = vrot.slane %v2107, %v2111
        %v2113 = vlaneseq
        %v2114 = vshrl.u32 %v2113, 7
        %v2115 = vsub.s32 1, %v2114
        %v2116 = vrot.slane %v2107, %v2115
        %v2119 = vadd.f32 %v2085, %v2112
        %v2120 = vadd.f32 %v2087, %v2116
        %v2121 = vadd.f32 %v2091, %v2112
        %v2122 = vadd.f32 %v2093, %v2116
        %v2123 = vadd.f32 %v2097, %v2112
        %v2124 = vadd.f32 %v2099, %v2116
        %v2125 = vadd.f32 %v2103, %v2112
        %v2126 = vadd.f32 %v2105, %v2116
        %2127 = vst [vmem:[#allocation4] sm:$0xff] 0.0
        %vm2128 = vcmask 326656
        %2129 = vst.msk [vmem:[#allocation4 + $0x8] sm:$0xff] %vm2128, 0.0
        %2130 = vst [vmem:[#allocation4 + $0x10] sm:$0xff] 0.0
        %2131 = vst.msk [vmem:[#allocation4 + $0x18] sm:$0xff] %vm2128, 0.0
        %2132 = vst [vmem:[#allocation4 + $0x20] sm:$0xff] 0.0
        %2133 = vst.msk [vmem:[#allocation4 + $0x28] sm:$0xff] %vm2128, 0.0
        %2134 = vst [vmem:[#allocation4 + $0x30] sm:$0xff] 0.0
        %2135 = vst.msk [vmem:[#allocation4 + $0x38] sm:$0xff] %vm2128, 0.0
        %2136 = vst [vmem:[#allocation4 + $0x40] sm:$0xff] 0.0
        %2137 = vst.msk [vmem:[#allocation4 + $0x48] sm:$0xff] %vm2128, 0.0
        %v2138 = vtanh.pop %v2119
        %v2139 = vtanh.pop %v2120
        %v2140 = vtanh.pop %v2121
        %v2141 = vtanh.pop %v2122
        %v2142 = vtanh.pop %v2123
        %v2143 = vtanh.pop %v2124
        %v2144 = vtanh.pop %v2125
        %v2145 = vtanh.pop %v2126
        %2146 = vst [vmem:[#allocation4 + $0x10] sm:$0xff] %v2138
        %2147 = vst.msk [vmem:[#allocation4 + $0x18] sm:$0xff] %vm2128, %v2139
        %2148 = vst [vmem:[#allocation4 + $0x20] sm:$0xff] %v2140
        %2149 = vst.msk [vmem:[#allocation4 + $0x28] sm:$0xff] %vm2128, %v2141
        %2150 = vst [vmem:[#allocation4 + $0x30] sm:$0xff] %v2142
        %2151 = vst.msk [vmem:[#allocation4 + $0x38] sm:$0xff] %vm2128, %v2143
        %2152 = vst [vmem:[#allocation4 + $0x40] sm:$0xf] %v2144
        %vm2153 = vcmask 322560
        %2154 = vst.msk [vmem:[#allocation4 + $0x48] sm:$0xf] %vm2153, %v2145
        %v2155 = vld [vmem:[%s12] sm:$0x1]
        %v2156 = vld [vmem:[#allocation4] sm:$0xf0]
        %v2157 = vld [vmem:[#allocation4 + $0x8] sm:$0xf0]
        %v2158 = vld [vmem:[#allocation4 + $0x10] sm:$0xff]
        %v2159 = vld [vmem:[#allocation4 + $0x18] sm:$0xff]
        %v2160 = vld [vmem:[#allocation4 + $0x20] sm:$0xff]
        %v2161 = vld [vmem:[#allocation4 + $0x28] sm:$0xff]
        %v2162 = vld [vmem:[#allocation4 + $0x30] sm:$0xff]
        %v2163 = vld [vmem:[#allocation4 + $0x38] sm:$0xff]
        %v2164 = vld [vmem:[#allocation4 + $0x40] sm:$0xf]
        %v2165 = vld [vmem:[#allocation4 + $0x48] sm:$0xf]
        %v2166 = vld [vmem:[%s11] sm:$0xff]
        %v2167 = vld [vmem:[%s11 + $0x8] sm:$0xff]
        %v2168 = vld [vmem:[%s11 + $0x10] sm:$0xff]
        %v2169 = vld [vmem:[%s11 + $0x18] sm:$0xff]
        %v2170 = vld [vmem:[%s11 + $0x20] sm:$0xff]
        %v2171 = vld [vmem:[%s11 + $0x28] sm:$0xff]
        %v2172 = vld [vmem:[%s11 + $0x30] sm:$0xff]
        %v2173 = vld [vmem:[%s11 + $0x38] sm:$0xff]
        %v2174 = vld [vmem:[%s11 + $0x40] sm:$0xff]
        %v2175 = vld [vmem:[%s11 + $0x48] sm:$0xff]
        %v2176 = vld [vmem:[%s11 + $0x50] sm:$0xff]
        %v2177 = vld [vmem:[%s11 + $0x58] sm:$0xff]
        %v2178 = vld [vmem:[%s11 + $0x60] sm:$0xff]
        %v2179 = vld [vmem:[%s11 + $0x68] sm:$0xff]
        %v2180 = vld [vmem:[%s11 + $0x70] sm:$0xff]
        %v2181 = vld [vmem:[%s11 + $0x78] sm:$0xff]
        %v2182 = vld [vmem:[%s11 + $0x80] sm:$0xff]
        %v2183 = vld [vmem:[%s11 + $0x88] sm:$0xff]
        %v2184 = vld [vmem:[%s11 + $0x90] sm:$0xff]
        %v2185 = vld [vmem:[%s11 + $0x98] sm:$0xff]
        %v2186 = vld [vmem:[%s11 + $0xa0] sm:$0xff]
        %v2197 = vrot.slane %v2156, 4
        %v2198 = vrot.slane %v2158, 4
        %v2199 = vsel %vm1090, %v2197, %v2198
        %v2200 = vrot.slane %v2157, 4
        %v2201 = vrot.slane %v2159, 4
        %v2202 = vsel %vm1090, %v2200, %v2201
        %v2203 = vrot.slane %v2160, 4
        %v2204 = vsel %vm1090, %v2198, %v2203
        %v2205 = vrot.slane %v2161, 4
        %v2206 = vsel %vm1090, %v2201, %v2205
        %v2207 = vrot.slane %v2162, 4
        %v2208 = vsel %vm1090, %v2203, %v2207
        %v2209 = vrot.slane %v2163, 4
        %v2210 = vsel %vm1090, %v2205, %v2209
        %v2211 = vrot.slane %v2164, 4
        %v2212 = vsel %vm1090, %v2207, %v2211
        %v2213 = vrot.slane %v2165, 4
        %v2214 = vsel %vm1090, %v2209, %v2213
        %v2219 = vsel %vm2128, %v2202, 0
        %v2221 = vsel %vm2128, %v2206, 0
        %v2223 = vsel %vm2128, %v2210, 0
        %v2225 = vsel %vm2128, %v2214, 0
        %2227 = vmatprep.subr.mxu0 0.0
        %2228 = vmatpush1.msra.mxu0 %v2166
        %2229 = vmatprep.subr.mxu0 0.0
        %2230 = vmatpush1.msra.mxu0 %v2167
        %2231 = vmatprep.subr.mxu0 0.0
        %2232 = vmatpush1.msra.mxu0 %v2168
        %2233 = vmatprep.subr.mxu0 0.0
        %2234 = vmatpush1.msra.mxu0 %v2169
        %2235 = vmatprep.subr.mxu0 0.0
        %2236 = vmatpush1.msra.mxu0 %v2170
        %2237 = vmatprep.subr.mxu0 0.0
        %2238 = vmatpush1.msra.mxu0 %v2171
        %2239 = vmatprep.subr.mxu0 0.0
        %2240 = vmatpush1.msra.mxu0 %v2172
        %2241 = vmatprep.subr.mxu0 0.0
        %2242 = vmatpush1.msra.mxu0 %v2173
        %2243 = vmatprep.subr.mxu0 0.0
        %2244 = vmatpush1.msra.mxu0 %v2174
        %2245 = vmatprep.subr.mxu0 0.0
        %2246 = vmatpush1.msra.mxu0 %v2175
        %2247 = vmatprep.subr.mxu0 0.0
        %2248 = vmatpush1.msra.mxu0 %v2176
        %2249 = vmatprep.subr.mxu0 0.0
        %2250 = vmatpush1.msra.mxu0 %v2177
        %2251 = vmatprep.subr.mxu0 0.0
        %2252 = vmatpush1.msra.mxu0 %v2178
        %2253 = vmatprep.subr.mxu0 0.0
        %2254 = vmatpush1.msra.mxu0 %v2179
        %2255 = vmatprep.subr.mxu0 0.0
        %2256 = vmatpush1.msra.mxu0 %v2180
        %2257 = vmatprep.subr.mxu0 0.0
        %2258 = vmatpush1.msra.mxu0 %v2181
        %2259 = vmatprep.subr.mxu0 0.0
        %2260 = vmatpush1.msra.mxu0 %v2182
        %2261 = vmatprep.subr.mxu0 0.0
        %2262 = vmatpush1.msra.mxu0 %v2183
        %2263 = vmatprep.subr.mxu0 0.0
        %2264 = vmatpush1.msra.mxu0 %v2184
        %2265 = vmatprep.subr.mxu0 0.0
        %2266 = vmatpush1.msra.mxu0 %v2185
        %2267 = vmatprep.subr.mxu0 0.0
        %2268 = vmatpush1.msra.mxu0 %v2186
        %2269 = vmatprep.subr.mxu0 0.0
        %2270 = vmatpush1.msra.mxu0 0.0
        %2271 = vmatprep.subr.mxu0 0.0
        %2272 = vmatpush1.msra.mxu0 0.0
        %2273 = vmatprep.subr.mxu0 0.0
        %2274 = vmatpush1.msra.mxu0 0.0
        %2275 = vmatprep.subr.mxu0 0.0
        %2276 = vmatpush1.msra.mxu0 0.0
        %2277 = vmatprep.subr.mxu0 0.0
        %2278 = vmatpush1.msra.mxu0 0.0
        %2279 = vmatprep.subr.mxu0 0.0
        %2280 = vmatpush1.msra.mxu0 0.0
        %2281 = vmatprep.subr.mxu0 0.0
        %2282 = vmatpush1.msra.mxu0 0.0
        %2283 = vmatprep.subr.mxu0 0.0
        %2284 = vmatpush1.msra.mxu0 0.0
        %2285 = vmatprep.subr.mxu0 0.0
        %2286 = vmatpush1.msra.mxu0 0.0
        %2287 = vmatprep.subr.mxu0 0.0
        %2288 = vmatpush1.msra.mxu0 0.0
        %2289 = vmatprep.subr.mxu0 0.0
        %2290 = vmatpush1.msra.mxu0 0.0
        %2291 = vmatprep.mubr.f32.mxu0 %v2219
        %2292 = vmatmul.mubr.f32.gmra.mrb[0].mxu0 %v2199
        %v2293 = vpop.f32.mrb[0].mxu0
        %v2294 = vadd.f32 0.0, %v2293
        %v2295 = vpop.f32.mrb[0].mxu0
        %2296 = vmatprep.mubr.f32.mxu0 %v2221
        %2297 = vmatmul.mubr.f32.gmra.mrb[0].mxu0 %v2204
        %v2298 = vpop.f32.mrb[0].mxu0
        %v2299 = vadd.f32 0.0, %v2298
        %v2300 = vpop.f32.mrb[0].mxu0
        %2301 = vmatprep.mubr.f32.mxu0 %v2223
        %2302 = vmatmul.mubr.f32.gmra.mrb[0].mxu0 %v2208
        %v2303 = vpop.f32.mrb[0].mxu0
        %v2304 = vadd.f32 0.0, %v2303
        %v2305 = vpop.f32.mrb[0].mxu0
        %2306 = vmatprep.mubr.f32.mxu0 %v2225
        %2307 = vmatmul.mubr.f32.gmra.mrb[0].mxu0 %v2212
        %v2308 = vpop.f32.mrb[0].mxu0
        %v2309 = vadd.f32 0.0, %v2308
        %v2310 = vpop.f32.mrb[0].mxu0
        %2311 = vdwg.mxu0
        %v2313 = vlaneseq
        %v2314 = vshrl.u32 %v2313, 7
        %v2315 = vsub.s32 0, %v2314
        %v2316 = vrot.slane %v2155, %v2315
        %v2318 = vadd.f32 %v2316, %v2294
        %v2319 = vadd.f32 %v2316, %v2299
        %v2320 = vadd.f32 %v2316, %v2304
        %v2321 = vadd.f32 %v2316, %v2309
        %v2322 = vld [vmem:[#allocation4] sm:$0xe0]
        %v2323 = vld [vmem:[#allocation4 + $0x8] sm:$0xe0]
        %v2324 = vld [vmem:[#allocation4 + $0x40] sm:$0x1f]
        %v2325 = vld [vmem:[#allocation4 + $0x48] sm:$0x1f]
        %s2326 = scalar_lea.vmem %s11, 168
        %v2327 = vld [vmem:[%s2326] sm:$0xff]
        %v2328 = vld [vmem:[%s2326 + $0x8] sm:$0xff]
        %v2329 = vld [vmem:[%s2326 + $0x10] sm:$0xff]
        %v2330 = vld [vmem:[%s2326 + $0x18] sm:$0xff]
        %v2331 = vld [vmem:[%s2326 + $0x20] sm:$0xff]
        %v2332 = vld [vmem:[%s2326 + $0x28] sm:$0xff]
        %v2333 = vld [vmem:[%s2326 + $0x30] sm:$0xff]
        %v2334 = vld [vmem:[%s2326 + $0x38] sm:$0xff]
        %v2335 = vld [vmem:[%s2326 + $0x40] sm:$0xff]
        %v2336 = vld [vmem:[%s2326 + $0x48] sm:$0xff]
        %v2337 = vld [vmem:[%s2326 + $0x50] sm:$0xff]
        %v2338 = vld [vmem:[%s2326 + $0x58] sm:$0xff]
        %v2339 = vld [vmem:[%s2326 + $0x60] sm:$0xff]
        %v2340 = vld [vmem:[%s2326 + $0x68] sm:$0xff]
        %v2341 = vld [vmem:[%s2326 + $0x70] sm:$0xff]
        %v2342 = vld [vmem:[%s2326 + $0x78] sm:$0xff]
        %v2343 = vld [vmem:[%s2326 + $0x80] sm:$0xff]
        %v2344 = vld [vmem:[%s2326 + $0x88] sm:$0xff]
        %v2345 = vld [vmem:[%s2326 + $0x90] sm:$0xff]
        %v2346 = vld [vmem:[%s2326 + $0x98] sm:$0xff]
        %v2347 = vld [vmem:[%s2326 + $0xa0] sm:$0xff]
        %v2352 = vrot.slane %v2322, 5
        %v2353 = vrot.slane %v2158, 5
        %v2354 = vsel %vm1219, %v2352, %v2353
        %v2355 = vrot.slane %v2323, 5
        %v2356 = vrot.slane %v2159, 5
        %v2357 = vsel %vm1219, %v2355, %v2356
        %v2358 = vrot.slane %v2160, 5
        %v2359 = vsel %vm1219, %v2353, %v2358
        %v2360 = vrot.slane %v2161, 5
        %v2361 = vsel %vm1219, %v2356, %v2360
        %v2362 = vrot.slane %v2162, 5
        %v2363 = vsel %vm1219, %v2358, %v2362
        %v2364 = vrot.slane %v2163, 5
        %v2365 = vsel %vm1219, %v2360, %v2364
        %v2366 = vrot.slane %v2324, 5
        %v2367 = vsel %vm1219, %v2362, %v2366
        %v2368 = vrot.slane %v2325, 5
        %v2369 = vsel %vm1219, %v2364, %v2368
        %v2374 = vsel %vm2128, %v2357, 0
        %v2376 = vsel %vm2128, %v2361, 0
        %v2378 = vsel %vm2128, %v2365, 0
        %v2380 = vsel %vm2128, %v2369, 0
        %2382 = vmatprep.subr.mxu0 0.0
        %2383 = vmatpush1.msra.mxu0 %v2327
        %2384 = vmatprep.subr.mxu0 0.0
        %2385 = vmatpush1.msra.mxu0 %v2328
        %2386 = vmatprep.subr.mxu0 0.0
        %2387 = vmatpush1.msra.mxu0 %v2329
        %2388 = vmatprep.subr.mxu0 0.0
        %2389 = vmatpush1.msra.mxu0 %v2330
        %2390 = vmatprep.subr.mxu0 0.0
        %2391 = vmatpush1.msra.mxu0 %v2331
        %2392 = vmatprep.subr.mxu0 0.0
        %2393 = vmatpush1.msra.mxu0 %v2332
        %2394 = vmatprep.subr.mxu0 0.0
        %2395 = vmatpush1.msra.mxu0 %v2333
        %2396 = vmatprep.subr.mxu0 0.0
        %2397 = vmatpush1.msra.mxu0 %v2334
        %2398 = vmatprep.subr.mxu0 0.0
        %2399 = vmatpush1.msra.mxu0 %v2335
        %2400 = vmatprep.subr.mxu0 0.0
        %2401 = vmatpush1.msra.mxu0 %v2336
        %2402 = vmatprep.subr.mxu0 0.0
        %2403 = vmatpush1.msra.mxu0 %v2337
        %2404 = vmatprep.subr.mxu0 0.0
        %2405 = vmatpush1.msra.mxu0 %v2338
        %2406 = vmatprep.subr.mxu0 0.0
        %2407 = vmatpush1.msra.mxu0 %v2339
        %2408 = vmatprep.subr.mxu0 0.0
        %2409 = vmatpush1.msra.mxu0 %v2340
        %2410 = vmatprep.subr.mxu0 0.0
        %2411 = vmatpush1.msra.mxu0 %v2341
        %2412 = vmatprep.subr.mxu0 0.0
        %2413 = vmatpush1.msra.mxu0 %v2342
        %2414 = vmatprep.subr.mxu0 0.0
        %2415 = vmatpush1.msra.mxu0 %v2343
        %2416 = vmatprep.subr.mxu0 0.0
        %2417 = vmatpush1.msra.mxu0 %v2344
        %2418 = vmatprep.subr.mxu0 0.0
        %2419 = vmatpush1.msra.mxu0 %v2345
        %2420 = vmatprep.subr.mxu0 0.0
        %2421 = vmatpush1.msra.mxu0 %v2346
        %2422 = vmatprep.subr.mxu0 0.0
        %2423 = vmatpush1.msra.mxu0 %v2347
        %2424 = vmatprep.subr.mxu0 0.0
        %2425 = vmatpush1.msra.mxu0 0.0
        %2426 = vmatprep.subr.mxu0 0.0
        %2427 = vmatpush1.msra.mxu0 0.0
        %2428 = vmatprep.subr.mxu0 0.0
        %2429 = vmatpush1.msra.mxu0 0.0
        %2430 = vmatprep.subr.mxu0 0.0
        %2431 = vmatpush1.msra.mxu0 0.0
        %2432 = vmatprep.subr.mxu0 0.0
        %2433 = vmatpush1.msra.mxu0 0.0
        %2434 = vmatprep.subr.mxu0 0.0
        %2435 = vmatpush1.msra.mxu0 0.0
        %2436 = vmatprep.subr.mxu0 0.0
        %2437 = vmatpush1.msra.mxu0 0.0
        %2438 = vmatprep.subr.mxu0 0.0
        %2439 = vmatpush1.msra.mxu0 0.0
        %2440 = vmatprep.subr.mxu0 0.0
        %2441 = vmatpush1.msra.mxu0 0.0
        %2442 = vmatprep.subr.mxu0 0.0
        %2443 = vmatpush1.msra.mxu0 0.0
        %2444 = vmatprep.subr.mxu0 0.0
        %2445 = vmatpush1.msra.mxu0 0.0
        %2446 = vmatprep.mubr.f32.mxu0 %v2374
        %2447 = vmatmul.mubr.f32.gmra.mrb[0].mxu0 %v2354
        %v2448 = vpop.f32.mrb[0].mxu0
        %v2449 = vadd.f32 0.0, %v2448
        %v2450 = vpop.f32.mrb[0].mxu0
        %2451 = vmatprep.mubr.f32.mxu0 %v2376
        %2452 = vmatmul.mubr.f32.gmra.mrb[0].mxu0 %v2359
        %v2453 = vpop.f32.mrb[0].mxu0
        %v2454 = vadd.f32 0.0, %v2453
        %v2455 = vpop.f32.mrb[0].mxu0
        %2456 = vmatprep.mubr.f32.mxu0 %v2378
        %2457 = vmatmul.mubr.f32.gmra.mrb[0].mxu0 %v2363
        %v2458 = vpop.f32.mrb[0].mxu0
        %v2459 = vadd.f32 0.0, %v2458
        %v2460 = vpop.f32.mrb[0].mxu0
        %2461 = vmatprep.mubr.f32.mxu0 %v2380
        %2462 = vmatmul.mubr.f32.gmra.mrb[0].mxu0 %v2367
        %v2463 = vpop.f32.mrb[0].mxu0
        %v2464 = vadd.f32 0.0, %v2463
        %v2465 = vpop.f32.mrb[0].mxu0
        %2466 = vdwg.mxu0
        %v2467 = vadd.f32 %v2318, %v2449
        %v2468 = vadd.f32 %v2319, %v2454
        %v2469 = vadd.f32 %v2320, %v2459
        %v2470 = vadd.f32 %v2321, %v2464
        %v2471 = vld [vmem:[#allocation4] sm:$0xc0]
        %v2472 = vld [vmem:[#allocation4 + $0x8] sm:$0xc0]
        %v2473 = vld [vmem:[#allocation4 + $0x40] sm:$0x3f]
        %v2474 = vld [vmem:[#allocation4 + $0x48] sm:$0x3f]
        %s2475 = scalar_lea.vmem %s11, 336
        %v2476 = vld [vmem:[%s2475] sm:$0xff]
        %v2477 = vld [vmem:[%s2475 + $0x8] sm:$0xff]
        %v2478 = vld [vmem:[%s2475 + $0x10] sm:$0xff]
        %v2479 = vld [vmem:[%s2475 + $0x18] sm:$0xff]
        %v2480 = vld [vmem:[%s2475 + $0x20] sm:$0xff]
        %v2481 = vld [vmem:[%s2475 + $0x28] sm:$0xff]
        %v2482 = vld [vmem:[%s2475 + $0x30] sm:$0xff]
        %v2483 = vld [vmem:[%s2475 + $0x38] sm:$0xff]
        %v2484 = vld [vmem:[%s2475 + $0x40] sm:$0xff]
        %v2485 = vld [vmem:[%s2475 + $0x48] sm:$0xff]
        %v2486 = vld [vmem:[%s2475 + $0x50] sm:$0xff]
        %v2487 = vld [vmem:[%s2475 + $0x58] sm:$0xff]
        %v2488 = vld [vmem:[%s2475 + $0x60] sm:$0xff]
        %v2489 = vld [vmem:[%s2475 + $0x68] sm:$0xff]
        %v2490 = vld [vmem:[%s2475 + $0x70] sm:$0xff]
        %v2491 = vld [vmem:[%s2475 + $0x78] sm:$0xff]
        %v2492 = vld [vmem:[%s2475 + $0x80] sm:$0xff]
        %v2493 = vld [vmem:[%s2475 + $0x88] sm:$0xff]
        %v2494 = vld [vmem:[%s2475 + $0x90] sm:$0xff]
        %v2495 = vld [vmem:[%s2475 + $0x98] sm:$0xff]
        %v2496 = vld [vmem:[%s2475 + $0xa0] sm:$0xff]
        %v2501 = vrot.slane %v2471, 6
        %v2502 = vrot.slane %v2158, 6
        %v2503 = vsel %vm1342, %v2501, %v2502
        %v2504 = vrot.slane %v2472, 6
        %v2505 = vrot.slane %v2159, 6
        %v2506 = vsel %vm1342, %v2504, %v2505
        %v2507 = vrot.slane %v2160, 6
        %v2508 = vsel %vm1342, %v2502, %v2507
        %v2509 = vrot.slane %v2161, 6
        %v2510 = vsel %vm1342, %v2505, %v2509
        %v2511 = vrot.slane %v2162, 6
        %v2512 = vsel %vm1342, %v2507, %v2511
        %v2513 = vrot.slane %v2163, 6
        %v2514 = vsel %vm1342, %v2509, %v2513
        %v2515 = vrot.slane %v2473, 6
        %v2516 = vsel %vm1342, %v2511, %v2515
        %v2517 = vrot.slane %v2474, 6
        %v2518 = vsel %vm1342, %v2513, %v2517
        %v2523 = vsel %vm2128, %v2506, 0
        %v2525 = vsel %vm2128, %v2510, 0
        %v2527 = vsel %vm2128, %v2514, 0
        %v2529 = vsel %vm2128, %v2518, 0
        %2531 = vmatprep.subr.mxu0 0.0
        %2532 = vmatpush1.msra.mxu0 %v2476
        %2533 = vmatprep.subr.mxu0 0.0
        %2534 = vmatpush1.msra.mxu0 %v2477
        %2535 = vmatprep.subr.mxu0 0.0
        %2536 = vmatpush1.msra.mxu0 %v2478
        %2537 = vmatprep.subr.mxu0 0.0
        %2538 = vmatpush1.msra.mxu0 %v2479
        %2539 = vmatprep.subr.mxu0 0.0
        %2540 = vmatpush1.msra.mxu0 %v2480
        %2541 = vmatprep.subr.mxu0 0.0
        %2542 = vmatpush1.msra.mxu0 %v2481
        %2543 = vmatprep.subr.mxu0 0.0
        %2544 = vmatpush1.msra.mxu0 %v2482
        %2545 = vmatprep.subr.mxu0 0.0
        %2546 = vmatpush1.msra.mxu0 %v2483
        %2547 = vmatprep.subr.mxu0 0.0
        %2548 = vmatpush1.msra.mxu0 %v2484
        %2549 = vmatprep.subr.mxu0 0.0
        %2550 = vmatpush1.msra.mxu0 %v2485
        %2551 = vmatprep.subr.mxu0 0.0
        %2552 = vmatpush1.msra.mxu0 %v2486
        %2553 = vmatprep.subr.mxu0 0.0
        %2554 = vmatpush1.msra.mxu0 %v2487
        %2555 = vmatprep.subr.mxu0 0.0
        %2556 = vmatpush1.msra.mxu0 %v2488
        %2557 = vmatprep.subr.mxu0 0.0
        %2558 = vmatpush1.msra.mxu0 %v2489
        %2559 = vmatprep.subr.mxu0 0.0
        %2560 = vmatpush1.msra.mxu0 %v2490
        %2561 = vmatprep.subr.mxu0 0.0
        %2562 = vmatpush1.msra.mxu0 %v2491
        %2563 = vmatprep.subr.mxu0 0.0
        %2564 = vmatpush1.msra.mxu0 %v2492
        %2565 = vmatprep.subr.mxu0 0.0
        %2566 = vmatpush1.msra.mxu0 %v2493
        %2567 = vmatprep.subr.mxu0 0.0
        %2568 = vmatpush1.msra.mxu0 %v2494
        %2569 = vmatprep.subr.mxu0 0.0
        %2570 = vmatpush1.msra.mxu0 %v2495
        %2571 = vmatprep.subr.mxu0 0.0
        %2572 = vmatpush1.msra.mxu0 %v2496
        %2573 = vmatprep.subr.mxu0 0.0
        %2574 = vmatpush1.msra.mxu0 0.0
        %2575 = vmatprep.subr.mxu0 0.0
        %2576 = vmatpush1.msra.mxu0 0.0
        %2577 = vmatprep.subr.mxu0 0.0
        %2578 = vmatpush1.msra.mxu0 0.0
        %2579 = vmatprep.subr.mxu0 0.0
        %2580 = vmatpush1.msra.mxu0 0.0
        %2581 = vmatprep.subr.mxu0 0.0
        %2582 = vmatpush1.msra.mxu0 0.0
        %2583 = vmatprep.subr.mxu0 0.0
        %2584 = vmatpush1.msra.mxu0 0.0
        %2585 = vmatprep.subr.mxu0 0.0
        %2586 = vmatpush1.msra.mxu0 0.0
        %2587 = vmatprep.subr.mxu0 0.0
        %2588 = vmatpush1.msra.mxu0 0.0
        %2589 = vmatprep.subr.mxu0 0.0
        %2590 = vmatpush1.msra.mxu0 0.0
        %2591 = vmatprep.subr.mxu0 0.0
        %2592 = vmatpush1.msra.mxu0 0.0
        %2593 = vmatprep.subr.mxu0 0.0
        %2594 = vmatpush1.msra.mxu0 0.0
        %2595 = vmatprep.mubr.f32.mxu0 %v2523
        %2596 = vmatmul.mubr.f32.gmra.mrb[0].mxu0 %v2503
        %v2597 = vpop.f32.mrb[0].mxu0
        %v2598 = vadd.f32 0.0, %v2597
        %v2599 = vpop.f32.mrb[0].mxu0
        %2600 = vmatprep.mubr.f32.mxu0 %v2525
        %2601 = vmatmul.mubr.f32.gmra.mrb[0].mxu0 %v2508
        %v2602 = vpop.f32.mrb[0].mxu0
        %v2603 = vadd.f32 0.0, %v2602
        %v2604 = vpop.f32.mrb[0].mxu0
        %2605 = vmatprep.mubr.f32.mxu0 %v2527
        %2606 = vmatmul.mubr.f32.gmra.mrb[0].mxu0 %v2512
        %v2607 = vpop.f32.mrb[0].mxu0
        %v2608 = vadd.f32 0.0, %v2607
        %v2609 = vpop.f32.mrb[0].mxu0
        %2610 = vmatprep.mubr.f32.mxu0 %v2529
        %2611 = vmatmul.mubr.f32.gmra.mrb[0].mxu0 %v2516
        %v2612 = vpop.f32.mrb[0].mxu0
        %v2613 = vadd.f32 0.0, %v2612
        %v2614 = vpop.f32.mrb[0].mxu0
        %2615 = vdwg.mxu0
        %v2616 = vadd.f32 %v2467, %v2598
        %v2617 = vadd.f32 %v2468, %v2603
        %v2618 = vadd.f32 %v2469, %v2608
        %v2619 = vadd.f32 %v2470, %v2613
        %v2620 = vld [vmem:[#allocation4] sm:$0x80]
        %v2621 = vld [vmem:[#allocation4 + $0x8] sm:$0x80]
        %v2622 = vld [vmem:[#allocation4 + $0x40] sm:$0x7f]
        %v2623 = vld [vmem:[#allocation4 + $0x48] sm:$0x7f]
        %s2624 = scalar_lea.vmem %s11, 504
        %v2625 = vld [vmem:[%s2624] sm:$0xff]
        %v2626 = vld [vmem:[%s2624 + $0x8] sm:$0xff]
        %v2627 = vld [vmem:[%s2624 + $0x10] sm:$0xff]
        %v2628 = vld [vmem:[%s2624 + $0x18] sm:$0xff]
        %v2629 = vld [vmem:[%s2624 + $0x20] sm:$0xff]
        %v2630 = vld [vmem:[%s2624 + $0x28] sm:$0xff]
        %v2631 = vld [vmem:[%s2624 + $0x30] sm:$0xff]
        %v2632 = vld [vmem:[%s2624 + $0x38] sm:$0xff]
        %v2633 = vld [vmem:[%s2624 + $0x40] sm:$0xff]
        %v2634 = vld [vmem:[%s2624 + $0x48] sm:$0xff]
        %v2635 = vld [vmem:[%s2624 + $0x50] sm:$0xff]
        %v2636 = vld [vmem:[%s2624 + $0x58] sm:$0xff]
        %v2637 = vld [vmem:[%s2624 + $0x60] sm:$0xff]
        %v2638 = vld [vmem:[%s2624 + $0x68] sm:$0xff]
        %v2639 = vld [vmem:[%s2624 + $0x70] sm:$0xff]
        %v2640 = vld [vmem:[%s2624 + $0x78] sm:$0xff]
        %v2641 = vld [vmem:[%s2624 + $0x80] sm:$0xff]
        %v2642 = vld [vmem:[%s2624 + $0x88] sm:$0xff]
        %v2643 = vld [vmem:[%s2624 + $0x90] sm:$0xff]
        %v2644 = vld [vmem:[%s2624 + $0x98] sm:$0xff]
        %v2645 = vld [vmem:[%s2624 + $0xa0] sm:$0xff]
        %v2650 = vrot.slane %v2620, 7
        %v2651 = vrot.slane %v2158, 7
        %v2652 = vsel %vm1465, %v2650, %v2651
        %v2653 = vrot.slane %v2621, 7
        %v2654 = vrot.slane %v2159, 7
        %v2655 = vsel %vm1465, %v2653, %v2654
        %v2656 = vrot.slane %v2160, 7
        %v2657 = vsel %vm1465, %v2651, %v2656
        %v2658 = vrot.slane %v2161, 7
        %v2659 = vsel %vm1465, %v2654, %v2658
        %v2660 = vrot.slane %v2162, 7
        %v2661 = vsel %vm1465, %v2656, %v2660
        %v2662 = vrot.slane %v2163, 7
        %v2663 = vsel %vm1465, %v2658, %v2662
        %v2664 = vrot.slane %v2622, 7
        %v2665 = vsel %vm1465, %v2660, %v2664
        %v2666 = vrot.slane %v2623, 7
        %v2667 = vsel %vm1465, %v2662, %v2666
        %v2672 = vsel %vm2128, %v2655, 0
        %v2674 = vsel %vm2128, %v2659, 0
        %v2676 = vsel %vm2128, %v2663, 0
        %v2678 = vsel %vm2128, %v2667, 0
        %2680 = vmatprep.subr.mxu0 0.0
        %2681 = vmatpush1.msra.mxu0 %v2625
        %2682 = vmatprep.subr.mxu0 0.0
        %2683 = vmatpush1.msra.mxu0 %v2626
        %2684 = vmatprep.subr.mxu0 0.0
        %2685 = vmatpush1.msra.mxu0 %v2627
        %2686 = vmatprep.subr.mxu0 0.0
        %2687 = vmatpush1.msra.mxu0 %v2628
        %2688 = vmatprep.subr.mxu0 0.0
        %2689 = vmatpush1.msra.mxu0 %v2629
        %2690 = vmatprep.subr.mxu0 0.0
        %2691 = vmatpush1.msra.mxu0 %v2630
        %2692 = vmatprep.subr.mxu0 0.0
        %2693 = vmatpush1.msra.mxu0 %v2631
        %2694 = vmatprep.subr.mxu0 0.0
        %2695 = vmatpush1.msra.mxu0 %v2632
        %2696 = vmatprep.subr.mxu0 0.0
        %2697 = vmatpush1.msra.mxu0 %v2633
        %2698 = vmatprep.subr.mxu0 0.0
        %2699 = vmatpush1.msra.mxu0 %v2634
        %2700 = vmatprep.subr.mxu0 0.0
        %2701 = vmatpush1.msra.mxu0 %v2635
        %2702 = vmatprep.subr.mxu0 0.0
        %2703 = vmatpush1.msra.mxu0 %v2636
        %2704 = vmatprep.subr.mxu0 0.0
        %2705 = vmatpush1.msra.mxu0 %v2637
        %2706 = vmatprep.subr.mxu0 0.0
        %2707 = vmatpush1.msra.mxu0 %v2638
        %2708 = vmatprep.subr.mxu0 0.0
        %2709 = vmatpush1.msra.mxu0 %v2639
        %2710 = vmatprep.subr.mxu0 0.0
        %2711 = vmatpush1.msra.mxu0 %v2640
        %2712 = vmatprep.subr.mxu0 0.0
        %2713 = vmatpush1.msra.mxu0 %v2641
        %2714 = vmatprep.subr.mxu0 0.0
        %2715 = vmatpush1.msra.mxu0 %v2642
        %2716 = vmatprep.subr.mxu0 0.0
        %2717 = vmatpush1.msra.mxu0 %v2643
        %2718 = vmatprep.subr.mxu0 0.0
        %2719 = vmatpush1.msra.mxu0 %v2644
        %2720 = vmatprep.subr.mxu0 0.0
        %2721 = vmatpush1.msra.mxu0 %v2645
        %2722 = vmatprep.subr.mxu0 0.0
        %2723 = vmatpush1.msra.mxu0 0.0
        %2724 = vmatprep.subr.mxu0 0.0
        %2725 = vmatpush1.msra.mxu0 0.0
        %2726 = vmatprep.subr.mxu0 0.0
        %2727 = vmatpush1.msra.mxu0 0.0
        %2728 = vmatprep.subr.mxu0 0.0
        %2729 = vmatpush1.msra.mxu0 0.0
        %2730 = vmatprep.subr.mxu0 0.0
        %2731 = vmatpush1.msra.mxu0 0.0
        %2732 = vmatprep.subr.mxu0 0.0
        %2733 = vmatpush1.msra.mxu0 0.0
        %2734 = vmatprep.subr.mxu0 0.0
        %2735 = vmatpush1.msra.mxu0 0.0
        %2736 = vmatprep.subr.mxu0 0.0
        %2737 = vmatpush1.msra.mxu0 0.0
        %2738 = vmatprep.subr.mxu0 0.0
        %2739 = vmatpush1.msra.mxu0 0.0
        %2740 = vmatprep.subr.mxu0 0.0
        %2741 = vmatpush1.msra.mxu0 0.0
        %2742 = vmatprep.subr.mxu0 0.0
        %2743 = vmatpush1.msra.mxu0 0.0
        %2744 = vmatprep.mubr.f32.mxu0 %v2672
        %2745 = vmatmul.mubr.f32.gmra.mrb[0].mxu0 %v2652
        %v2746 = vpop.f32.mrb[0].mxu0
        %v2747 = vadd.f32 0.0, %v2746
        %v2748 = vpop.f32.mrb[0].mxu0
        %2749 = vmatprep.mubr.f32.mxu0 %v2674
        %2750 = vmatmul.mubr.f32.gmra.mrb[0].mxu0 %v2657
        %v2751 = vpop.f32.mrb[0].mxu0
        %v2752 = vadd.f32 0.0, %v2751
        %v2753 = vpop.f32.mrb[0].mxu0
        %2754 = vmatprep.mubr.f32.mxu0 %v2676
        %2755 = vmatmul.mubr.f32.gmra.mrb[0].mxu0 %v2661
        %v2756 = vpop.f32.mrb[0].mxu0
        %v2757 = vadd.f32 0.0, %v2756
        %v2758 = vpop.f32.mrb[0].mxu0
        %2759 = vmatprep.mubr.f32.mxu0 %v2678
        %2760 = vmatmul.mubr.f32.gmra.mrb[0].mxu0 %v2665
        %v2761 = vpop.f32.mrb[0].mxu0
        %v2762 = vadd.f32 0.0, %v2761
        %v2763 = vpop.f32.mrb[0].mxu0
        %2764 = vdwg.mxu0
        %v2765 = vadd.f32 %v2616, %v2747
        %v2766 = vadd.f32 %v2617, %v2752
        %v2767 = vadd.f32 %v2618, %v2757
        %v2768 = vadd.f32 %v2619, %v2762
        %v2769 = vld [vmem:[#allocation4 + $0x40] sm:$0xff]
        %v2770 = vld [vmem:[#allocation4 + $0x48] sm:$0xff]
        %s2771 = scalar_lea.vmem %s11, 672
        %v2772 = vld [vmem:[%s2771] sm:$0xff]
        %v2773 = vld [vmem:[%s2771 + $0x8] sm:$0xff]
        %v2774 = vld [vmem:[%s2771 + $0x10] sm:$0xff]
        %v2775 = vld [vmem:[%s2771 + $0x18] sm:$0xff]
        %v2776 = vld [vmem:[%s2771 + $0x20] sm:$0xff]
        %v2777 = vld [vmem:[%s2771 + $0x28] sm:$0xff]
        %v2778 = vld [vmem:[%s2771 + $0x30] sm:$0xff]
        %v2779 = vld [vmem:[%s2771 + $0x38] sm:$0xff]
        %v2780 = vld [vmem:[%s2771 + $0x40] sm:$0xff]
        %v2781 = vld [vmem:[%s2771 + $0x48] sm:$0xff]
        %v2782 = vld [vmem:[%s2771 + $0x50] sm:$0xff]
        %v2783 = vld [vmem:[%s2771 + $0x58] sm:$0xff]
        %v2784 = vld [vmem:[%s2771 + $0x60] sm:$0xff]
        %v2785 = vld [vmem:[%s2771 + $0x68] sm:$0xff]
        %v2786 = vld [vmem:[%s2771 + $0x70] sm:$0xff]
        %v2787 = vld [vmem:[%s2771 + $0x78] sm:$0xff]
        %v2788 = vld [vmem:[%s2771 + $0x80] sm:$0xff]
        %v2789 = vld [vmem:[%s2771 + $0x88] sm:$0xff]
        %v2790 = vld [vmem:[%s2771 + $0x90] sm:$0xff]
        %v2791 = vld [vmem:[%s2771 + $0x98] sm:$0xff]
        %v2792 = vld [vmem:[%s2771 + $0xa0] sm:$0xff]
        %v2793 = vsel %vm2128, %v2159, 0
        %v2795 = vsel %vm2128, %v2161, 0
        %v2797 = vsel %vm2128, %v2163, 0
        %v2800 = vsel %vm2128, %v2770, 0
        %2802 = vmatprep.subr.mxu0 0.0
        %2803 = vmatpush1.msra.mxu0 %v2772
        %2804 = vmatprep.subr.mxu0 0.0
        %2805 = vmatpush1.msra.mxu0 %v2773
        %2806 = vmatprep.subr.mxu0 0.0
        %2807 = vmatpush1.msra.mxu0 %v2774
        %2808 = vmatprep.subr.mxu0 0.0
        %2809 = vmatpush1.msra.mxu0 %v2775
        %2810 = vmatprep.subr.mxu0 0.0
        %2811 = vmatpush1.msra.mxu0 %v2776
        %2812 = vmatprep.subr.mxu0 0.0
        %2813 = vmatpush1.msra.mxu0 %v2777
        %2814 = vmatprep.subr.mxu0 0.0
        %2815 = vmatpush1.msra.mxu0 %v2778
        %2816 = vmatprep.subr.mxu0 0.0
        %2817 = vmatpush1.msra.mxu0 %v2779
        %2818 = vmatprep.subr.mxu0 0.0
        %2819 = vmatpush1.msra.mxu0 %v2780
        %2820 = vmatprep.subr.mxu0 0.0
        %2821 = vmatpush1.msra.mxu0 %v2781
        %2822 = vmatprep.subr.mxu0 0.0
        %2823 = vmatpush1.msra.mxu0 %v2782
        %2824 = vmatprep.subr.mxu0 0.0
        %2825 = vmatpush1.msra.mxu0 %v2783
        %2826 = vmatprep.subr.mxu0 0.0
        %2827 = vmatpush1.msra.mxu0 %v2784
        %2828 = vmatprep.subr.mxu0 0.0
        %2829 = vmatpush1.msra.mxu0 %v2785
        %2830 = vmatprep.subr.mxu0 0.0
        %2831 = vmatpush1.msra.mxu0 %v2786
        %2832 = vmatprep.subr.mxu0 0.0
        %2833 = vmatpush1.msra.mxu0 %v2787
        %2834 = vmatprep.subr.mxu0 0.0
        %2835 = vmatpush1.msra.mxu0 %v2788
        %2836 = vmatprep.subr.mxu0 0.0
        %2837 = vmatpush1.msra.mxu0 %v2789
        %2838 = vmatprep.subr.mxu0 0.0
        %2839 = vmatpush1.msra.mxu0 %v2790
        %2840 = vmatprep.subr.mxu0 0.0
        %2841 = vmatpush1.msra.mxu0 %v2791
        %2842 = vmatprep.subr.mxu0 0.0
        %2843 = vmatpush1.msra.mxu0 %v2792
        %2844 = vmatprep.subr.mxu0 0.0
        %2845 = vmatpush1.msra.mxu0 0.0
        %2846 = vmatprep.subr.mxu0 0.0
        %2847 = vmatpush1.msra.mxu0 0.0
        %2848 = vmatprep.subr.mxu0 0.0
        %2849 = vmatpush1.msra.mxu0 0.0
        %2850 = vmatprep.subr.mxu0 0.0
        %2851 = vmatpush1.msra.mxu0 0.0
        %2852 = vmatprep.subr.mxu0 0.0
        %2853 = vmatpush1.msra.mxu0 0.0
        %2854 = vmatprep.subr.mxu0 0.0
        %2855 = vmatpush1.msra.mxu0 0.0
        %2856 = vmatprep.subr.mxu0 0.0
        %2857 = vmatpush1.msra.mxu0 0.0
        %2858 = vmatprep.subr.mxu0 0.0
        %2859 = vmatpush1.msra.mxu0 0.0
        %2860 = vmatprep.subr.mxu0 0.0
        %2861 = vmatpush1.msra.mxu0 0.0
        %2862 = vmatprep.subr.mxu0 0.0
        %2863 = vmatpush1.msra.mxu0 0.0
        %2864 = vmatprep.subr.mxu0 0.0
        %2865 = vmatpush1.msra.mxu0 0.0
        %2866 = vmatprep.mubr.f32.mxu0 %v2793
        %2867 = vmatmul.mubr.f32.gmra.mrb[0].mxu0 %v2158
        %v2868 = vpop.f32.mrb[0].mxu0
        %v2869 = vadd.f32 0.0, %v2868
        %v2870 = vpop.f32.mrb[0].mxu0
        %2871 = vmatprep.mubr.f32.mxu0 %v2795
        %2872 = vmatmul.mubr.f32.gmra.mrb[0].mxu0 %v2160
        %v2873 = vpop.f32.mrb[0].mxu0
        %v2874 = vadd.f32 0.0, %v2873
        %v2875 = vpop.f32.mrb[0].mxu0
        %2876 = vmatprep.mubr.f32.mxu0 %v2797
        %2877 = vmatmul.mubr.f32.gmra.mrb[0].mxu0 %v2162
        %v2878 = vpop.f32.mrb[0].mxu0
        %v2879 = vadd.f32 0.0, %v2878
        %v2880 = vpop.f32.mrb[0].mxu0
        %2881 = vmatprep.mubr.f32.mxu0 %v2800
        %2882 = vmatmul.mubr.f32.gmra.mrb[0].mxu0 %v2769
        %v2883 = vpop.f32.mrb[0].mxu0
        %v2884 = vadd.f32 0.0, %v2883
        %v2885 = vpop.f32.mrb[0].mxu0
        %2886 = vdwg.mxu0
        %v2887 = vadd.f32 %v2765, %v2869
        %v2888 = vadd.f32 %v2766, %v2874
        %v2889 = vadd.f32 %v2767, %v2879
        %v2890 = vadd.f32 %v2768, %v2884
        %v2891 = vxor.u32 %v2887, 2147483648
        %v2892 = vxor.u32 %v2888, 2147483648
        %v2893 = vxor.u32 %v2889, 2147483648
        %v2894 = vxor.u32 %v2890, 2147483648
        %v2895 = vmul.f32 %v2891, 1.442695
        %v2896 = vpow.pop %v2895
        %v2897 = vmul.f32 %v2892, 1.442695
        %v2898 = vpow.pop %v2897
        %v2899 = vmul.f32 %v2893, 1.442695
        %v2900 = vpow.pop %v2899
        %v2901 = vmul.f32 %v2894, 1.442695
        %v2902 = vpow.pop %v2901
        %v2903 = vadd.f32 %v2896, 1.0
        %v2904 = vadd.f32 %v2898, 1.0
        %v2905 = vadd.f32 %v2900, 1.0
        %v2906 = vadd.f32 %v2902, 1.0
        %v2907 = vrcp.pop %v2903
        %v2908 = vmul.f32 1.0, %v2907
        %v2909 = vrcp.pop %v2904
        %v2910 = vmul.f32 1.0, %v2909
        %v2911 = vrcp.pop %v2905
        %v2912 = vmul.f32 1.0, %v2911
        %v2913 = vrcp.pop %v2906
        %v2914 = vmul.f32 1.0, %v2913
        %2915 = vst.msk [vmem:[%s429] sm:$0xff] %vm472, %v2908
        %2916 = vst.msk [vmem:[%s429 + $0x8] sm:$0xff] %vm472, %v2910
        %2917 = vst.msk [vmem:[%s429 + $0x10] sm:$0xff] %vm472, %v2912
        %2918 = vst.msk [vmem:[%s429 + $0x18] sm:$0xff] %vm472, %v2914
        %s2919 = sand.u32 %s313, 1
        %s2920 = scalar_lea.sflag [#allocation6], %s2919
        %s2921 = sand.u32 %s313, 1
        %s2922 = smul.addr %s2921, 32
        %s2923 = scalar_lea.vmem [#allocation5], %s2922
        // Predicated region
        $region73: #{lenet5_decoder_forward.1} parent=71 // pred_check
          %p2924 = pneg %p323
        $region74: #{lenet5_decoder_forward.1} parent=71 // pred_check_branch
          %2926 = sbr.rel (%p2924) target = $region76
        $region75: #{lenet5_decoder_forward.1} parent=71 // pred_region
          %s2928 = ssub.s32 512, 512
          %2929 = vsyncadd %s2920, %s2928
          %s2930 = smul.addr %s27, 4
          %s2931 = smul.addr %s2930, 128
          %s2932 = scalar_lea.hbm %s13, %s2931
          %s2933 = sshll.u32 %s2923, 4
          %s2934 = int_to_ptr.vmem [resolvable:$true] %s2933
          %2939 = dma.vmem_to_hbm [thread:$0]  %s2934, 512, %s2932, %s2920, 128, 128, 8
        $region76: #{lenet5_decoder_forward.1} parent=71 // pred_fallthru
          _
      $region72: #{lenet5_decoder_forward.1} parent=5 // pred_fallthru
        _
      %p2940 = scmp.le.s32.totalorder 2, %s22
      // Predicated region
      $region77: #{lenet5_decoder_forward.1} parent=5 // pred_check
        %p2941 = pneg %p2940
      $region78: #{lenet5_decoder_forward.1} parent=5 // pred_check_branch
        %2943 = sbr.rel (%p2941) target = $region80
      $region79: #{lenet5_decoder_forward.1} parent=5 // pred_region
        %s2944 = ssub.s32 %s22, 2
        // Predicated region
        $region81: #{lenet5_decoder_forward.1} parent=79 // pred_check
          %p2945 = pneg %p329
        $region82: #{lenet5_decoder_forward.1} parent=79 // pred_check_branch
          %2947 = sbr.rel (%p2945) target = $region84
        $region83: #{lenet5_decoder_forward.1} parent=79 // pred_region
          %s2948 = sand.u32 %s314, 1
          %s2949 = scalar_lea.sflag [#allocation6], %s2948
          %s2950 = sand.u32 %s314, 1
          %s2951 = smul.addr %s2950, 32
          %s2952 = scalar_lea.vmem [#allocation5], %s2951
          %2953 = dma.done %s2949, 512
        $region84: #{lenet5_decoder_forward.1} parent=79 // pred_fallthru
          _
      $region80: #{lenet5_decoder_forward.1} parent=5 // pred_fallthru
        _
    $region6: #{lenet5_decoder_forward.1} parent=1 // loop_footer
      %s26 = sadd.s32 1, %s22
    $region7: #{lenet5_decoder_forward.1} parent=1 // loop_footer_branch
      %21 = sbr.rel target = $region3
    $region8: #{lenet5_decoder_forward.1} parent=1 // loop_exit
      _
    %2954 = vsyncpa [#allocation6], 1
    %s2955 = scalar_lea.sflag [#allocation6], 1
    %2956 = vsyncpa %s2955, 1

</llo_original>
